<compile_context>
chip_gen: v7x
topology: tpu7x:2x2x1
jax: 0.10.0
libtpu: 0.0.40
codegen_flags: <defaults>
</compile_context>

<pallas_src>
import functools

import jax
import jax.numpy as jnp
from jax.experimental import pallas as pl
from jax.experimental.pallas import tpu as pltpu

EPS = 1e-5                       # nn.BatchNorm2d default eps
LANE = 128                       # TPU lane width: keep channel dims 128-dense
VMEM_LIMIT = 32 * 1024 * 1024    # explicit scoped-VMEM budget (fits every gen)


def _round_up(n, m=LANE):
    return ((n + m - 1) // m) * m


def _pad_dim(a, axis, target):
    if a.shape[axis] == target:
        return a
    pad = [(0, 0)] * a.ndim
    pad[axis] = (0, target - a.shape[axis])
    return jnp.pad(a, pad)


def _compiler_params():
    return pltpu.CompilerParams(dimension_semantics=("parallel",),
                                vmem_limit_bytes=VMEM_LIMIT)


# ------------------------------ Pallas kernels ------------------------------

def _tap_plane(dy, dx, stride):
    """Parity-plane index and in-plane offsets for 3x3 tap (dy, dx)."""
    return (dy % stride) * stride + (dx % stride), dy // stride, dx // stride


def _conv_taps(read_window, w_ref, Ho, Wo):
    """Sum of 9 shifted-window matmuls -> (Ho*Wo, Cout) f32 accumulator."""
    cout = w_ref.shape[-1]
    acc = jnp.zeros((Ho * Wo, cout), jnp.float32)
    for dy in range(3):
        for dx in range(3):
            win = read_window(dy, dx)                       # (Ho, Wo, Cin) bf16
            cin = win.shape[-1]
            acc = acc + jnp.dot(win.reshape(Ho * Wo, cin),
                                w_ref[dy * 3 + dx],
                                preferred_element_type=jnp.float32)
    return acc


def _partial_stats(acc):
    """Per-tile (sum, sum_of_squares) over rows -> (2, Cout) f32."""
    s1 = jnp.sum(acc, axis=0, keepdims=True)
    s2 = jnp.sum(acc * acc, axis=0, keepdims=True)
    return jnp.concatenate([s1, s2], axis=0)


def _conv1_stats_kernel(planes_ref, w_ref, y_ref, st_ref, *, stride, Ho, Wo):
    """Raw 3x3 conv (stride s) for one batch element + bn1 partial stats."""
    def window(dy, dx):
        p, oy, ox = _tap_plane(dy, dx, stride)
        return planes_ref[p, oy:oy + Ho, ox:ox + Wo, :]

    acc = _conv_taps(window, w_ref, Ho, Wo)
    y_ref[0] = acc.reshape(Ho, Wo, w_ref.shape[-1])
    st_ref[0] = _partial_stats(acc)


def _conv2_fused_kernel(*refs, stride, Ho, Wo, proj):
    """bn1+relu (VMEM only) -> raw conv2 (+ fused 1x1 shortcut conv) + stats."""
    if proj:
        (y1_ref, bnp1_ref, w2_ref, planes_ref, wsc_ref,
         z2_ref, zsc_ref, st2_ref, stsc_ref, pad_ref) = refs
    else:
        (y1_ref, bnp1_ref, w2_ref, z2_ref, st2_ref, pad_ref) = refs

    c1 = y1_ref.shape[-1]
    # bn1 folded to scale/shift (precomputed from batch stats) + ReLU, once.
    bnp1 = bnp1_ref[...]
    scale = bnp1[0:1, :].reshape(1, 1, c1)
    shift = bnp1[1:2, :].reshape(1, 1, c1)
    y1n = jnp.maximum(y1_ref[0] * scale + shift, 0.0)       # (Ho, Wo, C1) f32

    # Zero-padded copy in VMEM so conv2 windows include the halo.
    pad_ref[...] = jnp.zeros_like(pad_ref)
    pad_ref[1:Ho + 1, 1:Wo + 1, :] = y1n

    def window(dy, dx):
        return pad_ref[dy:dy + Ho, dx:dx + Wo, :].astype(jnp.bfloat16)

    acc2 = _conv_taps(window, w2_ref, Ho, Wo)
    z2_ref[0] = acc2
    st2_ref[0] = _partial_stats(acc2)

    if proj:
        # 1x1 stride-s shortcut conv == the centre-tap window of the planes.
        p, oy, ox = _tap_plane(1, 1, stride)
        xw = planes_ref[p, oy:oy + Ho, ox:ox + Wo, :]
        cin = xw.shape[-1]
        accs = jnp.dot(xw.reshape(Ho * Wo, cin), wsc_ref[...],
                       preferred_element_type=jnp.float32)
        zsc_ref[0] = accs
        stsc_ref[0] = _partial_stats(accs)


def _finalize_kernel(z2_ref, sc_ref, bnp2_ref, bnpsc_ref, out_ref):
    """bn2(z2) + bn_sc(sc) (identity: scale=1, shift=0) -> add -> relu."""
    p2 = bnp2_ref[...]
    ps = bnpsc_ref[...]
    y = z2_ref[0] * p2[0:1, :] + p2[1:2, :]
    s = sc_ref[0] * ps[0:1, :] + ps[1:2, :]
    out_ref[0] = jnp.maximum(y + s, 0.0)


# ---------------------------- pallas_call wrappers ---------------------------

def conv1_stats_call(planes, w_taps, N, Ho, Wo, stride):
    P = planes.shape[0] // N
    Hp, Wp, cin = planes.shape[1], planes.shape[2], planes.shape[3]
    cout = w_taps.shape[-1]
    kern = functools.partial(_conv1_stats_kernel, stride=stride, Ho=Ho, Wo=Wo)
    flops = 2 * N * Ho * Wo * 9 * cin * cout
    bytes_acc = (planes.size * 2 + w_taps.size * 2
                 + N * Ho * Wo * cout * 4 + N * 2 * cout * 4)
    return pl.pallas_call(
        kern,
        grid=(N,),
        in_specs=[
            pl.BlockSpec((P, Hp, Wp, cin), lambda n: (n, 0, 0, 0)),
            pl.BlockSpec((9, cin, cout), lambda n: (0, 0, 0)),  # VMEM-resident
        ],
        out_specs=[
            pl.BlockSpec((1, Ho, Wo, cout), lambda n: (n, 0, 0, 0)),
            pl.BlockSpec((1, 2, cout), lambda n: (n, 0, 0)),
        ],
        out_shape=[
            jax.ShapeDtypeStruct((N, Ho, Wo, cout), jnp.float32),
            jax.ShapeDtypeStruct((N, 2, cout), jnp.float32),
        ],
        compiler_params=_compiler_params(),
        cost_estimate=pl.CostEstimate(flops=flops, transcendentals=0,
                                      bytes_accessed=int(bytes_acc)),
    )(planes, w_taps)


def conv2_fused_call(y1raw, bnp1, w2_taps, planes, wsc, N, Ho, Wo, stride):
    c1 = y1raw.shape[-1]
    c2 = w2_taps.shape[-1]
    proj = wsc is not None
    kern = functools.partial(_conv2_fused_kernel, stride=stride,
                             Ho=Ho, Wo=Wo, proj=proj)

    in_specs = [
        pl.BlockSpec((1, Ho, Wo, c1), lambda n: (n, 0, 0, 0)),
        pl.BlockSpec((2, c1), lambda n: (0, 0)),          # bn1 scale/shift
        pl.BlockSpec((9, c1, c2), lambda n: (0, 0, 0)),   # VMEM-resident
    ]
    args = [y1raw, bnp1, w2_taps]
    out_specs = [pl.BlockSpec((1, Ho * Wo, c2), lambda n: (n, 0, 0))]
    out_shape = [jax.ShapeDtypeStruct((N, Ho * Wo, c2), jnp.float32)]
    flops = 2 * N * Ho * Wo * 9 * c1 * c2
    bytes_acc = y1raw.size * 4 + bnp1.size * 4 + w2_taps.size * 2

    if proj:
        P = planes.shape[0] // N
        Hp, Wp, cin = planes.shape[1], planes.shape[2], planes.shape[3]
        in_specs += [
            pl.BlockSpec((P, Hp, Wp, cin), lambda n: (n, 0, 0, 0)),
            pl.BlockSpec((cin, c2), lambda n: (0, 0)),
        ]
        args += [planes, wsc]
        out_specs += [pl.BlockSpec((1, Ho * Wo, c2), lambda n: (n, 0, 0))]
        out_shape += [jax.ShapeDtypeStruct((N, Ho * Wo, c2), jnp.float32)]
        flops += 2 * N * Ho * Wo * cin * c2
        bytes_acc += planes.size * 2 + wsc.size * 2

    # stats outputs: conv2 then (if proj) shortcut
    out_specs += [pl.BlockSpec((1, 2, c2), lambda n: (n, 0, 0))]
    out_shape += [jax.ShapeDtypeStruct((N, 2, c2), jnp.float32)]
    if proj:
        out_specs += [pl.BlockSpec((1, 2, c2), lambda n: (n, 0, 0))]
        out_shape += [jax.ShapeDtypeStruct((N, 2, c2), jnp.float32)]
    bytes_acc += (N * Ho * Wo * c2 * 4 + N * 2 * c2 * 4) * (2 if proj else 1)

    return pl.pallas_call(
        kern,
        grid=(N,),
        in_specs=in_specs,
        out_specs=out_specs,
        out_shape=out_shape,
        scratch_shapes=[pltpu.VMEM((Ho + 2, Wo + 2, c1), jnp.float32)],
        compiler_params=_compiler_params(),
        cost_estimate=pl.CostEstimate(flops=flops, transcendentals=0,
                                      bytes_accessed=int(bytes_acc)),
    )(*args)


def finalize_call(z2, sc_raw, bnp2, bnpsc):
    N, M, c2 = z2.shape
    return pl.pallas_call(
        _finalize_kernel,
        grid=(N,),
        in_specs=[
            pl.BlockSpec((1, M, c2), lambda n: (n, 0, 0)),
            pl.BlockSpec((1, M, c2), lambda n: (n, 0, 0)),
            pl.BlockSpec((2, c2), lambda n: (0, 0)),
            pl.BlockSpec((2, c2), lambda n: (0, 0)),
        ],
        out_specs=pl.BlockSpec((1, M, c2), lambda n: (n, 0, 0)),
        out_shape=jax.ShapeDtypeStruct((N, M, c2), jnp.float32),
        compiler_params=_compiler_params(),
    )(z2, sc_raw, bnp2, bnpsc)


# --------------------------------- JAX glue ---------------------------------

def _build_planes(x_nhwc, stride, cin_pad):
    """Channel-pad to lane width, spatial zero-pad by 1, split into stride^2
    parity planes so strided conv taps become contiguous in-kernel windows
    (no 9x im2col materialization in HBM)."""
    N = x_nhwc.shape[0]
    xp = _pad_dim(x_nhwc, 3, cin_pad).astype(jnp.bfloat16)
    xp = jnp.pad(xp, ((0, 0), (1, 1), (1, 1), (0, 0)))
    if stride == 1:
        planes = xp[:, None]
    else:
        planes = jnp.stack([xp[:, a::stride, b::stride, :]
                            for a in range(stride) for b in range(stride)],
                           axis=1)
    P, Hp, Wp = planes.shape[1], planes.shape[2], planes.shape[3]
    return planes.reshape(N * P, Hp, Wp, cin_pad)


def _conv3x3_taps(w_oihw, cin_pad, cout_pad):
    """Torch (Cout,Cin,3,3) weight -> (9, cin_pad, cout_pad) bf16 tap matrices."""
    cout, cin, kh, kw = w_oihw.shape
    m = jnp.transpose(w_oihw, (2, 3, 1, 0)).reshape(kh * kw, cin, cout)
    return _pad_dim(_pad_dim(m, 1, cin_pad), 2, cout_pad).astype(jnp.bfloat16)


def _bn_scale_shift(partial_stats, count, gamma, beta, cpad):
    """Fold training-mode batch stats + affine into (scale, shift): (2, cpad)."""
    s = jnp.sum(partial_stats, axis=0)                     # (2, cpad)
    mean = s[0] / count
    var = jnp.maximum(s[1] / count - mean * mean, 0.0)     # biased; guard cancellation
    inv = jax.lax.rsqrt(var + EPS)
    scale = _pad_dim(gamma, 0, cpad) * inv
    shift = _pad_dim(beta, 0, cpad) - mean * scale
    return jnp.stack([scale, shift]).astype(jnp.float32)


def init_params(key, cin, cout, stride):
    ks = jax.random.split(key, 9)
    p = dict(
        w1=0.1 * jax.random.normal(ks[0], (cout, cin, 3, 3), jnp.float32),
        g1=1.0 + 0.1 * jax.random.normal(ks[1], (cout,), jnp.float32),
        b1=0.1 * jax.random.normal(ks[2], (cout,), jnp.float32),
        w2=0.1 * jax.random.normal(ks[3], (cout, cout, 3, 3), jnp.float32),
        g2=1.0 + 0.1 * jax.random.normal(ks[4], (cout,), jnp.float32),
        b2=0.1 * jax.random.normal(ks[5], (cout,), jnp.float32),
    )
    if stride != 1 or cin != cout:  # projection shortcut
        p['wsc'] = 0.1 * jax.random.normal(ks[6], (cout, cin, 1, 1), jnp.float32)
        p['gsc'] = 1.0 + 0.1 * jax.random.normal(ks[7], (cout,), jnp.float32)
        p['bsc'] = 0.1 * jax.random.normal(ks[8], (cout,), jnp.float32)
    return p


def basic_block_forward(x_nchw, params, stride):
    # TODO(synk): BatchNorm running-mean/var buffer updates (PyTorch training
    # side effect) are not reproduced; they do not affect the forward output.
    x = jnp.transpose(x_nchw, (0, 2, 3, 1)).astype(jnp.float32)   # NCHW -> NHWC
    N, H, W, cin = x.shape
    cout = params['w1'].shape[0]
    assert stride in (1, 2) and H % stride == 0 and W % stride == 0
    Ho, Wo = H // stride, W // stride
    M = N * Ho * Wo
    cin_p = _round_up(cin)
    c_p = _round_up(cout)

    planes = _build_planes(x, stride, cin_p)          # (N*P, Hp, Wp, cin_p) bf16
    w1 = _conv3x3_taps(params['w1'], cin_p, c_p)
    w2 = _conv3x3_taps(params['w2'], c_p, c_p)

    # K1: conv1 raw + bn1 partial stats
    y1raw, st1 = conv1_stats_call(planes, w1, N, Ho, Wo, stride)
    bnp1 = _bn_scale_shift(st1, M, params['g1'], params['b1'], c_p)

    proj = (stride != 1) or (cin != cout)
    if proj:
        wsc = params['wsc'][:, :, 0, 0].T              # 1x1 conv as (cin, cout)
        wsc = _pad_dim(_pad_dim(wsc, 0, cin_p), 1, c_p).astype(jnp.bfloat16)
        z2, zsc, st2, stsc = conv2_fused_call(y1raw, bnp1, w2, planes, wsc,
                                              N, Ho, Wo, stride)
        bnpsc = _bn_scale_shift(stsc, M, params['gsc'], params['bsc'], c_p)
        sc_raw = zsc
    else:
        z2, st2 = conv2_fused_call(y1raw, bnp1, w2, None, None,
                                   N, Ho, Wo, stride)
        sc_raw = _pad_dim(x, 3, c_p).reshape(N, Ho * Wo, c_p)   # identity
        bnpsc = jnp.stack([jnp.ones((c_p,), jnp.float32),
                           jnp.zeros((c_p,), jnp.float32)])
    bnp2 = _bn_scale_shift(st2, M, params['g2'], params['b2'], c_p)

    # K3: bn2 + shortcut-bn/identity + residual add + relu
    out = finalize_call(z2, sc_raw, bnp2, bnpsc)       # (N, Ho*Wo, c_p) f32
    out = out[:, :, :cout].reshape(N, Ho, Wo, cout)
    return jnp.transpose(out, (0, 3, 1, 2))            # NHWC -> NCHW


# ----------------------------- pure-JAX reference ----------------------------

def _bn_train(y, g, b):
    mean = jnp.mean(y, axis=(0, 1, 2), keepdims=True)
    var = jnp.mean(jnp.square(y - mean), axis=(0, 1, 2), keepdims=True)
    return (y - mean) / jnp.sqrt(var + EPS) * g + b


def reference_forward(x_nchw, params, stride):
    x = jnp.transpose(x_nchw, (0, 2, 3, 1))

    def conv(xx, w, s):
        pad_h = w.shape[2] // 2
        pad_w = w.shape[3] // 2
        return jax.lax.conv_general_dilated(
            xx, jnp.transpose(w, (2, 3, 1, 0)), window_strides=(s, s),
            padding=((pad_h, pad_h), (pad_w, pad_w)),
            dimension_numbers=('NHWC', 'HWIO', 'NHWC'))

    y = jax.nn.relu(_bn_train(conv(x, params['w1'], stride),
                              params['g1'], params['b1']))
    y = _bn_train(conv(y, params['w2'], 1), params['g2'], params['b2'])
    if 'wsc' in params:
        sc = _bn_train(conv(x, params['wsc'], stride),
                       params['gsc'], params['bsc'])
    else:
        sc = x
    return jnp.transpose(jax.nn.relu(y + sc), (0, 3, 1, 2))


# ----------------------------------- main ------------------------------------

if __name__ == "__main__":
    key = jax.random.PRNGKey(0)
    kx, kp = jax.random.split(key)

    N, Cin, H, W = 2, 4, 16, 16
    Cout, stride = 8, 2  # exercises the projection (conv1x1 + BN) shortcut

    x = jax.random.normal(kx, (N, Cin, H, W), jnp.float32)
    params = init_params(kp, Cin, Cout, stride)

    fwd = jax.jit(functools.partial(basic_block_forward, stride=stride))
    out = jax.block_until_ready(fwd(x, params))

    assert out.shape == (N, Cout, H // stride, W // stride), out.shape
    ref = reference_forward(x, params, stride)
    # bf16 MXU operands (per perf review) -> tolerance loosened vs f32 reference
    err = float(jnp.max(jnp.abs(out - ref)))
    assert jnp.allclose(out, ref, atol=5e-2, rtol=5e-2), err

    print("KERNEL_OK")
</pallas_src>

<mosaic_0001>
module attributes {stable_mosaic.version = 11 : i64} {
  func.func @_conv1_stats_kernel(%arg0: i32, %arg1: memref<4x9x9x128xbf16, #tpu.memory_space<vmem>>, %arg2: memref<9x128x128xbf16, #tpu.memory_space<vmem>>, %arg3: memref<1x8x8x128xf32, #tpu.memory_space<vmem>>, %arg4: memref<1x2x128xf32, #tpu.memory_space<vmem>>) attributes {dimension_semantics = [#tpu.dimension_semantics<parallel>], iteration_bounds = array<i64: 2>, scalar_prefetch = 0 : i64, scratch_operands = 0 : i64, tpu.core_type = #tpu.core_type<tc>, window_params = [{transform_indices = @transform_0, window_bounds = array<i64: 4, 9, 9, 128>}, {pipeline_mode = #tpu.pipeline_mode<synchronous>, transform_indices = @transform_1, window_bounds = array<i64: 9, 128, 128>}, {transform_indices = @transform_2, window_bounds = array<i64: 1, 8, 8, 128>}, {transform_indices = @transform_3, window_bounds = array<i64: 1, 2, 128>}]} {
    %cst = arith.constant 0.000000e+00 : f32
    %0 = vector.broadcast %cst : f32 to vector<64x128xf32>
    %c0 = arith.constant 0 : index
    %c0_0 = arith.constant 0 : index
    %c0_1 = arith.constant 0 : index
    %c0_2 = arith.constant 0 : index
    %1 = vector.load %arg1[%c0, %c0_0, %c0_1, %c0_2] : memref<4x9x9x128xbf16, #tpu.memory_space<vmem>>, vector<1x8x8x128xbf16>
    %2 = vector.shape_cast %1 : vector<1x8x8x128xbf16> to vector<8x8x128xbf16>
    %3 = vector.shape_cast %2 : vector<8x8x128xbf16> to vector<64x128xbf16>
    %c0_3 = arith.constant 0 : index
    %c0_4 = arith.constant 0 : index
    %c0_5 = arith.constant 0 : index
    %4 = vector.load %arg2[%c0_3, %c0_4, %c0_5] : memref<9x128x128xbf16, #tpu.memory_space<vmem>>, vector<1x128x128xbf16>
    %5 = vector.shape_cast %4 : vector<1x128x128xbf16> to vector<128x128xbf16>
    %cst_6 = arith.constant dense<0.000000e+00> : vector<64x128xf32>
    %6 = tpu.matmul %3, %5, %cst_6 {dimension_numbers = #tpu.dot_dimension_numbers<[1], [0], [0], [1], [0, 0, 1, 1], [], []>} : vector<64x128xbf16>, vector<128x128xbf16>, vector<64x128xf32> -> vector<64x128xf32>
    %7 = arith.addf %0, %6 : vector<64x128xf32>
    %c1 = arith.constant 1 : index
    %c0_7 = arith.constant 0 : index
    %c0_8 = arith.constant 0 : index
    %c0_9 = arith.constant 0 : index
    %8 = vector.load %arg1[%c1, %c0_7, %c0_8, %c0_9] : memref<4x9x9x128xbf16, #tpu.memory_space<vmem>>, vector<1x8x8x128xbf16>
    %9 = vector.shape_cast %8 : vector<1x8x8x128xbf16> to vector<8x8x128xbf16>
    %10 = vector.shape_cast %9 : vector<8x8x128xbf16> to vector<64x128xbf16>
    %c1_10 = arith.constant 1 : index
    %c0_11 = arith.constant 0 : index
    %c0_12 = arith.constant 0 : index
    %11 = vector.load %arg2[%c1_10, %c0_11, %c0_12] : memref<9x128x128xbf16, #tpu.memory_space<vmem>>, vector<1x128x128xbf16>
    %12 = vector.shape_cast %11 : vector<1x128x128xbf16> to vector<128x128xbf16>
    %cst_13 = arith.constant dense<0.000000e+00> : vector<64x128xf32>
    %13 = tpu.matmul %10, %12, %cst_13 {dimension_numbers = #tpu.dot_dimension_numbers<[1], [0], [0], [1], [0, 0, 1, 1], [], []>} : vector<64x128xbf16>, vector<128x128xbf16>, vector<64x128xf32> -> vector<64x128xf32>
    %14 = arith.addf %7, %13 : vector<64x128xf32>
    %c0_14 = arith.constant 0 : index
    %c0_15 = arith.constant 0 : index
    %c1_16 = arith.constant 1 : index
    %c0_17 = arith.constant 0 : index
    %15 = vector.load %arg1[%c0_14, %c0_15, %c1_16, %c0_17] : memref<4x9x9x128xbf16, #tpu.memory_space<vmem>>, vector<1x8x8x128xbf16>
    %16 = vector.shape_cast %15 : vector<1x8x8x128xbf16> to vector<8x8x128xbf16>
    %17 = vector.shape_cast %16 : vector<8x8x128xbf16> to vector<64x128xbf16>
    %c2 = arith.constant 2 : index
    %c0_18 = arith.constant 0 : index
    %c0_19 = arith.constant 0 : index
    %18 = vector.load %arg2[%c2, %c0_18, %c0_19] : memref<9x128x128xbf16, #tpu.memory_space<vmem>>, vector<1x128x128xbf16>
    %19 = vector.shape_cast %18 : vector<1x128x128xbf16> to vector<128x128xbf16>
    %cst_20 = arith.constant dense<0.000000e+00> : vector<64x128xf32>
    %20 = tpu.matmul %17, %19, %cst_20 {dimension_numbers = #tpu.dot_dimension_numbers<[1], [0], [0], [1], [0, 0, 1, 1], [], []>} : vector<64x128xbf16>, vector<128x128xbf16>, vector<64x128xf32> -> vector<64x128xf32>
    %21 = arith.addf %14, %20 : vector<64x128xf32>
    %c2_21 = arith.constant 2 : index
    %c0_22 = arith.constant 0 : index
    %c0_23 = arith.constant 0 : index
    %c0_24 = arith.constant 0 : index
    %22 = vector.load %arg1[%c2_21, %c0_22, %c0_23, %c0_24] : memref<4x9x9x128xbf16, #tpu.memory_space<vmem>>, vector<1x8x8x128xbf16>
    %23 = vector.shape_cast %22 : vector<1x8x8x128xbf16> to vector<8x8x128xbf16>
    %24 = vector.shape_cast %23 : vector<8x8x128xbf16> to vector<64x128xbf16>
    %c3 = arith.constant 3 : index
    %c0_25 = arith.constant 0 : index
    %c0_26 = arith.constant 0 : index
    %25 = vector.load %arg2[%c3, %c0_25, %c0_26] : memref<9x128x128xbf16, #tpu.memory_space<vmem>>, vector<1x128x128xbf16>
    %26 = vector.shape_cast %25 : vector<1x128x128xbf16> to vector<128x128xbf16>
    %cst_27 = arith.constant dense<0.000000e+00> : vector<64x128xf32>
    %27 = tpu.matmul %24, %26, %cst_27 {dimension_numbers = #tpu.dot_dimension_numbers<[1], [0], [0], [1], [0, 0, 1, 1], [], []>} : vector<64x128xbf16>, vector<128x128xbf16>, vector<64x128xf32> -> vector<64x128xf32>
    %28 = arith.addf %21, %27 : vector<64x128xf32>
    %c3_28 = arith.constant 3 : index
    %c0_29 = arith.constant 0 : index
    %c0_30 = arith.constant 0 : index
    %c0_31 = arith.constant 0 : index
    %29 = vector.load %arg1[%c3_28, %c0_29, %c0_30, %c0_31] : memref<4x9x9x128xbf16, #tpu.memory_space<vmem>>, vector<1x8x8x128xbf16>
    %30 = vector.shape_cast %29 : vector<1x8x8x128xbf16> to vector<8x8x128xbf16>
    %31 = vector.shape_cast %30 : vector<8x8x128xbf16> to vector<64x128xbf16>
    %c4 = arith.constant 4 : index
    %c0_32 = arith.constant 0 : index
    %c0_33 = arith.constant 0 : index
    %32 = vector.load %arg2[%c4, %c0_32, %c0_33] : memref<9x128x128xbf16, #tpu.memory_space<vmem>>, vector<1x128x128xbf16>
    %33 = vector.shape_cast %32 : vector<1x128x128xbf16> to vector<128x128xbf16>
    %cst_34 = arith.constant dense<0.000000e+00> : vector<64x128xf32>
    %34 = tpu.matmul %31, %33, %cst_34 {dimension_numbers = #tpu.dot_dimension_numbers<[1], [0], [0], [1], [0, 0, 1, 1], [], []>} : vector<64x128xbf16>, vector<128x128xbf16>, vector<64x128xf32> -> vector<64x128xf32>
    %35 = arith.addf %28, %34 : vector<64x128xf32>
    %c2_35 = arith.constant 2 : index
    %c0_36 = arith.constant 0 : index
    %c1_37 = arith.constant 1 : index
    %c0_38 = arith.constant 0 : index
    %36 = vector.load %arg1[%c2_35, %c0_36, %c1_37, %c0_38] : memref<4x9x9x128xbf16, #tpu.memory_space<vmem>>, vector<1x8x8x128xbf16>
    %37 = vector.shape_cast %36 : vector<1x8x8x128xbf16> to vector<8x8x128xbf16>
    %38 = vector.shape_cast %37 : vector<8x8x128xbf16> to vector<64x128xbf16>
    %c5 = arith.constant 5 : index
    %c0_39 = arith.constant 0 : index
    %c0_40 = arith.constant 0 : index
    %39 = vector.load %arg2[%c5, %c0_39, %c0_40] : memref<9x128x128xbf16, #tpu.memory_space<vmem>>, vector<1x128x128xbf16>
    %40 = vector.shape_cast %39 : vector<1x128x128xbf16> to vector<128x128xbf16>
    %cst_41 = arith.constant dense<0.000000e+00> : vector<64x128xf32>
    %41 = tpu.matmul %38, %40, %cst_41 {dimension_numbers = #tpu.dot_dimension_numbers<[1], [0], [0], [1], [0, 0, 1, 1], [], []>} : vector<64x128xbf16>, vector<128x128xbf16>, vector<64x128xf32> -> vector<64x128xf32>
    %42 = arith.addf %35, %41 : vector<64x128xf32>
    %c0_42 = arith.constant 0 : index
    %c1_43 = arith.constant 1 : index
    %c0_44 = arith.constant 0 : index
    %c0_45 = arith.constant 0 : index
    %43 = vector.load %arg1[%c0_42, %c1_43, %c0_44, %c0_45] : memref<4x9x9x128xbf16, #tpu.memory_space<vmem>>, vector<1x8x8x128xbf16>
    %44 = vector.shape_cast %43 : vector<1x8x8x128xbf16> to vector<8x8x128xbf16>
    %45 = vector.shape_cast %44 : vector<8x8x128xbf16> to vector<64x128xbf16>
    %c6 = arith.constant 6 : index
    %c0_46 = arith.constant 0 : index
    %c0_47 = arith.constant 0 : index
    %46 = vector.load %arg2[%c6, %c0_46, %c0_47] : memref<9x128x128xbf16, #tpu.memory_space<vmem>>, vector<1x128x128xbf16>
    %47 = vector.shape_cast %46 : vector<1x128x128xbf16> to vector<128x128xbf16>
    %cst_48 = arith.constant dense<0.000000e+00> : vector<64x128xf32>
    %48 = tpu.matmul %45, %47, %cst_48 {dimension_numbers = #tpu.dot_dimension_numbers<[1], [0], [0], [1], [0, 0, 1, 1], [], []>} : vector<64x128xbf16>, vector<128x128xbf16>, vector<64x128xf32> -> vector<64x128xf32>
    %49 = arith.addf %42, %48 : vector<64x128xf32>
    %c1_49 = arith.constant 1 : index
    %c1_50 = arith.constant 1 : index
    %c0_51 = arith.constant 0 : index
    %c0_52 = arith.constant 0 : index
    %50 = vector.load %arg1[%c1_49, %c1_50, %c0_51, %c0_52] : memref<4x9x9x128xbf16, #tpu.memory_space<vmem>>, vector<1x8x8x128xbf16>
    %51 = vector.shape_cast %50 : vector<1x8x8x128xbf16> to vector<8x8x128xbf16>
    %52 = vector.shape_cast %51 : vector<8x8x128xbf16> to vector<64x128xbf16>
    %c7 = arith.constant 7 : index
    %c0_53 = arith.constant 0 : index
    %c0_54 = arith.constant 0 : index
    %53 = vector.load %arg2[%c7, %c0_53, %c0_54] : memref<9x128x128xbf16, #tpu.memory_space<vmem>>, vector<1x128x128xbf16>
    %54 = vector.shape_cast %53 : vector<1x128x128xbf16> to vector<128x128xbf16>
    %cst_55 = arith.constant dense<0.000000e+00> : vector<64x128xf32>
    %55 = tpu.matmul %52, %54, %cst_55 {dimension_numbers = #tpu.dot_dimension_numbers<[1], [0], [0], [1], [0, 0, 1, 1], [], []>} : vector<64x128xbf16>, vector<128x128xbf16>, vector<64x128xf32> -> vector<64x128xf32>
    %56 = arith.addf %49, %55 : vector<64x128xf32>
    %c0_56 = arith.constant 0 : index
    %c1_57 = arith.constant 1 : index
    %c1_58 = arith.constant 1 : index
    %c0_59 = arith.constant 0 : index
    %57 = vector.load %arg1[%c0_56, %c1_57, %c1_58, %c0_59] : memref<4x9x9x128xbf16, #tpu.memory_space<vmem>>, vector<1x8x8x128xbf16>
    %58 = vector.shape_cast %57 : vector<1x8x8x128xbf16> to vector<8x8x128xbf16>
    %59 = vector.shape_cast %58 : vector<8x8x128xbf16> to vector<64x128xbf16>
    %c8 = arith.constant 8 : index
    %c0_60 = arith.constant 0 : index
    %c0_61 = arith.constant 0 : index
    %60 = vector.load %arg2[%c8, %c0_60, %c0_61] : memref<9x128x128xbf16, #tpu.memory_space<vmem>>, vector<1x128x128xbf16>
    %61 = vector.shape_cast %60 : vector<1x128x128xbf16> to vector<128x128xbf16>
    %cst_62 = arith.constant dense<0.000000e+00> : vector<64x128xf32>
    %62 = tpu.matmul %59, %61, %cst_62 {dimension_numbers = #tpu.dot_dimension_numbers<[1], [0], [0], [1], [0, 0, 1, 1], [], []>} : vector<64x128xbf16>, vector<128x128xbf16>, vector<64x128xf32> -> vector<64x128xf32>
    %63 = arith.addf %56, %62 : vector<64x128xf32>
    %64 = vector.shape_cast %63 : vector<64x128xf32> to vector<8x8x128xf32>
    %c0_63 = arith.constant 0 : index
    %c0_64 = arith.constant 0 : index
    %c0_65 = arith.constant 0 : index
    %c0_66 = arith.constant 0 : index
    %65 = vector.load %arg3[%c0_63, %c0_64, %c0_65, %c0_66] : memref<1x8x8x128xf32, #tpu.memory_space<vmem>>, vector<1x8x8x128xf32>
    %66 = vector.shape_cast %65 : vector<1x8x8x128xf32> to vector<8x8x128xf32>
    %67 = vector.shape_cast %64 : vector<8x8x128xf32> to vector<1x8x8x128xf32>
    tpu.vector_store %arg3[%c0_63, %c0_64, %c0_65, %c0_66], %67 {strides = array<i32>} : memref<1x8x8x128xf32, #tpu.memory_space<vmem>>, vector<1x8x8x128xf32>,
    %cst_67 = arith.constant dense<0.000000e+00> : vector<128xf32>
    %68 = vector.multi_reduction <add>, %63, %cst_67 [0] : vector<64x128xf32> to vector<128xf32>
    %69 = vector.shape_cast %68 : vector<128xf32> to vector<1x128xf32>
    %70 = arith.mulf %63, %63 : vector<64x128xf32>
    %cst_68 = arith.constant dense<0.000000e+00> : vector<128xf32>
    %71 = vector.multi_reduction <add>, %70, %cst_68 [0] : vector<64x128xf32> to vector<128xf32>
    %72 = vector.shape_cast %71 : vector<128xf32> to vector<1x128xf32>
    %73 = tpu.concatenate %69, %72 in 0 : vector<1x128xf32>, vector<1x128xf32> -> vector<2x128xf32>
    %c0_69 = arith.constant 0 : index
    %c0_70 = arith.constant 0 : index
    %c0_71 = arith.constant 0 : index
    %74 = vector.load %arg4[%c0_69, %c0_70, %c0_71] : memref<1x2x128xf32, #tpu.memory_space<vmem>>, vector<1x2x128xf32>
    %75 = vector.shape_cast %74 : vector<1x2x128xf32> to vector<2x128xf32>
    %76 = vector.shape_cast %73 : vector<2x128xf32> to vector<1x2x128xf32>
    tpu.vector_store %arg4[%c0_69, %c0_70, %c0_71], %76 {strides = array<i32>} : memref<1x2x128xf32, #tpu.memory_space<vmem>>, vector<1x2x128xf32>,
    return
  }
  func.func @transform_0(%arg0: i32) -> (i32, i32, i32, i32) {
    %c0_i32 = arith.constant 0 : i32
    %c0_i32_0 = arith.constant 0 : i32
    %c0_i32_1 = arith.constant 0 : i32
    %c0_i32_2 = arith.constant 0 : i32
    return %arg0, %c0_i32, %c0_i32_0, %c0_i32_1 : i32, i32, i32, i32
  }
  func.func @transform_1(%arg0: i32) -> (i32, i32, i32) {
    %c0_i32 = arith.constant 0 : i32
    %c0_i32_0 = arith.constant 0 : i32
    %c0_i32_1 = arith.constant 0 : i32
    %c0_i32_2 = arith.constant 0 : i32
    return %c0_i32, %c0_i32_0, %c0_i32_1 : i32, i32, i32
  }
  func.func @transform_2(%arg0: i32) -> (i32, i32, i32, i32) {
    %c0_i32 = arith.constant 0 : i32
    %c0_i32_0 = arith.constant 0 : i32
    %c0_i32_1 = arith.constant 0 : i32
    %c0_i32_2 = arith.constant 0 : i32
    return %arg0, %c0_i32, %c0_i32_0, %c0_i32_1 : i32, i32, i32, i32
  }
  func.func @transform_3(%arg0: i32) -> (i32, i32, i32) {
    %c0_i32 = arith.constant 0 : i32
    %c0_i32_0 = arith.constant 0 : i32
    %c0_i32_1 = arith.constant 0 : i32
    return %arg0, %c0_i32, %c0_i32_0 : i32, i32, i32
  }
}

module attributes {stable_mosaic.version = 11 : i64} {
  func.func @_conv2_fused_kernel(%arg0: i32, %arg1: memref<1x8x8x128xf32, #tpu.memory_space<vmem>>, %arg2: memref<2x128xf32, #tpu.memory_space<vmem>>, %arg3: memref<9x128x128xbf16, #tpu.memory_space<vmem>>, %arg4: memref<4x9x9x128xbf16, #tpu.memory_space<vmem>>, %arg5: memref<128x128xbf16, #tpu.memory_space<vmem>>, %arg6: memref<1x64x128xf32, #tpu.memory_space<vmem>>, %arg7: memref<1x64x128xf32, #tpu.memory_space<vmem>>, %arg8: memref<1x2x128xf32, #tpu.memory_space<vmem>>, %arg9: memref<1x2x128xf32, #tpu.memory_space<vmem>>, %arg10: memref<10x10x128xf32, #tpu.memory_space<vmem>>) attributes {dimension_semantics = [#tpu.dimension_semantics<parallel>], iteration_bounds = array<i64: 2>, scalar_prefetch = 0 : i64, scratch_operands = 1 : i64, tpu.core_type = #tpu.core_type<tc>, window_params = [{transform_indices = @transform_0, window_bounds = array<i64: 1, 8, 8, 128>}, {pipeline_mode = #tpu.pipeline_mode<synchronous>, transform_indices = @transform_1, window_bounds = array<i64: 2, 128>}, {pipeline_mode = #tpu.pipeline_mode<synchronous>, transform_indices = @transform_2, window_bounds = array<i64: 9, 128, 128>}, {transform_indices = @transform_3, window_bounds = array<i64: 4, 9, 9, 128>}, {pipeline_mode = #tpu.pipeline_mode<synchronous>, transform_indices = @transform_4, window_bounds = array<i64: 128, 128>}, {transform_indices = @transform_5, window_bounds = array<i64: 1, 64, 128>}, {transform_indices = @transform_6, window_bounds = array<i64: 1, 64, 128>}, {transform_indices = @transform_7, window_bounds = array<i64: 1, 2, 128>}, {transform_indices = @transform_8, window_bounds = array<i64: 1, 2, 128>}]} {
    %c0 = arith.constant 0 : index
    %c0_0 = arith.constant 0 : index
    %0 = vector.load %arg2[%c0, %c0_0] : memref<2x128xf32, #tpu.memory_space<vmem>>, vector<2x128xf32>
    %1 = vector.extract_strided_slice %0 {offsets = [0, 0], sizes = [1, 128], strides = [1, 1]} : vector<2x128xf32> to vector<1x128xf32>
    %2 = vector.shape_cast %1 : vector<1x128xf32> to vector<1x1x128xf32>
    %3 = vector.extract_strided_slice %0 {offsets = [1, 0], sizes = [1, 128], strides = [1, 1]} : vector<2x128xf32> to vector<1x128xf32>
    %4 = vector.shape_cast %3 : vector<1x128xf32> to vector<1x1x128xf32>
    %c0_1 = arith.constant 0 : index
    %c0_2 = arith.constant 0 : index
    %c0_3 = arith.constant 0 : index
    %c0_4 = arith.constant 0 : index
    %5 = vector.load %arg1[%c0_1, %c0_2, %c0_3, %c0_4] : memref<1x8x8x128xf32, #tpu.memory_space<vmem>>, vector<1x8x8x128xf32>
    %6 = vector.shape_cast %5 : vector<1x8x8x128xf32> to vector<8x8x128xf32>
    %7 = vector.broadcast %2 : vector<1x1x128xf32> to vector<8x8x128xf32>
    %8 = arith.mulf %6, %7 : vector<8x8x128xf32>
    %9 = vector.broadcast %4 : vector<1x1x128xf32> to vector<8x8x128xf32>
    %10 = arith.addf %8, %9 : vector<8x8x128xf32>
    %cst = arith.constant 0.000000e+00 : f32
    %11 = vector.broadcast %cst : f32 to vector<8x8x128xf32>
    %12 = arith.maximumf %10, %11 : vector<8x8x128xf32>
    %cst_5 = arith.constant 0.000000e+00 : f32
    %13 = vector.broadcast %cst_5 : f32 to vector<10x10x128xf32>
    %c0_6 = arith.constant 0 : index
    %c0_7 = arith.constant 0 : index
    %c0_8 = arith.constant 0 : index
    %14 = vector.load %arg10[%c0_6, %c0_7, %c0_8] : memref<10x10x128xf32, #tpu.memory_space<vmem>>, vector<10x10x128xf32>
    tpu.vector_store %arg10[%c0_6, %c0_7, %c0_8], %13 {strides = array<i32>} : memref<10x10x128xf32, #tpu.memory_space<vmem>>, vector<10x10x128xf32>,
    %c1 = arith.constant 1 : index
    %c1_9 = arith.constant 1 : index
    %c0_10 = arith.constant 0 : index
    %15 = vector.load %arg10[%c1, %c1_9, %c0_10] : memref<10x10x128xf32, #tpu.memory_space<vmem>>, vector<8x8x128xf32>
    tpu.vector_store %arg10[%c1, %c1_9, %c0_10], %12 {strides = array<i32>} : memref<10x10x128xf32, #tpu.memory_space<vmem>>, vector<8x8x128xf32>,
    %cst_11 = arith.constant 0.000000e+00 : f32
    %16 = vector.broadcast %cst_11 : f32 to vector<64x128xf32>
    %c0_12 = arith.constant 0 : index
    %c0_13 = arith.constant 0 : index
    %c0_14 = arith.constant 0 : index
    %17 = vector.load %arg10[%c0_12, %c0_13, %c0_14] : memref<10x10x128xf32, #tpu.memory_space<vmem>>, vector<8x8x128xf32>
    %18 = arith.truncf %17 : vector<8x8x128xf32> to vector<8x8x128xbf16>
    %19 = vector.shape_cast %18 : vector<8x8x128xbf16> to vector<64x128xbf16>
    %c0_15 = arith.constant 0 : index
    %c0_16 = arith.constant 0 : index
    %c0_17 = arith.constant 0 : index
    %20 = vector.load %arg3[%c0_15, %c0_16, %c0_17] : memref<9x128x128xbf16, #tpu.memory_space<vmem>>, vector<1x128x128xbf16>
    %21 = vector.shape_cast %20 : vector<1x128x128xbf16> to vector<128x128xbf16>
    %cst_18 = arith.constant dense<0.000000e+00> : vector<64x128xf32>
    %22 = tpu.matmul %19, %21, %cst_18 {dimension_numbers = #tpu.dot_dimension_numbers<[1], [0], [0], [1], [0, 0, 1, 1], [], []>} : vector<64x128xbf16>, vector<128x128xbf16>, vector<64x128xf32> -> vector<64x128xf32>
    %23 = arith.addf %16, %22 : vector<64x128xf32>
    %c0_19 = arith.constant 0 : index
    %c1_20 = arith.constant 1 : index
    %c0_21 = arith.constant 0 : index
    %24 = vector.load %arg10[%c0_19, %c1_20, %c0_21] : memref<10x10x128xf32, #tpu.memory_space<vmem>>, vector<8x8x128xf32>
    %25 = arith.truncf %24 : vector<8x8x128xf32> to vector<8x8x128xbf16>
    %26 = vector.shape_cast %25 : vector<8x8x128xbf16> to vector<64x128xbf16>
    %c1_22 = arith.constant 1 : index
    %c0_23 = arith.constant 0 : index
    %c0_24 = arith.constant 0 : index
    %27 = vector.load %arg3[%c1_22, %c0_23, %c0_24] : memref<9x128x128xbf16, #tpu.memory_space<vmem>>, vector<1x128x128xbf16>
    %28 = vector.shape_cast %27 : vector<1x128x128xbf16> to vector<128x128xbf16>
    %cst_25 = arith.constant dense<0.000000e+00> : vector<64x128xf32>
    %29 = tpu.matmul %26, %28, %cst_25 {dimension_numbers = #tpu.dot_dimension_numbers<[1], [0], [0], [1], [0, 0, 1, 1], [], []>} : vector<64x128xbf16>, vector<128x128xbf16>, vector<64x128xf32> -> vector<64x128xf32>
    %30 = arith.addf %23, %29 : vector<64x128xf32>
    %c0_26 = arith.constant 0 : index
    %c2 = arith.constant 2 : index
    %c0_27 = arith.constant 0 : index
    %31 = vector.load %arg10[%c0_26, %c2, %c0_27] : memref<10x10x128xf32, #tpu.memory_space<vmem>>, vector<8x8x128xf32>
    %32 = arith.truncf %31 : vector<8x8x128xf32> to vector<8x8x128xbf16>
    %33 = vector.shape_cast %32 : vector<8x8x128xbf16> to vector<64x128xbf16>
    %c2_28 = arith.constant 2 : index
    %c0_29 = arith.constant 0 : index
    %c0_30 = arith.constant 0 : index
    %34 = vector.load %arg3[%c2_28, %c0_29, %c0_30] : memref<9x128x128xbf16, #tpu.memory_space<vmem>>, vector<1x128x128xbf16>
    %35 = vector.shape_cast %34 : vector<1x128x128xbf16> to vector<128x128xbf16>
    %cst_31 = arith.constant dense<0.000000e+00> : vector<64x128xf32>
    %36 = tpu.matmul %33, %35, %cst_31 {dimension_numbers = #tpu.dot_dimension_numbers<[1], [0], [0], [1], [0, 0, 1, 1], [], []>} : vector<64x128xbf16>, vector<128x128xbf16>, vector<64x128xf32> -> vector<64x128xf32>
    %37 = arith.addf %30, %36 : vector<64x128xf32>
    %c1_32 = arith.constant 1 : index
    %c0_33 = arith.constant 0 : index
    %c0_34 = arith.constant 0 : index
    %38 = vector.load %arg10[%c1_32, %c0_33, %c0_34] : memref<10x10x128xf32, #tpu.memory_space<vmem>>, vector<8x8x128xf32>
    %39 = arith.truncf %38 : vector<8x8x128xf32> to vector<8x8x128xbf16>
    %40 = vector.shape_cast %39 : vector<8x8x128xbf16> to vector<64x128xbf16>
    %c3 = arith.constant 3 : index
    %c0_35 = arith.constant 0 : index
    %c0_36 = arith.constant 0 : index
    %41 = vector.load %arg3[%c3, %c0_35, %c0_36] : memref<9x128x128xbf16, #tpu.memory_space<vmem>>, vector<1x128x128xbf16>
    %42 = vector.shape_cast %41 : vector<1x128x128xbf16> to vector<128x128xbf16>
    %cst_37 = arith.constant dense<0.000000e+00> : vector<64x128xf32>
    %43 = tpu.matmul %40, %42, %cst_37 {dimension_numbers = #tpu.dot_dimension_numbers<[1], [0], [0], [1], [0, 0, 1, 1], [], []>} : vector<64x128xbf16>, vector<128x128xbf16>, vector<64x128xf32> -> vector<64x128xf32>
    %44 = arith.addf %37, %43 : vector<64x128xf32>
    %c1_38 = arith.constant 1 : index
    %c1_39 = arith.constant 1 : index
    %c0_40 = arith.constant 0 : index
    %45 = vector.load %arg10[%c1_38, %c1_39, %c0_40] : memref<10x10x128xf32, #tpu.memory_space<vmem>>, vector<8x8x128xf32>
    %46 = arith.truncf %45 : vector<8x8x128xf32> to vector<8x8x128xbf16>
    %47 = vector.shape_cast %46 : vector<8x8x128xbf16> to vector<64x128xbf16>
    %c4 = arith.constant 4 : index
    %c0_41 = arith.constant 0 : index
    %c0_42 = arith.constant 0 : index
    %48 = vector.load %arg3[%c4, %c0_41, %c0_42] : memref<9x128x128xbf16, #tpu.memory_space<vmem>>, vector<1x128x128xbf16>
    %49 = vector.shape_cast %48 : vector<1x128x128xbf16> to vector<128x128xbf16>
    %cst_43 = arith.constant dense<0.000000e+00> : vector<64x128xf32>
    %50 = tpu.matmul %47, %49, %cst_43 {dimension_numbers = #tpu.dot_dimension_numbers<[1], [0], [0], [1], [0, 0, 1, 1], [], []>} : vector<64x128xbf16>, vector<128x128xbf16>, vector<64x128xf32> -> vector<64x128xf32>
    %51 = arith.addf %44, %50 : vector<64x128xf32>
    %c1_44 = arith.constant 1 : index
    %c2_45 = arith.constant 2 : index
    %c0_46 = arith.constant 0 : index
    %52 = vector.load %arg10[%c1_44, %c2_45, %c0_46] : memref<10x10x128xf32, #tpu.memory_space<vmem>>, vector<8x8x128xf32>
    %53 = arith.truncf %52 : vector<8x8x128xf32> to vector<8x8x128xbf16>
    %54 = vector.shape_cast %53 : vector<8x8x128xbf16> to vector<64x128xbf16>
    %c5 = arith.constant 5 : index
    %c0_47 = arith.constant 0 : index
    %c0_48 = arith.constant 0 : index
    %55 = vector.load %arg3[%c5, %c0_47, %c0_48] : memref<9x128x128xbf16, #tpu.memory_space<vmem>>, vector<1x128x128xbf16>
    %56 = vector.shape_cast %55 : vector<1x128x128xbf16> to vector<128x128xbf16>
    %cst_49 = arith.constant dense<0.000000e+00> : vector<64x128xf32>
    %57 = tpu.matmul %54, %56, %cst_49 {dimension_numbers = #tpu.dot_dimension_numbers<[1], [0], [0], [1], [0, 0, 1, 1], [], []>} : vector<64x128xbf16>, vector<128x128xbf16>, vector<64x128xf32> -> vector<64x128xf32>
    %58 = arith.addf %51, %57 : vector<64x128xf32>
    %c2_50 = arith.constant 2 : index
    %c0_51 = arith.constant 0 : index
    %c0_52 = arith.constant 0 : index
    %59 = vector.load %arg10[%c2_50, %c0_51, %c0_52] : memref<10x10x128xf32, #tpu.memory_space<vmem>>, vector<8x8x128xf32>
    %60 = arith.truncf %59 : vector<8x8x128xf32> to vector<8x8x128xbf16>
    %61 = vector.shape_cast %60 : vector<8x8x128xbf16> to vector<64x128xbf16>
    %c6 = arith.constant 6 : index
    %c0_53 = arith.constant 0 : index
    %c0_54 = arith.constant 0 : index
    %62 = vector.load %arg3[%c6, %c0_53, %c0_54] : memref<9x128x128xbf16, #tpu.memory_space<vmem>>, vector<1x128x128xbf16>
    %63 = vector.shape_cast %62 : vector<1x128x128xbf16> to vector<128x128xbf16>
    %cst_55 = arith.constant dense<0.000000e+00> : vector<64x128xf32>
    %64 = tpu.matmul %61, %63, %cst_55 {dimension_numbers = #tpu.dot_dimension_numbers<[1], [0], [0], [1], [0, 0, 1, 1], [], []>} : vector<64x128xbf16>, vector<128x128xbf16>, vector<64x128xf32> -> vector<64x128xf32>
    %65 = arith.addf %58, %64 : vector<64x128xf32>
    %c2_56 = arith.constant 2 : index
    %c1_57 = arith.constant 1 : index
    %c0_58 = arith.constant 0 : index
    %66 = vector.load %arg10[%c2_56, %c1_57, %c0_58] : memref<10x10x128xf32, #tpu.memory_space<vmem>>, vector<8x8x128xf32>
    %67 = arith.truncf %66 : vector<8x8x128xf32> to vector<8x8x128xbf16>
    %68 = vector.shape_cast %67 : vector<8x8x128xbf16> to vector<64x128xbf16>
    %c7 = arith.constant 7 : index
    %c0_59 = arith.constant 0 : index
    %c0_60 = arith.constant 0 : index
    %69 = vector.load %arg3[%c7, %c0_59, %c0_60] : memref<9x128x128xbf16, #tpu.memory_space<vmem>>, vector<1x128x128xbf16>
    %70 = vector.shape_cast %69 : vector<1x128x128xbf16> to vector<128x128xbf16>
    %cst_61 = arith.constant dense<0.000000e+00> : vector<64x128xf32>
    %71 = tpu.matmul %68, %70, %cst_61 {dimension_numbers = #tpu.dot_dimension_numbers<[1], [0], [0], [1], [0, 0, 1, 1], [], []>} : vector<64x128xbf16>, vector<128x128xbf16>, vector<64x128xf32> -> vector<64x128xf32>
    %72 = arith.addf %65, %71 : vector<64x128xf32>
    %c2_62 = arith.constant 2 : index
    %c2_63 = arith.constant 2 : index
    %c0_64 = arith.constant 0 : index
    %73 = vector.load %arg10[%c2_62, %c2_63, %c0_64] : memref<10x10x128xf32, #tpu.memory_space<vmem>>, vector<8x8x128xf32>
    %74 = arith.truncf %73 : vector<8x8x128xf32> to vector<8x8x128xbf16>
    %75 = vector.shape_cast %74 : vector<8x8x128xbf16> to vector<64x128xbf16>
    %c8 = arith.constant 8 : index
    %c0_65 = arith.constant 0 : index
    %c0_66 = arith.constant 0 : index
    %76 = vector.load %arg3[%c8, %c0_65, %c0_66] : memref<9x128x128xbf16, #tpu.memory_space<vmem>>, vector<1x128x128xbf16>
    %77 = vector.shape_cast %76 : vector<1x128x128xbf16> to vector<128x128xbf16>
    %cst_67 = arith.constant dense<0.000000e+00> : vector<64x128xf32>
    %78 = tpu.matmul %75, %77, %cst_67 {dimension_numbers = #tpu.dot_dimension_numbers<[1], [0], [0], [1], [0, 0, 1, 1], [], []>} : vector<64x128xbf16>, vector<128x128xbf16>, vector<64x128xf32> -> vector<64x128xf32>
    %79 = arith.addf %72, %78 : vector<64x128xf32>
    %c0_68 = arith.constant 0 : index
    %c0_69 = arith.constant 0 : index
    %c0_70 = arith.constant 0 : index
    %80 = vector.load %arg6[%c0_68, %c0_69, %c0_70] : memref<1x64x128xf32, #tpu.memory_space<vmem>>, vector<1x64x128xf32>
    %81 = vector.shape_cast %80 : vector<1x64x128xf32> to vector<64x128xf32>
    %82 = vector.shape_cast %79 : vector<64x128xf32> to vector<1x64x128xf32>
    tpu.vector_store %arg6[%c0_68, %c0_69, %c0_70], %82 {strides = array<i32>} : memref<1x64x128xf32, #tpu.memory_space<vmem>>, vector<1x64x128xf32>,
    %cst_71 = arith.constant dense<0.000000e+00> : vector<128xf32>
    %83 = vector.multi_reduction <add>, %79, %cst_71 [0] : vector<64x128xf32> to vector<128xf32>
    %84 = vector.shape_cast %83 : vector<128xf32> to vector<1x128xf32>
    %85 = arith.mulf %79, %79 : vector<64x128xf32>
    %cst_72 = arith.constant dense<0.000000e+00> : vector<128xf32>
    %86 = vector.multi_reduction <add>, %85, %cst_72 [0] : vector<64x128xf32> to vector<128xf32>
    %87 = vector.shape_cast %86 : vector<128xf32> to vector<1x128xf32>
    %88 = tpu.concatenate %84, %87 in 0 : vector<1x128xf32>, vector<1x128xf32> -> vector<2x128xf32>
    %c0_73 = arith.constant 0 : index
    %c0_74 = arith.constant 0 : index
    %c0_75 = arith.constant 0 : index
    %89 = vector.load %arg8[%c0_73, %c0_74, %c0_75] : memref<1x2x128xf32, #tpu.memory_space<vmem>>, vector<1x2x128xf32>
    %90 = vector.shape_cast %89 : vector<1x2x128xf32> to vector<2x128xf32>
    %91 = vector.shape_cast %88 : vector<2x128xf32> to vector<1x2x128xf32>
    tpu.vector_store %arg8[%c0_73, %c0_74, %c0_75], %91 {strides = array<i32>} : memref<1x2x128xf32, #tpu.memory_space<vmem>>, vector<1x2x128xf32>,
    %c3_76 = arith.constant 3 : index
    %c0_77 = arith.constant 0 : index
    %c0_78 = arith.constant 0 : index
    %c0_79 = arith.constant 0 : index
    %92 = vector.load %arg4[%c3_76, %c0_77, %c0_78, %c0_79] : memref<4x9x9x128xbf16, #tpu.memory_space<vmem>>, vector<1x8x8x128xbf16>
    %93 = vector.shape_cast %92 : vector<1x8x8x128xbf16> to vector<8x8x128xbf16>
    %94 = vector.shape_cast %93 : vector<8x8x128xbf16> to vector<64x128xbf16>
    %c0_80 = arith.constant 0 : index
    %c0_81 = arith.constant 0 : index
    %95 = vector.load %arg5[%c0_80, %c0_81] : memref<128x128xbf16, #tpu.memory_space<vmem>>, vector<128x128xbf16>
    %cst_82 = arith.constant dense<0.000000e+00> : vector<64x128xf32>
    %96 = tpu.matmul %94, %95, %cst_82 {dimension_numbers = #tpu.dot_dimension_numbers<[1], [0], [0], [1], [0, 0, 1, 1], [], []>} : vector<64x128xbf16>, vector<128x128xbf16>, vector<64x128xf32> -> vector<64x128xf32>
    %c0_83 = arith.constant 0 : index
    %c0_84 = arith.constant 0 : index
    %c0_85 = arith.constant 0 : index
    %97 = vector.load %arg7[%c0_83, %c0_84, %c0_85] : memref<1x64x128xf32, #tpu.memory_space<vmem>>, vector<1x64x128xf32>
    %98 = vector.shape_cast %97 : vector<1x64x128xf32> to vector<64x128xf32>
    %99 = vector.shape_cast %96 : vector<64x128xf32> to vector<1x64x128xf32>
    tpu.vector_store %arg7[%c0_83, %c0_84, %c0_85], %99 {strides = array<i32>} : memref<1x64x128xf32, #tpu.memory_space<vmem>>, vector<1x64x128xf32>,
    %cst_86 = arith.constant dense<0.000000e+00> : vector<128xf32>
    %100 = vector.multi_reduction <add>, %96, %cst_86 [0] : vector<64x128xf32> to vector<128xf32>
    %101 = vector.shape_cast %100 : vector<128xf32> to vector<1x128xf32>
    %102 = arith.mulf %96, %96 : vector<64x128xf32>
    %cst_87 = arith.constant dense<0.000000e+00> : vector<128xf32>
    %103 = vector.multi_reduction <add>, %102, %cst_87 [0] : vector<64x128xf32> to vector<128xf32>
    %104 = vector.shape_cast %103 : vector<128xf32> to vector<1x128xf32>
    %105 = tpu.concatenate %101, %104 in 0 : vector<1x128xf32>, vector<1x128xf32> -> vector<2x128xf32>
    %c0_88 = arith.constant 0 : index
    %c0_89 = arith.constant 0 : index
    %c0_90 = arith.constant 0 : index
    %106 = vector.load %arg9[%c0_88, %c0_89, %c0_90] : memref<1x2x128xf32, #tpu.memory_space<vmem>>, vector<1x2x128xf32>
    %107 = vector.shape_cast %106 : vector<1x2x128xf32> to vector<2x128xf32>
    %108 = vector.shape_cast %105 : vector<2x128xf32> to vector<1x2x128xf32>
    tpu.vector_store %arg9[%c0_88, %c0_89, %c0_90], %108 {strides = array<i32>} : memref<1x2x128xf32, #tpu.memory_space<vmem>>, vector<1x2x128xf32>,
    return
  }
  func.func @transform_0(%arg0: i32) -> (i32, i32, i32, i32) {
    %c0_i32 = arith.constant 0 : i32
    %c0_i32_0 = arith.constant 0 : i32
    %c0_i32_1 = arith.constant 0 : i32
    %c0_i32_2 = arith.constant 0 : i32
    return %arg0, %c0_i32, %c0_i32_0, %c0_i32_1 : i32, i32, i32, i32
  }
  func.func @transform_1(%arg0: i32) -> (i32, i32) {
    %c0_i32 = arith.constant 0 : i32
    %c0_i32_0 = arith.constant 0 : i32
    %c0_i32_1 = arith.constant 0 : i32
    return %c0_i32, %c0_i32_0 : i32, i32
  }
  func.func @transform_2(%arg0: i32) -> (i32, i32, i32) {
    %c0_i32 = arith.constant 0 : i32
    %c0_i32_0 = arith.constant 0 : i32
    %c0_i32_1 = arith.constant 0 : i32
    %c0_i32_2 = arith.constant 0 : i32
    return %c0_i32, %c0_i32_0, %c0_i32_1 : i32, i32, i32
  }
  func.func @transform_3(%arg0: i32) -> (i32, i32, i32, i32) {
    %c0_i32 = arith.constant 0 : i32
    %c0_i32_0 = arith.constant 0 : i32
    %c0_i32_1 = arith.constant 0 : i32
    %c0_i32_2 = arith.constant 0 : i32
    return %arg0, %c0_i32, %c0_i32_0, %c0_i32_1 : i32, i32, i32, i32
  }
  func.func @transform_4(%arg0: i32) -> (i32, i32) {
    %c0_i32 = arith.constant 0 : i32
    %c0_i32_0 = arith.constant 0 : i32
    %c0_i32_1 = arith.constant 0 : i32
    return %c0_i32, %c0_i32_0 : i32, i32
  }
  func.func @transform_5(%arg0: i32) -> (i32, i32, i32) {
    %c0_i32 = arith.constant 0 : i32
    %c0_i32_0 = arith.constant 0 : i32
    %c0_i32_1 = arith.constant 0 : i32
    return %arg0, %c0_i32, %c0_i32_0 : i32, i32, i32
  }
  func.func @transform_6(%arg0: i32) -> (i32, i32, i32) {
    %c0_i32 = arith.constant 0 : i32
    %c0_i32_0 = arith.constant 0 : i32
    %c0_i32_1 = arith.constant 0 : i32
    return %arg0, %c0_i32, %c0_i32_0 : i32, i32, i32
  }
  func.func @transform_7(%arg0: i32) -> (i32, i32, i32) {
    %c0_i32 = arith.constant 0 : i32
    %c0_i32_0 = arith.constant 0 : i32
    %c0_i32_1 = arith.constant 0 : i32
    return %arg0, %c0_i32, %c0_i32_0 : i32, i32, i32
  }
  func.func @transform_8(%arg0: i32) -> (i32, i32, i32) {
    %c0_i32 = arith.constant 0 : i32
    %c0_i32_0 = arith.constant 0 : i32
    %c0_i32_1 = arith.constant 0 : i32
    return %arg0, %c0_i32, %c0_i32_0 : i32, i32, i32
  }
}

module attributes {stable_mosaic.version = 11 : i64} {
  func.func @_finalize_kernel(%arg0: i32, %arg1: memref<1x64x128xf32, #tpu.memory_space<vmem>>, %arg2: memref<1x64x128xf32, #tpu.memory_space<vmem>>, %arg3: memref<2x128xf32, #tpu.memory_space<vmem>>, %arg4: memref<2x128xf32, #tpu.memory_space<vmem>>, %arg5: memref<1x64x128xf32, #tpu.memory_space<vmem>>) attributes {dimension_semantics = [#tpu.dimension_semantics<parallel>], iteration_bounds = array<i64: 2>, scalar_prefetch = 0 : i64, scratch_operands = 0 : i64, tpu.core_type = #tpu.core_type<tc>, window_params = [{transform_indices = @transform_0, window_bounds = array<i64: 1, 64, 128>}, {transform_indices = @transform_1, window_bounds = array<i64: 1, 64, 128>}, {pipeline_mode = #tpu.pipeline_mode<synchronous>, transform_indices = @transform_2, window_bounds = array<i64: 2, 128>}, {pipeline_mode = #tpu.pipeline_mode<synchronous>, transform_indices = @transform_3, window_bounds = array<i64: 2, 128>}, {transform_indices = @transform_4, window_bounds = array<i64: 1, 64, 128>}]} {
    %c0 = arith.constant 0 : index
    %c0_0 = arith.constant 0 : index
    %0 = vector.load %arg3[%c0, %c0_0] : memref<2x128xf32, #tpu.memory_space<vmem>>, vector<2x128xf32>
    %c0_1 = arith.constant 0 : index
    %c0_2 = arith.constant 0 : index
    %1 = vector.load %arg4[%c0_1, %c0_2] : memref<2x128xf32, #tpu.memory_space<vmem>>, vector<2x128xf32>
    %c0_3 = arith.constant 0 : index
    %c0_4 = arith.constant 0 : index
    %c0_5 = arith.constant 0 : index
    %2 = vector.load %arg1[%c0_3, %c0_4, %c0_5] : memref<1x64x128xf32, #tpu.memory_space<vmem>>, vector<1x64x128xf32>
    %3 = vector.shape_cast %2 : vector<1x64x128xf32> to vector<64x128xf32>
    %4 = vector.extract_strided_slice %0 {offsets = [0, 0], sizes = [1, 128], strides = [1, 1]} : vector<2x128xf32> to vector<1x128xf32>
    %5 = vector.broadcast %4 : vector<1x128xf32> to vector<64x128xf32>
    %6 = arith.mulf %3, %5 : vector<64x128xf32>
    %7 = vector.extract_strided_slice %0 {offsets = [1, 0], sizes = [1, 128], strides = [1, 1]} : vector<2x128xf32> to vector<1x128xf32>
    %8 = vector.broadcast %7 : vector<1x128xf32> to vector<64x128xf32>
    %9 = arith.addf %6, %8 : vector<64x128xf32>
    %c0_6 = arith.constant 0 : index
    %c0_7 = arith.constant 0 : index
    %c0_8 = arith.constant 0 : index
    %10 = vector.load %arg2[%c0_6, %c0_7, %c0_8] : memref<1x64x128xf32, #tpu.memory_space<vmem>>, vector<1x64x128xf32>
    %11 = vector.shape_cast %10 : vector<1x64x128xf32> to vector<64x128xf32>
    %12 = vector.extract_strided_slice %1 {offsets = [0, 0], sizes = [1, 128], strides = [1, 1]} : vector<2x128xf32> to vector<1x128xf32>
    %13 = vector.broadcast %12 : vector<1x128xf32> to vector<64x128xf32>
    %14 = arith.mulf %11, %13 : vector<64x128xf32>
    %15 = vector.extract_strided_slice %1 {offsets = [1, 0], sizes = [1, 128], strides = [1, 1]} : vector<2x128xf32> to vector<1x128xf32>
    %16 = vector.broadcast %15 : vector<1x128xf32> to vector<64x128xf32>
    %17 = arith.addf %14, %16 : vector<64x128xf32>
    %18 = arith.addf %9, %17 : vector<64x128xf32>
    %cst = arith.constant 0.000000e+00 : f32
    %19 = vector.broadcast %cst : f32 to vector<64x128xf32>
    %20 = arith.maximumf %18, %19 : vector<64x128xf32>
    %c0_9 = arith.constant 0 : index
    %c0_10 = arith.constant 0 : index
    %c0_11 = arith.constant 0 : index
    %21 = vector.load %arg5[%c0_9, %c0_10, %c0_11] : memref<1x64x128xf32, #tpu.memory_space<vmem>>, vector<1x64x128xf32>
    %22 = vector.shape_cast %21 : vector<1x64x128xf32> to vector<64x128xf32>
    %23 = vector.shape_cast %20 : vector<64x128xf32> to vector<1x64x128xf32>
    tpu.vector_store %arg5[%c0_9, %c0_10, %c0_11], %23 {strides = array<i32>} : memref<1x64x128xf32, #tpu.memory_space<vmem>>, vector<1x64x128xf32>,
    return
  }
  func.func @transform_0(%arg0: i32) -> (i32, i32, i32) {
    %c0_i32 = arith.constant 0 : i32
    %c0_i32_0 = arith.constant 0 : i32
    %c0_i32_1 = arith.constant 0 : i32
    return %arg0, %c0_i32, %c0_i32_0 : i32, i32, i32
  }
  func.func @transform_1(%arg0: i32) -> (i32, i32, i32) {
    %c0_i32 = arith.constant 0 : i32
    %c0_i32_0 = arith.constant 0 : i32
    %c0_i32_1 = arith.constant 0 : i32
    return %arg0, %c0_i32, %c0_i32_0 : i32, i32, i32
  }
  func.func @transform_2(%arg0: i32) -> (i32, i32) {
    %c0_i32 = arith.constant 0 : i32
    %c0_i32_0 = arith.constant 0 : i32
    %c0_i32_1 = arith.constant 0 : i32
    return %c0_i32, %c0_i32_0 : i32, i32
  }
  func.func @transform_3(%arg0: i32) -> (i32, i32) {
    %c0_i32 = arith.constant 0 : i32
    %c0_i32_0 = arith.constant 0 : i32
    %c0_i32_1 = arith.constant 0 : i32
    return %c0_i32, %c0_i32_0 : i32, i32
  }
  func.func @transform_4(%arg0: i32) -> (i32, i32, i32) {
    %c0_i32 = arith.constant 0 : i32
    %c0_i32_0 = arith.constant 0 : i32
    %c0_i32_1 = arith.constant 0 : i32
    return %arg0, %c0_i32, %c0_i32_0 : i32, i32, i32
  }
}

</mosaic_0001>

<llo_original>
// kernel: basic_block_forward.5
$region0: #{basic_block_forward.5}
  #allocation0 [shape = 'u32[]', space=smem, size = 0x4, offset = 0x4, fixed_abs, tag = 'smem constant byte address 0x4 - core index']
  #allocation1 [shape = 'u32[144,128]{1,0:T(1,128)}', space=vmem, size = 0x12000, scoped, tag = 'internal scratch']
  %s0 = inlined_call_operand.vmem [shape: f32[2,64,128], index: 0, kind: input, shape index: {}]
  %s1 = inlined_call_operand.vmem [shape: f32[2,64,128], index: 1, kind: input, shape index: {}]
  %s2 = inlined_call_operand.vmem [shape: f32[2,128], index: 2, kind: input, shape index: {}]
  %s3 = inlined_call_operand.vmem [shape: f32[2,128], index: 3, kind: input, shape index: {}]
  %s4 = inlined_call_operand.vmem [shape: f32[2,64,128], index: 4, kind: output, shape index: {}]
  %s5 = sld [smem:[#allocation0]]
  $region49: #{basic_block_forward.5} parent=0
    _
  %s7 = ssub.s32 1, %s5
  %s8 = scalar_select 0, %s7, %s5
  loop: start=0, step=1, limit=4
  $region2: #{basic_block_forward.5} parent=0 // loop_pre_header
    _
  $region3: #{basic_block_forward.5} parent=0 // loop_header
    %s10 = sphi 0, %s14
    %p11 = scmp.ge.s32.totalorder %s10, 4
    %s20 = sphi 0, %s22
    %s23 = sphi 0, %s20
    %s24 = sphi 0, %s23
    %s40 = sphi 0, %s24
    %s46 = sphi 0, %s48
    %s49 = sphi 0, %s46
    %s50 = sphi 0, %s49
    %s66 = sphi 0, %s50
    %s70 = sphi 0, %s70
    %s72 = sphi 0, %s70
    %s73 = sphi 0, %s72
    %s87 = sphi 0, %s73
    %s91 = sphi 0, %s91
    %s93 = sphi 0, %s91
    %s94 = sphi 0, %s93
    %s108 = sphi 0, %s94
    %s114 = sphi 0, %s116
    %s117 = sphi 0, %s114
    %s118 = sphi 0, %s117
    %s134 = sphi 0, %s118
  $region4: #{basic_block_forward.5} parent=0 // loop_header_branch
    %13 = sbr.rel (%p11) target = $region8
  $region5: #{basic_block_forward.5} parent=0 // loop_body
    %s15 = ssub.s32 %s10, 1
    %s16 = ssub.s32 %s10, 2
    %s17 = sadd.s32 %s10, 1
    %s18 = ssub.s32 %s10, %s17
    %p19 = scmp.eq.s32.totalorder %s18, 0
    %s21 = sadd.s32 %s20, 1
    %s22 = scalar_select %p19, %s20, %s21
    %p25 = pneg %p19
    %p26 = scmp.eq.s32.totalorder %s10, 1
    %p27 = por %p25, %p26
    %p28 = scmp.ne.s32.totalorder %s20, %s23
    %p29 = scmp.eq.s32.totalorder %s10, 0
    %p30 = por %p28, %p29
    %p31 = scmp.ne.s32.totalorder %s20, %s23
    %p32 = scmp.eq.s32.totalorder %s15, 1
    %p33 = por %p31, %p32
    %p34 = scmp.ne.s32.totalorder %s23, %s24
    %p35 = scmp.eq.s32.totalorder %s15, 0
    %p36 = por %p34, %p35
    %p37 = scmp.ne.s32.totalorder %s23, %s24
    %p38 = scmp.eq.s32.totalorder %s16, 1
    %p39 = por %p37, %p38
    %p41 = scmp.ne.s32.totalorder %s24, %s40
    %p42 = scmp.eq.s32.totalorder %s16, 0
    %p43 = por %p41, %p42
    %s44 = ssub.s32 %s10, %s17
    %p45 = scmp.eq.s32.totalorder %s44, 0
    %s47 = sadd.s32 %s46, 1
    %s48 = scalar_select %p45, %s46, %s47
    %p51 = pneg %p45
    %p52 = scmp.eq.s32.totalorder %s10, 1
    %p53 = por %p51, %p52
    %p54 = scmp.ne.s32.totalorder %s46, %s49
    %p55 = scmp.eq.s32.totalorder %s10, 0
    %p56 = por %p54, %p55
    %p57 = scmp.ne.s32.totalorder %s46, %s49
    %p58 = scmp.eq.s32.totalorder %s15, 1
    %p59 = por %p57, %p58
    %p60 = scmp.ne.s32.totalorder %s49, %s50
    %p61 = scmp.eq.s32.totalorder %s15, 0
    %p62 = por %p60, %p61
    %p63 = scmp.ne.s32.totalorder %s49, %s50
    %p64 = scmp.eq.s32.totalorder %s16, 1
    %p65 = por %p63, %p64
    %p67 = scmp.ne.s32.totalorder %s50, %s66
    %p68 = scmp.eq.s32.totalorder %s16, 0
    %p69 = por %p67, %p68
    %s71 = sadd.s32 %s70, 1
    %p74 = scmp.eq.s32.totalorder %s10, 1
    %p75 = scmp.ne.s32.totalorder %s70, %s72
    %p76 = scmp.eq.s32.totalorder %s10, 0
    %p77 = por %p75, %p76
    %p78 = scmp.ne.s32.totalorder %s70, %s72
    %p79 = scmp.eq.s32.totalorder %s15, 1
    %p80 = por %p78, %p79
    %p81 = scmp.ne.s32.totalorder %s72, %s73
    %p82 = scmp.eq.s32.totalorder %s15, 0
    %p83 = por %p81, %p82
    %p84 = scmp.ne.s32.totalorder %s72, %s73
    %p85 = scmp.eq.s32.totalorder %s16, 1
    %p86 = por %p84, %p85
    %p88 = scmp.ne.s32.totalorder %s73, %s87
    %p89 = scmp.eq.s32.totalorder %s16, 0
    %p90 = por %p88, %p89
    %s92 = sadd.s32 %s91, 1
    %p95 = scmp.eq.s32.totalorder %s10, 1
    %p96 = scmp.ne.s32.totalorder %s91, %s93
    %p97 = scmp.eq.s32.totalorder %s10, 0
    %p98 = por %p96, %p97
    %p99 = scmp.ne.s32.totalorder %s91, %s93
    %p100 = scmp.eq.s32.totalorder %s15, 1
    %p101 = por %p99, %p100
    %p102 = scmp.ne.s32.totalorder %s93, %s94
    %p103 = scmp.eq.s32.totalorder %s15, 0
    %p104 = por %p102, %p103
    %p105 = scmp.ne.s32.totalorder %s93, %s94
    %p106 = scmp.eq.s32.totalorder %s16, 1
    %p107 = por %p105, %p106
    %p109 = scmp.ne.s32.totalorder %s94, %s108
    %p110 = scmp.eq.s32.totalorder %s16, 0
    %p111 = por %p109, %p110
    %s112 = ssub.s32 %s10, %s17
    %p113 = scmp.eq.s32.totalorder %s112, 0
    %s115 = sadd.s32 %s114, 1
    %s116 = scalar_select %p113, %s114, %s115
    %p119 = pneg %p113
    %p120 = scmp.eq.s32.totalorder %s10, 1
    %p121 = por %p119, %p120
    %p122 = scmp.ne.s32.totalorder %s114, %s117
    %p123 = scmp.eq.s32.totalorder %s10, 0
    %p124 = por %p122, %p123
    %p125 = scmp.ne.s32.totalorder %s114, %s117
    %p126 = scmp.eq.s32.totalorder %s15, 1
    %p127 = por %p125, %p126
    %p128 = scmp.ne.s32.totalorder %s117, %s118
    %p129 = scmp.eq.s32.totalorder %s15, 0
    %p130 = por %p128, %p129
    %p131 = scmp.ne.s32.totalorder %s117, %s118
    %p132 = scmp.eq.s32.totalorder %s16, 1
    %p133 = por %p131, %p132
    %p135 = scmp.ne.s32.totalorder %s118, %s134
    %p136 = scmp.eq.s32.totalorder %s16, 0
    %p137 = por %p135, %p136
    %p138 = scmp.le.s32.totalorder 1, %s10
    %p139 = scmp.lt.s32.totalorder %s10, 3
    %p140 = pnand %p138, %p139
    %p141 = pneg %p140
    // Predicated region
    $region9: #{basic_block_forward.5} parent=5 // pred_check
      _
    $region10: #{basic_block_forward.5} parent=5 // pred_check_branch
      %143 = sbr.rel (%p140) target = $region12
    $region11: #{basic_block_forward.5} parent=5 // pred_region
      %s144 = ssub.s32 %s10, 1
      // Predicated region
      $region13: #{basic_block_forward.5} parent=11 // pred_check
        %p145 = pneg %p83
      $region14: #{basic_block_forward.5} parent=11 // pred_check_branch
        %147 = sbr.rel (%p145) target = $region16
      $region15: #{basic_block_forward.5} parent=11 // pred_region
        _
      $region16: #{basic_block_forward.5} parent=11 // pred_fallthru
        _
      // Predicated region
      $region17: #{basic_block_forward.5} parent=11 // pred_check
        %p148 = pneg %p104
      $region18: #{basic_block_forward.5} parent=11 // pred_check_branch
        %150 = sbr.rel (%p148) target = $region20
      $region19: #{basic_block_forward.5} parent=11 // pred_region
        _
      $region20: #{basic_block_forward.5} parent=11 // pred_fallthru
        _
    $region12: #{basic_block_forward.5} parent=5 // pred_fallthru
      _
    %p151 = scmp.lt.s32.totalorder %s10, 2
    // Predicated region
    $region21: #{basic_block_forward.5} parent=5 // pred_check
      %p152 = pneg %p151
    $region22: #{basic_block_forward.5} parent=5 // pred_check_branch
      %154 = sbr.rel (%p152) target = $region24
    $region23: #{basic_block_forward.5} parent=5 // pred_region
      // Predicated region
      $region25: #{basic_block_forward.5} parent=23 // pred_check
        %p155 = pneg %p30
      $region26: #{basic_block_forward.5} parent=23 // pred_check_branch
        %157 = sbr.rel (%p155) target = $region28
      $region27: #{basic_block_forward.5} parent=23 // pred_region
        %p158 = scmp.lt.s32.totalorder %s10, 1
        %s159 = scalar_select %p158, %s10, 1
        %s160 = smul.addr %s159, 8
        %s161 = smul.addr %s160, 8
        %s162 = scalar_lea.vmem %s0, %s161
      $region28: #{basic_block_forward.5} parent=23 // pred_fallthru
        _
      // Predicated region
      $region29: #{basic_block_forward.5} parent=23 // pred_check
        %p163 = pneg %p56
      $region30: #{basic_block_forward.5} parent=23 // pred_check_branch
        %165 = sbr.rel (%p163) target = $region32
      $region31: #{basic_block_forward.5} parent=23 // pred_region
        %p166 = scmp.lt.s32.totalorder %s10, 1
        %s167 = scalar_select %p166, %s10, 1
        %s168 = smul.addr %s167, 8
        %s169 = smul.addr %s168, 8
        %s170 = scalar_lea.vmem %s1, %s169
      $region32: #{basic_block_forward.5} parent=23 // pred_fallthru
        _
    $region24: #{basic_block_forward.5} parent=5 // pred_fallthru
      _
    %p171 = scmp.le.s32.totalorder 1, %s10
    %p172 = scmp.lt.s32.totalorder %s10, 3
    %p173 = pnand %p171, %p172
    %p174 = pneg %p173
    // Predicated region
    $region33: #{basic_block_forward.5} parent=5 // pred_check
      _
    $region34: #{basic_block_forward.5} parent=5 // pred_check_branch
      %176 = sbr.rel (%p173) target = $region36
    $region35: #{basic_block_forward.5} parent=5 // pred_region
      %s177 = ssub.s32 %s10, 1
      %p178 = scmp.lt.s32.totalorder %s15, 1
      %s179 = scalar_select %p178, %s15, 1
      %s180 = smul.addr %s179, 8
      %s181 = smul.addr %s180, 8
      %s182 = scalar_lea.vmem %s0, %s181
      %p183 = pneg %p36
      %p184 = pneg %p33
      %p185 = scmp.lt.s32.totalorder %s15, 1
      %s186 = scalar_select %p185, %s15, 1
      %s187 = smul.addr %s186, 8
      %s188 = smul.addr %s187, 8
      %s189 = scalar_lea.vmem %s1, %s188
      %p190 = pneg %p62
      %p191 = pneg %p59
      %p192 = pneg %p83
      %p193 = pneg %p80
      %p194 = pneg %p104
      %p195 = pneg %p101
      %p196 = pneg %p130
      %p197 = pneg %p127
      %p198 = scmp.lt.s32.totalorder %s15, 1
      %s199 = scalar_select %p198, %s15, 1
      %s200 = smul.addr %s199, 8
      %s201 = smul.addr %s200, 8
      %s202 = scalar_lea.vmem %s4, %s201
      %p203 = scmp.lt.s32.totalorder %s15, 1
      %s204 = scalar_select %p203, %s15, 1
      %s205 = smul.addr %s204, 8
      %s206 = smul.addr %s205, 8
      %s207 = scalar_lea.vmem %s0, %s206
      %p208 = scmp.lt.s32.totalorder %s15, 1
      %s209 = scalar_select %p208, %s15, 1
      %s210 = smul.addr %s209, 8
      %s211 = smul.addr %s210, 8
      %s212 = scalar_lea.vmem %s1, %s211
      %p213 = scmp.lt.s32.totalorder %s15, 1
      %s214 = scalar_select %p213, %s15, 1
      %s215 = smul.addr %s214, 8
      %s216 = smul.addr %s215, 8
      %s217 = scalar_lea.vmem %s4, %s216
      %v218 = vld [vmem:[%s2] sm:$0x3]
      %v219 = vld [vmem:[%s3] sm:$0x3]
      %v220 = vld [vmem:[%s207] sm:$0xff]
      %v221 = vld [vmem:[%s207 + $0x8] sm:$0xff]
      %v222 = vld [vmem:[%s207 + $0x10] sm:$0xff]
      %v223 = vld [vmem:[%s207 + $0x18] sm:$0xff]
      %v224 = vld [vmem:[%s207 + $0x20] sm:$0xff]
      %v225 = vld [vmem:[%s207 + $0x28] sm:$0xff]
      %v226 = vld [vmem:[%s207 + $0x30] sm:$0xff]
      %v227 = vld [vmem:[%s207 + $0x38] sm:$0xff]
      %v228 = vlaneseq
      %v229 = vshrl.u32 %v228, 7
      %v230 = vsub.s32 0, %v229
      %v231 = vrot.slane %v218, %v230
      %v232 = vmul.f32 %v220, %v231
      %v233 = vmul.f32 %v221, %v231
      %v234 = vmul.f32 %v222, %v231
      %v235 = vmul.f32 %v223, %v231
      %v236 = vmul.f32 %v224, %v231
      %v237 = vmul.f32 %v225, %v231
      %v238 = vmul.f32 %v226, %v231
      %v239 = vmul.f32 %v227, %v231
      %v240 = vlaneseq
      %v241 = vshrl.u32 %v240, 7
      %v242 = vsub.s32 1, %v241
      %v243 = vrot.slane %v218, %v242
      %v244 = vadd.f32 %v232, %v243
      %v245 = vadd.f32 %v233, %v243
      %v246 = vadd.f32 %v234, %v243
      %v247 = vadd.f32 %v235, %v243
      %v248 = vadd.f32 %v236, %v243
      %v249 = vadd.f32 %v237, %v243
      %v250 = vadd.f32 %v238, %v243
      %v251 = vadd.f32 %v239, %v243
      %v252 = vld [vmem:[%s212] sm:$0xff]
      %v253 = vld [vmem:[%s212 + $0x8] sm:$0xff]
      %v254 = vld [vmem:[%s212 + $0x10] sm:$0xff]
      %v255 = vld [vmem:[%s212 + $0x18] sm:$0xff]
      %v256 = vld [vmem:[%s212 + $0x20] sm:$0xff]
      %v257 = vld [vmem:[%s212 + $0x28] sm:$0xff]
      %v258 = vld [vmem:[%s212 + $0x30] sm:$0xff]
      %v259 = vld [vmem:[%s212 + $0x38] sm:$0xff]
      %v260 = vlaneseq
      %v261 = vshrl.u32 %v260, 7
      %v262 = vsub.s32 0, %v261
      %v263 = vrot.slane %v219, %v262
      %v264 = vmul.f32 %v252, %v263
      %v265 = vmul.f32 %v253, %v263
      %v266 = vmul.f32 %v254, %v263
      %v267 = vmul.f32 %v255, %v263
      %v268 = vmul.f32 %v256, %v263
      %v269 = vmul.f32 %v257, %v263
      %v270 = vmul.f32 %v258, %v263
      %v271 = vmul.f32 %v259, %v263
      %v272 = vlaneseq
      %v273 = vshrl.u32 %v272, 7
      %v274 = vsub.s32 1, %v273
      %v275 = vrot.slane %v219, %v274
      %v276 = vadd.f32 %v264, %v275
      %v277 = vadd.f32 %v265, %v275
      %v278 = vadd.f32 %v266, %v275
      %v279 = vadd.f32 %v267, %v275
      %v280 = vadd.f32 %v268, %v275
      %v281 = vadd.f32 %v269, %v275
      %v282 = vadd.f32 %v270, %v275
      %v283 = vadd.f32 %v271, %v275
      %v284 = vadd.f32 %v244, %v276
      %v285 = vadd.f32 %v245, %v277
      %v286 = vadd.f32 %v246, %v278
      %v287 = vadd.f32 %v247, %v279
      %v288 = vadd.f32 %v248, %v280
      %v289 = vadd.f32 %v249, %v281
      %v290 = vadd.f32 %v250, %v282
      %v291 = vadd.f32 %v251, %v283
      %v292 = vmax.f32 %v284, 0.0
      %v293 = vmax.f32 %v285, 0.0
      %v294 = vmax.f32 %v286, 0.0
      %v295 = vmax.f32 %v287, 0.0
      %v296 = vmax.f32 %v288, 0.0
      %v297 = vmax.f32 %v289, 0.0
      %v298 = vmax.f32 %v290, 0.0
      %v299 = vmax.f32 %v291, 0.0
      %300 = vst [vmem:[%s217] sm:$0xff] %v292
      %301 = vst [vmem:[%s217 + $0x8] sm:$0xff] %v293
      %302 = vst [vmem:[%s217 + $0x10] sm:$0xff] %v294
      %303 = vst [vmem:[%s217 + $0x18] sm:$0xff] %v295
      %304 = vst [vmem:[%s217 + $0x20] sm:$0xff] %v296
      %305 = vst [vmem:[%s217 + $0x28] sm:$0xff] %v297
      %306 = vst [vmem:[%s217 + $0x30] sm:$0xff] %v298
      %307 = vst [vmem:[%s217 + $0x38] sm:$0xff] %v299
      %p308 = scmp.lt.s32.totalorder %s15, 1
      %s309 = scalar_select %p308, %s15, 1
      %s310 = smul.addr %s309, 8
      %s311 = smul.addr %s310, 8
      %s312 = scalar_lea.vmem %s4, %s311
      // Predicated region
      $region37: #{basic_block_forward.5} parent=35 // pred_check
        %p313 = pneg %p127
      $region38: #{basic_block_forward.5} parent=35 // pred_check_branch
        %315 = sbr.rel (%p313) target = $region40
      $region39: #{basic_block_forward.5} parent=35 // pred_region
        _
      $region40: #{basic_block_forward.5} parent=35 // pred_fallthru
        _
    $region36: #{basic_block_forward.5} parent=5 // pred_fallthru
      _
    %p316 = scmp.le.s32.totalorder 2, %s10
    // Predicated region
    $region41: #{basic_block_forward.5} parent=5 // pred_check
      %p317 = pneg %p316
    $region42: #{basic_block_forward.5} parent=5 // pred_check_branch
      %319 = sbr.rel (%p317) target = $region44
    $region43: #{basic_block_forward.5} parent=5 // pred_region
      %s320 = ssub.s32 %s10, 2
      // Predicated region
      $region45: #{basic_block_forward.5} parent=43 // pred_check
        %p321 = pneg %p133
      $region46: #{basic_block_forward.5} parent=43 // pred_check_branch
        %323 = sbr.rel (%p321) target = $region48
      $region47: #{basic_block_forward.5} parent=43 // pred_region
        %p324 = scmp.lt.s32.totalorder %s16, 1
        %s325 = scalar_select %p324, %s16, 1
        %s326 = smul.addr %s325, 8
        %s327 = smul.addr %s326, 8
        %s328 = scalar_lea.vmem %s4, %s327
      $region48: #{basic_block_forward.5} parent=43 // pred_fallthru
        _
    $region44: #{basic_block_forward.5} parent=5 // pred_fallthru
      _
  $region6: #{basic_block_forward.5} parent=0 // loop_footer
    %s14 = sadd.s32 1, %s10
  $region7: #{basic_block_forward.5} parent=0 // loop_footer_branch
    %9 = sbr.rel target = $region3
  $region8: #{basic_block_forward.5} parent=0 // loop_exit
    _

// kernel: basic_block_forward.3
$region0: #{basic_block_forward.3}
  #allocation0 [shape = 'u32[]', space=smem, size = 0x4, offset = 0x4, fixed_abs, tag = 'smem constant byte address 0x4 - core index']
  #allocation1 [shape = 'u32[144,128]{1,0:T(1,128)}', space=vmem, size = 0x12000, scoped, tag = 'internal scratch']
  %s0 = inlined_call_operand.vmem [shape: bf16[8,9,9,128], index: 0, kind: input, shape index: {}]
  %s1 = inlined_call_operand.vmem [shape: bf16[9,128,128], index: 1, kind: input, shape index: {}]
  %s2 = inlined_call_operand.vmem [shape: f32[2,8,8,128], index: 2, kind: output, shape index: {0}]
  %s3 = inlined_call_operand.vmem [shape: f32[2,2,128], index: 3, kind: output, shape index: {1}]
  %4 = xla_tuple %s2, %s3
  %s5 = sld [smem:[#allocation0]]
  $region49: #{basic_block_forward.3} parent=0
    _
  %s7 = ssub.s32 1, %s5
  %s8 = scalar_select 0, %s7, %s5
  loop: start=0, step=1, limit=4
  $region2: #{basic_block_forward.3} parent=0 // loop_pre_header
    _
  $region3: #{basic_block_forward.3} parent=0 // loop_header
    %s10 = sphi 0, %s14
    %p11 = scmp.ge.s32.totalorder %s10, 4
    %s20 = sphi 0, %s22
    %s23 = sphi 0, %s20
    %s24 = sphi 0, %s23
    %s40 = sphi 0, %s24
    %s44 = sphi 0, %s44
    %s46 = sphi 0, %s44
    %s47 = sphi 0, %s46
    %s61 = sphi 0, %s47
    %s67 = sphi 0, %s69
    %s70 = sphi 0, %s67
    %s71 = sphi 0, %s70
    %s87 = sphi 0, %s71
    %s93 = sphi 0, %s95
    %s96 = sphi 0, %s93
    %s97 = sphi 0, %s96
    %s113 = sphi 0, %s97
  $region4: #{basic_block_forward.3} parent=0 // loop_header_branch
    %13 = sbr.rel (%p11) target = $region8
  $region5: #{basic_block_forward.3} parent=0 // loop_body
    %s15 = ssub.s32 %s10, 1
    %s16 = ssub.s32 %s10, 2
    %s17 = sadd.s32 %s10, 1
    %s18 = ssub.s32 %s10, %s17
    %p19 = scmp.eq.s32.totalorder %s18, 0
    %s21 = sadd.s32 %s20, 1
    %s22 = scalar_select %p19, %s20, %s21
    %p25 = pneg %p19
    %p26 = scmp.eq.s32.totalorder %s10, 1
    %p27 = por %p25, %p26
    %p28 = scmp.ne.s32.totalorder %s20, %s23
    %p29 = scmp.eq.s32.totalorder %s10, 0
    %p30 = por %p28, %p29
    %p31 = scmp.ne.s32.totalorder %s20, %s23
    %p32 = scmp.eq.s32.totalorder %s15, 1
    %p33 = por %p31, %p32
    %p34 = scmp.ne.s32.totalorder %s23, %s24
    %p35 = scmp.eq.s32.totalorder %s15, 0
    %p36 = por %p34, %p35
    %p37 = scmp.ne.s32.totalorder %s23, %s24
    %p38 = scmp.eq.s32.totalorder %s16, 1
    %p39 = por %p37, %p38
    %p41 = scmp.ne.s32.totalorder %s24, %s40
    %p42 = scmp.eq.s32.totalorder %s16, 0
    %p43 = por %p41, %p42
    %s45 = sadd.s32 %s44, 1
    %p48 = scmp.eq.s32.totalorder %s10, 1
    %p49 = scmp.ne.s32.totalorder %s44, %s46
    %p50 = scmp.eq.s32.totalorder %s10, 0
    %p51 = por %p49, %p50
    %p52 = scmp.ne.s32.totalorder %s44, %s46
    %p53 = scmp.eq.s32.totalorder %s15, 1
    %p54 = por %p52, %p53
    %p55 = scmp.ne.s32.totalorder %s46, %s47
    %p56 = scmp.eq.s32.totalorder %s15, 0
    %p57 = por %p55, %p56
    %p58 = scmp.ne.s32.totalorder %s46, %s47
    %p59 = scmp.eq.s32.totalorder %s16, 1
    %p60 = por %p58, %p59
    %p62 = scmp.ne.s32.totalorder %s47, %s61
    %p63 = scmp.eq.s32.totalorder %s16, 0
    %p64 = por %p62, %p63
    %s65 = ssub.s32 %s10, %s17
    %p66 = scmp.eq.s32.totalorder %s65, 0
    %s68 = sadd.s32 %s67, 1
    %s69 = scalar_select %p66, %s67, %s68
    %p72 = pneg %p66
    %p73 = scmp.eq.s32.totalorder %s10, 1
    %p74 = por %p72, %p73
    %p75 = scmp.ne.s32.totalorder %s67, %s70
    %p76 = scmp.eq.s32.totalorder %s10, 0
    %p77 = por %p75, %p76
    %p78 = scmp.ne.s32.totalorder %s67, %s70
    %p79 = scmp.eq.s32.totalorder %s15, 1
    %p80 = por %p78, %p79
    %p81 = scmp.ne.s32.totalorder %s70, %s71
    %p82 = scmp.eq.s32.totalorder %s15, 0
    %p83 = por %p81, %p82
    %p84 = scmp.ne.s32.totalorder %s70, %s71
    %p85 = scmp.eq.s32.totalorder %s16, 1
    %p86 = por %p84, %p85
    %p88 = scmp.ne.s32.totalorder %s71, %s87
    %p89 = scmp.eq.s32.totalorder %s16, 0
    %p90 = por %p88, %p89
    %s91 = ssub.s32 %s10, %s17
    %p92 = scmp.eq.s32.totalorder %s91, 0
    %s94 = sadd.s32 %s93, 1
    %s95 = scalar_select %p92, %s93, %s94
    %p98 = pneg %p92
    %p99 = scmp.eq.s32.totalorder %s10, 1
    %p100 = por %p98, %p99
    %p101 = scmp.ne.s32.totalorder %s93, %s96
    %p102 = scmp.eq.s32.totalorder %s10, 0
    %p103 = por %p101, %p102
    %p104 = scmp.ne.s32.totalorder %s93, %s96
    %p105 = scmp.eq.s32.totalorder %s15, 1
    %p106 = por %p104, %p105
    %p107 = scmp.ne.s32.totalorder %s96, %s97
    %p108 = scmp.eq.s32.totalorder %s15, 0
    %p109 = por %p107, %p108
    %p110 = scmp.ne.s32.totalorder %s96, %s97
    %p111 = scmp.eq.s32.totalorder %s16, 1
    %p112 = por %p110, %p111
    %p114 = scmp.ne.s32.totalorder %s97, %s113
    %p115 = scmp.eq.s32.totalorder %s16, 0
    %p116 = por %p114, %p115
    %p117 = scmp.le.s32.totalorder 1, %s10
    %p118 = scmp.lt.s32.totalorder %s10, 3
    %p119 = pnand %p117, %p118
    %p120 = pneg %p119
    // Predicated region
    $region9: #{basic_block_forward.3} parent=5 // pred_check
      _
    $region10: #{basic_block_forward.3} parent=5 // pred_check_branch
      %122 = sbr.rel (%p119) target = $region12
    $region11: #{basic_block_forward.3} parent=5 // pred_region
      %s123 = ssub.s32 %s10, 1
      // Predicated region
      $region13: #{basic_block_forward.3} parent=11 // pred_check
        %p124 = pneg %p57
      $region14: #{basic_block_forward.3} parent=11 // pred_check_branch
        %126 = sbr.rel (%p124) target = $region16
      $region15: #{basic_block_forward.3} parent=11 // pred_region
        _
      $region16: #{basic_block_forward.3} parent=11 // pred_fallthru
        _
    $region12: #{basic_block_forward.3} parent=5 // pred_fallthru
      _
    %p127 = scmp.lt.s32.totalorder %s10, 2
    // Predicated region
    $region17: #{basic_block_forward.3} parent=5 // pred_check
      %p128 = pneg %p127
    $region18: #{basic_block_forward.3} parent=5 // pred_check_branch
      %130 = sbr.rel (%p128) target = $region20
    $region19: #{basic_block_forward.3} parent=5 // pred_region
      // Predicated region
      $region21: #{basic_block_forward.3} parent=19 // pred_check
        %p131 = pneg %p30
      $region22: #{basic_block_forward.3} parent=19 // pred_check_branch
        %133 = sbr.rel (%p131) target = $region24
      $region23: #{basic_block_forward.3} parent=19 // pred_region
        %s134 = smul.u32 4, %s10
        %p135 = scmp.lt.s32.totalorder %s134, 7
        %s136 = scalar_select %p135, %s134, 7
        %s137 = smul.addr %s136, 18
        %s138 = smul.addr %s137, 4
        %s139 = scalar_lea.vmem %s0, %s138
        %s140 = smul.u32 4, %s10
      $region24: #{basic_block_forward.3} parent=19 // pred_fallthru
        _
    $region20: #{basic_block_forward.3} parent=5 // pred_fallthru
      _
    %p141 = scmp.le.s32.totalorder 1, %s10
    %p142 = scmp.lt.s32.totalorder %s10, 3
    %p143 = pnand %p141, %p142
    %p144 = pneg %p143
    // Predicated region
    $region25: #{basic_block_forward.3} parent=5 // pred_check
      _
    $region26: #{basic_block_forward.3} parent=5 // pred_check_branch
      %146 = sbr.rel (%p143) target = $region28
    $region27: #{basic_block_forward.3} parent=5 // pred_region
      %s147 = ssub.s32 %s10, 1
      %s148 = smul.u32 4, %s15
      %p149 = scmp.lt.s32.totalorder %s148, 7
      %s150 = scalar_select %p149, %s148, 7
      %s151 = smul.addr %s150, 18
      %s152 = smul.addr %s151, 4
      %s153 = scalar_lea.vmem %s0, %s152
      %p154 = pneg %p36
      %p155 = pneg %p33
      %p156 = pneg %p57
      %p157 = pneg %p54
      %p158 = pneg %p83
      %p159 = pneg %p80
      %p160 = scmp.lt.s32.totalorder %s15, 1
      %s161 = scalar_select %p160, %s15, 1
      %s162 = smul.addr %s161, 8
      %s163 = smul.addr %s162, 8
      %s164 = scalar_lea.vmem %s2, %s163
      %p165 = pneg %p109
      %p166 = pneg %p106
      %p167 = scmp.lt.s32.totalorder %s15, 1
      %s168 = scalar_select %p167, %s15, 1
      %s169 = smul.addr %s168, 2
      %s170 = scalar_lea.vmem %s3, %s169
      %s171 = smul.u32 4, %s15
      %p172 = scmp.lt.s32.totalorder %s171, 7
      %s173 = scalar_select %p172, %s171, 7
      %s174 = smul.addr %s173, 18
      %s175 = smul.addr %s174, 4
      %s176 = scalar_lea.vmem %s0, %s175
      %s177 = smul.u32 4, %s15
      %p178 = scmp.lt.s32.totalorder %s15, 1
      %s179 = scalar_select %p178, %s15, 1
      %s180 = smul.addr %s179, 8
      %s181 = smul.addr %s180, 8
      %s182 = scalar_lea.vmem %s2, %s181
      %p183 = scmp.lt.s32.totalorder %s15, 1
      %s184 = scalar_select %p183, %s15, 1
      %s185 = smul.addr %s184, 2
      %s186 = scalar_lea.vmem %s3, %s185
      %v188 = vld [vmem:[%s176] sm:$0xf]
      %v189 = vld [vmem:[%s176 + $0x8] sm:$0xf]
      %v190 = vld [vmem:[%s176 + $0x10] sm:$0xf]
      %v191 = vld [vmem:[%s176 + $0x18] sm:$0xf]
      %v192 = vld [vmem:[%s176 + $0x20] sm:$0xf]
      %v193 = vld [vmem:[%s176 + $0x28] sm:$0xf]
      %v194 = vld [vmem:[%s176 + $0x30] sm:$0xf]
      %v195 = vld [vmem:[%s176 + $0x38] sm:$0xf]
      %v196 = vld [vmem:[%s1] sm:$0xf]
      %v197 = vld [vmem:[%s1 + $0x4] sm:$0xf]
      %v198 = vld [vmem:[%s1 + $0x8] sm:$0xf]
      %v199 = vld [vmem:[%s1 + $0xc] sm:$0xf]
      %v200 = vld [vmem:[%s1 + $0x10] sm:$0xf]
      %v201 = vld [vmem:[%s1 + $0x14] sm:$0xf]
      %v202 = vld [vmem:[%s1 + $0x18] sm:$0xf]
      %v203 = vld [vmem:[%s1 + $0x1c] sm:$0xf]
      %v204 = vld [vmem:[%s1 + $0x20] sm:$0xf]
      %v205 = vld [vmem:[%s1 + $0x24] sm:$0xf]
      %v206 = vld [vmem:[%s1 + $0x28] sm:$0xf]
      %v207 = vld [vmem:[%s1 + $0x2c] sm:$0xf]
      %v208 = vld [vmem:[%s1 + $0x30] sm:$0xf]
      %v209 = vld [vmem:[%s1 + $0x34] sm:$0xf]
      %v210 = vld [vmem:[%s1 + $0x38] sm:$0xf]
      %v211 = vld [vmem:[%s1 + $0x3c] sm:$0xf]
      %s212 = scalar_lea.vmem %s176, 72
      %v213 = vld [vmem:[%s212] sm:$0xf]
      %v214 = vld [vmem:[%s212 + $0x8] sm:$0xf]
      %v215 = vld [vmem:[%s212 + $0x10] sm:$0xf]
      %v216 = vld [vmem:[%s212 + $0x18] sm:$0xf]
      %v217 = vld [vmem:[%s212 + $0x20] sm:$0xf]
      %v218 = vld [vmem:[%s212 + $0x28] sm:$0xf]
      %v219 = vld [vmem:[%s212 + $0x30] sm:$0xf]
      %v220 = vld [vmem:[%s212 + $0x38] sm:$0xf]
      %s221 = scalar_lea.vmem %s1, 64
      %v222 = vld [vmem:[%s221] sm:$0xf]
      %v223 = vld [vmem:[%s221 + $0x4] sm:$0xf]
      %v224 = vld [vmem:[%s221 + $0x8] sm:$0xf]
      %v225 = vld [vmem:[%s221 + $0xc] sm:$0xf]
      %v226 = vld [vmem:[%s221 + $0x10] sm:$0xf]
      %v227 = vld [vmem:[%s221 + $0x14] sm:$0xf]
      %v228 = vld [vmem:[%s221 + $0x18] sm:$0xf]
      %v229 = vld [vmem:[%s221 + $0x1c] sm:$0xf]
      %v230 = vld [vmem:[%s221 + $0x20] sm:$0xf]
      %v231 = vld [vmem:[%s221 + $0x24] sm:$0xf]
      %v232 = vld [vmem:[%s221 + $0x28] sm:$0xf]
      %v233 = vld [vmem:[%s221 + $0x2c] sm:$0xf]
      %v234 = vld [vmem:[%s221 + $0x30] sm:$0xf]
      %v235 = vld [vmem:[%s221 + $0x34] sm:$0xf]
      %v236 = vld [vmem:[%s221 + $0x38] sm:$0xf]
      %v237 = vld [vmem:[%s221 + $0x3c] sm:$0xf]
      %v246 = vunpack.c.l.b16 %v213
      %v247 = vunpack.c.l.b16 %v214
      %v248 = vunpack.c.l.b16 %v215
      %v249 = vunpack.c.l.b16 %v216
      %v250 = vunpack.c.l.b16 %v217
      %v251 = vunpack.c.l.b16 %v218
      %v252 = vunpack.c.l.b16 %v219
      %v253 = vunpack.c.l.b16 %v220
      %v254 = vpack.c.b16 %v247, %v246
      %v255 = vpack.c.b16 %v249, %v248
      %v256 = vpack.c.b16 %v251, %v250
      %v257 = vpack.c.b16 %v253, %v252
      %v278 = vunpack.c.l.b16 %v222
      %v279 = vunpack.c.l.b16 %v223
      %v280 = vunpack.c.l.b16 %v224
      %v281 = vunpack.c.l.b16 %v225
      %v282 = vunpack.c.l.b16 %v226
      %v283 = vunpack.c.l.b16 %v227
      %v284 = vunpack.c.l.b16 %v228
      %v285 = vunpack.c.l.b16 %v229
      %v286 = vunpack.c.l.b16 %v230
      %v287 = vunpack.c.l.b16 %v231
      %v288 = vunpack.c.l.b16 %v232
      %v289 = vunpack.c.l.b16 %v233
      %v290 = vunpack.c.l.b16 %v234
      %v291 = vunpack.c.l.b16 %v235
      %v292 = vunpack.c.l.b16 %v236
      %v293 = vunpack.c.l.b16 %v237
      %v294 = vpack.c.b16 %v279, %v278
      %v295 = vpack.c.b16 %v281, %v280
      %v296 = vpack.c.b16 %v283, %v282
      %v297 = vpack.c.b16 %v285, %v284
      %v298 = vpack.c.b16 %v287, %v286
      %v299 = vpack.c.b16 %v289, %v288
      %v300 = vpack.c.b16 %v291, %v290
      %v301 = vpack.c.b16 %v293, %v292
      %310 = vmatprep.subr.bf16.mxu0 0
      %311 = vmatpush1.bf16.msra.mxu0 %v294
      %312 = vmatprep.subr.bf16.mxu0 0
      %313 = vmatpush1.bf16.msra.mxu0 %v295
      %314 = vmatprep.subr.bf16.mxu0 0
      %315 = vmatpush1.bf16.msra.mxu0 %v296
      %316 = vmatprep.subr.bf16.mxu0 0
      %317 = vmatpush1.bf16.msra.mxu0 %v297
      %318 = vmatprep.subr.bf16.mxu0 0
      %319 = vmatpush1.bf16.msra.mxu0 %v298
      %320 = vmatprep.subr.bf16.mxu0 0
      %321 = vmatpush1.bf16.msra.mxu0 %v299
      %322 = vmatprep.subr.bf16.mxu0 0
      %323 = vmatpush1.bf16.msra.mxu0 %v300
      %324 = vmatprep.subr.bf16.mxu0 0
      %325 = vmatpush1.bf16.msra.mxu0 %v301
      %326 = vmatprep.subr.bf16.mxu0 0
      %327 = vmatpush1.bf16.msra.mxu0 0
      %328 = vmatprep.subr.bf16.mxu0 0
      %329 = vmatpush1.bf16.msra.mxu0 0
      %330 = vmatprep.subr.bf16.mxu0 0
      %331 = vmatpush1.bf16.msra.mxu0 0
      %332 = vmatprep.subr.bf16.mxu0 0
      %333 = vmatpush1.bf16.msra.mxu0 0
      %334 = vmatprep.subr.bf16.mxu0 0
      %335 = vmatpush1.bf16.msra.mxu0 0
      %336 = vmatprep.subr.bf16.mxu0 0
      %337 = vmatpush1.bf16.msra.mxu0 0
      %338 = vmatprep.subr.bf16.mxu0 0
      %339 = vmatpush1.bf16.msra.mxu0 0
      %340 = vmatprep.subr.bf16.mxu0 0
      %341 = vmatpush1.bf16.msra.mxu0 0
      %342 = vmatprep.mubr.bf16.mxu0 0
      %343 = vmatmul.mubr.bf16.gmra.mrb[0].mxu0 %v254
      %v344 = vpop.f32.mrb[0].mxu0
      %v345 = vadd.f32 0.0, %v344
      %v346 = vpop.f32.mrb[0].mxu0
      %v347 = vpop.f32.mrb[0].mxu0
      %v348 = vadd.f32 0.0, %v347
      %v349 = vpop.f32.mrb[0].mxu0
      %350 = vmatprep.mubr.bf16.mxu0 0
      %351 = vmatmul.mubr.bf16.gmra.mrb[0].mxu0 %v255
      %v352 = vpop.f32.mrb[0].mxu0
      %v353 = vadd.f32 0.0, %v352
      %v354 = vpop.f32.mrb[0].mxu0
      %v355 = vpop.f32.mrb[0].mxu0
      %v356 = vadd.f32 0.0, %v355
      %v357 = vpop.f32.mrb[0].mxu0
      %358 = vmatprep.mubr.bf16.mxu0 0
      %359 = vmatmul.mubr.bf16.gmra.mrb[0].mxu0 %v256
      %v360 = vpop.f32.mrb[0].mxu0
      %v361 = vadd.f32 0.0, %v360
      %v362 = vpop.f32.mrb[0].mxu0
      %v363 = vpop.f32.mrb[0].mxu0
      %v364 = vadd.f32 0.0, %v363
      %v365 = vpop.f32.mrb[0].mxu0
      %366 = vmatprep.mubr.bf16.mxu0 0
      %367 = vmatmul.mubr.bf16.gmra.mrb[0].mxu0 %v257
      %v368 = vpop.f32.mrb[0].mxu0
      %v369 = vadd.f32 0.0, %v368
      %v370 = vpop.f32.mrb[0].mxu0
      %v371 = vpop.f32.mrb[0].mxu0
      %v372 = vadd.f32 0.0, %v371
      %v373 = vpop.f32.mrb[0].mxu0
      %374 = vdwg.mxu0
      %v383 = vunpack.c.l.b16 %v188
      %v384 = vunpack.c.l.b16 %v189
      %v385 = vunpack.c.l.b16 %v190
      %v386 = vunpack.c.l.b16 %v191
      %v387 = vunpack.c.l.b16 %v192
      %v388 = vunpack.c.l.b16 %v193
      %v389 = vunpack.c.l.b16 %v194
      %v390 = vunpack.c.l.b16 %v195
      %v391 = vpack.c.b16 %v384, %v383
      %v392 = vpack.c.b16 %v386, %v385
      %v393 = vpack.c.b16 %v388, %v387
      %v394 = vpack.c.b16 %v390, %v389
      %v415 = vunpack.c.l.b16 %v196
      %v416 = vunpack.c.l.b16 %v197
      %v417 = vunpack.c.l.b16 %v198
      %v418 = vunpack.c.l.b16 %v199
      %v419 = vunpack.c.l.b16 %v200
      %v420 = vunpack.c.l.b16 %v201
      %v421 = vunpack.c.l.b16 %v202
      %v422 = vunpack.c.l.b16 %v203
      %v423 = vunpack.c.l.b16 %v204
      %v424 = vunpack.c.l.b16 %v205
      %v425 = vunpack.c.l.b16 %v206
      %v426 = vunpack.c.l.b16 %v207
      %v427 = vunpack.c.l.b16 %v208
      %v428 = vunpack.c.l.b16 %v209
      %v429 = vunpack.c.l.b16 %v210
      %v430 = vunpack.c.l.b16 %v211
      %v431 = vpack.c.b16 %v416, %v415
      %v432 = vpack.c.b16 %v418, %v417
      %v433 = vpack.c.b16 %v420, %v419
      %v434 = vpack.c.b16 %v422, %v421
      %v435 = vpack.c.b16 %v424, %v423
      %v436 = vpack.c.b16 %v426, %v425
      %v437 = vpack.c.b16 %v428, %v427
      %v438 = vpack.c.b16 %v430, %v429
      %447 = vmatprep.subr.bf16.mxu0 0
      %448 = vmatpush1.bf16.msra.mxu0 %v431
      %449 = vmatprep.subr.bf16.mxu0 0
      %450 = vmatpush1.bf16.msra.mxu0 %v432
      %451 = vmatprep.subr.bf16.mxu0 0
      %452 = vmatpush1.bf16.msra.mxu0 %v433
      %453 = vmatprep.subr.bf16.mxu0 0
      %454 = vmatpush1.bf16.msra.mxu0 %v434
      %455 = vmatprep.subr.bf16.mxu0 0
      %456 = vmatpush1.bf16.msra.mxu0 %v435
      %457 = vmatprep.subr.bf16.mxu0 0
      %458 = vmatpush1.bf16.msra.mxu0 %v436
      %459 = vmatprep.subr.bf16.mxu0 0
      %460 = vmatpush1.bf16.msra.mxu0 %v437
      %461 = vmatprep.subr.bf16.mxu0 0
      %462 = vmatpush1.bf16.msra.mxu0 %v438
      %463 = vmatprep.subr.bf16.mxu0 0
      %464 = vmatpush1.bf16.msra.mxu0 0
      %465 = vmatprep.subr.bf16.mxu0 0
      %466 = vmatpush1.bf16.msra.mxu0 0
      %467 = vmatprep.subr.bf16.mxu0 0
      %468 = vmatpush1.bf16.msra.mxu0 0
      %469 = vmatprep.subr.bf16.mxu0 0
      %470 = vmatpush1.bf16.msra.mxu0 0
      %471 = vmatprep.subr.bf16.mxu0 0
      %472 = vmatpush1.bf16.msra.mxu0 0
      %473 = vmatprep.subr.bf16.mxu0 0
      %474 = vmatpush1.bf16.msra.mxu0 0
      %475 = vmatprep.subr.bf16.mxu0 0
      %476 = vmatpush1.bf16.msra.mxu0 0
      %477 = vmatprep.subr.bf16.mxu0 0
      %478 = vmatpush1.bf16.msra.mxu0 0
      %479 = vmatprep.mubr.bf16.mxu0 0
      %480 = vmatmul.mubr.bf16.gmra.mrb[0].mxu0 %v391
      %v481 = vpop.f32.mrb[0].mxu0
      %v482 = vadd.f32 %v345, %v481
      %v483 = vpop.f32.mrb[0].mxu0
      %v484 = vpop.f32.mrb[0].mxu0
      %v485 = vadd.f32 %v348, %v484
      %v486 = vpop.f32.mrb[0].mxu0
      %487 = vmatprep.mubr.bf16.mxu0 0
      %488 = vmatmul.mubr.bf16.gmra.mrb[0].mxu0 %v392
      %v489 = vpop.f32.mrb[0].mxu0
      %v490 = vadd.f32 %v353, %v489
      %v491 = vpop.f32.mrb[0].mxu0
      %v492 = vpop.f32.mrb[0].mxu0
      %v493 = vadd.f32 %v356, %v492
      %v494 = vpop.f32.mrb[0].mxu0
      %495 = vmatprep.mubr.bf16.mxu0 0
      %496 = vmatmul.mubr.bf16.gmra.mrb[0].mxu0 %v393
      %v497 = vpop.f32.mrb[0].mxu0
      %v498 = vadd.f32 %v361, %v497
      %v499 = vpop.f32.mrb[0].mxu0
      %v500 = vpop.f32.mrb[0].mxu0
      %v501 = vadd.f32 %v364, %v500
      %v502 = vpop.f32.mrb[0].mxu0
      %503 = vmatprep.mubr.bf16.mxu0 0
      %504 = vmatmul.mubr.bf16.gmra.mrb[0].mxu0 %v394
      %v505 = vpop.f32.mrb[0].mxu0
      %v506 = vadd.f32 %v369, %v505
      %v507 = vpop.f32.mrb[0].mxu0
      %v508 = vpop.f32.mrb[0].mxu0
      %v509 = vadd.f32 %v372, %v508
      %v510 = vpop.f32.mrb[0].mxu0
      %511 = vdwg.mxu0
      %v512 = vld [vmem:[%s176] sm:$0xf]
      %v513 = vld [vmem:[%s176 + $0x4] sm:$0x1]
      %v514 = vld [vmem:[%s176 + $0x8] sm:$0xf]
      %v515 = vld [vmem:[%s176 + $0xc] sm:$0x1]
      %v516 = vld [vmem:[%s176 + $0x10] sm:$0xf]
      %v517 = vld [vmem:[%s176 + $0x14] sm:$0x1]
      %v518 = vld [vmem:[%s176 + $0x18] sm:$0xf]
      %v519 = vld [vmem:[%s176 + $0x1c] sm:$0x1]
      %v520 = vld [vmem:[%s176 + $0x20] sm:$0xf]
      %v521 = vld [vmem:[%s176 + $0x24] sm:$0x1]
      %v522 = vld [vmem:[%s176 + $0x28] sm:$0xf]
      %v523 = vld [vmem:[%s176 + $0x2c] sm:$0x1]
      %v524 = vld [vmem:[%s176 + $0x30] sm:$0xf]
      %v525 = vld [vmem:[%s176 + $0x34] sm:$0x1]
      %v526 = vld [vmem:[%s176 + $0x38] sm:$0xf]
      %v527 = vld [vmem:[%s176 + $0x3c] sm:$0x1]
      %vm528 = vsmask.f32 3328
      %vm529 = vsmask.f32 7440
      %vm530 = vmor %vm528, %vm529
      %v532 = vshrl.u32 %v512, 16
      %v534 = vrot.slane %v532, 4
      %v535 = vshll.u32 %v512, 16
      %v537 = vrot.slane %v535, 5
      %v538 = vor.u32 %v534, %v537
      %v539 = vrot.slane %v538, 4
      %v541 = vshll.u32 %v513, 16
      %v543 = vrot.slane %v541, 5
      %v544 = vsel %vm530, %v539, %v543
      %v546 = vshrl.u32 %v514, 16
      %v548 = vrot.slane %v546, 4
      %v549 = vshll.u32 %v514, 16
      %v551 = vrot.slane %v549, 5
      %v552 = vor.u32 %v548, %v551
      %v553 = vrot.slane %v552, 4
      %v555 = vshll.u32 %v515, 16
      %v557 = vrot.slane %v555, 5
      %v558 = vsel %vm530, %v553, %v557
      %v560 = vshrl.u32 %v516, 16
      %v562 = vrot.slane %v560, 4
      %v563 = vshll.u32 %v516, 16
      %v565 = vrot.slane %v563, 5
      %v566 = vor.u32 %v562, %v565
      %v567 = vrot.slane %v566, 4
      %v569 = vshll.u32 %v517, 16
      %v571 = vrot.slane %v569, 5
      %v572 = vsel %vm530, %v567, %v571
      %v574 = vshrl.u32 %v518, 16
      %v576 = vrot.slane %v574, 4
      %v577 = vshll.u32 %v518, 16
      %v579 = vrot.slane %v577, 5
      %v580 = vor.u32 %v576, %v579
      %v581 = vrot.slane %v580, 4
      %v583 = vshll.u32 %v519, 16
      %v585 = vrot.slane %v583, 5
      %v586 = vsel %vm530, %v581, %v585
      %v588 = vshrl.u32 %v520, 16
      %v590 = vrot.slane %v588, 4
      %v591 = vshll.u32 %v520, 16
      %v593 = vrot.slane %v591, 5
      %v594 = vor.u32 %v590, %v593
      %v595 = vrot.slane %v594, 4
      %v597 = vshll.u32 %v521, 16
      %v599 = vrot.slane %v597, 5
      %v600 = vsel %vm530, %v595, %v599
      %v602 = vshrl.u32 %v522, 16
      %v604 = vrot.slane %v602, 4
      %v605 = vshll.u32 %v522, 16
      %v607 = vrot.slane %v605, 5
      %v608 = vor.u32 %v604, %v607
      %v609 = vrot.slane %v608, 4
      %v611 = vshll.u32 %v523, 16
      %v613 = vrot.slane %v611, 5
      %v614 = vsel %vm530, %v609, %v613
      %v616 = vshrl.u32 %v524, 16
      %v618 = vrot.slane %v616, 4
      %v619 = vshll.u32 %v524, 16
      %v621 = vrot.slane %v619, 5
      %v622 = vor.u32 %v618, %v621
      %v623 = vrot.slane %v622, 4
      %v625 = vshll.u32 %v525, 16
      %v627 = vrot.slane %v625, 5
      %v628 = vsel %vm530, %v623, %v627
      %v630 = vshrl.u32 %v526, 16
      %v632 = vrot.slane %v630, 4
      %v633 = vshll.u32 %v526, 16
      %v635 = vrot.slane %v633, 5
      %v636 = vor.u32 %v632, %v635
      %v637 = vrot.slane %v636, 4
      %v639 = vshll.u32 %v527, 16
      %v641 = vrot.slane %v639, 5
      %v642 = vsel %vm530, %v637, %v641
      %s643 = scalar_lea.vmem %s1, 128
      %v644 = vld [vmem:[%s643] sm:$0xf]
      %v645 = vld [vmem:[%s643 + $0x4] sm:$0xf]
      %v646 = vld [vmem:[%s643 + $0x8] sm:$0xf]
      %v647 = vld [vmem:[%s643 + $0xc] sm:$0xf]
      %v648 = vld [vmem:[%s643 + $0x10] sm:$0xf]
      %v649 = vld [vmem:[%s643 + $0x14] sm:$0xf]
      %v650 = vld [vmem:[%s643 + $0x18] sm:$0xf]
      %v651 = vld [vmem:[%s643 + $0x1c] sm:$0xf]
      %v652 = vld [vmem:[%s643 + $0x20] sm:$0xf]
      %v653 = vld [vmem:[%s643 + $0x24] sm:$0xf]
      %v654 = vld [vmem:[%s643 + $0x28] sm:$0xf]
      %v655 = vld [vmem:[%s643 + $0x2c] sm:$0xf]
      %v656 = vld [vmem:[%s643 + $0x30] sm:$0xf]
      %v657 = vld [vmem:[%s643 + $0x34] sm:$0xf]
      %v658 = vld [vmem:[%s643 + $0x38] sm:$0xf]
      %v659 = vld [vmem:[%s643 + $0x3c] sm:$0xf]
      %v660 = vunpack.c.l.b16 %v544
      %v661 = vunpack.c.l.b16 %v558
      %v662 = vunpack.c.l.b16 %v572
      %v663 = vunpack.c.l.b16 %v586
      %v664 = vunpack.c.l.b16 %v600
      %v665 = vunpack.c.l.b16 %v614
      %v666 = vunpack.c.l.b16 %v628
      %v667 = vunpack.c.l.b16 %v642
      %v668 = vpack.c.b16 %v661, %v660
      %v669 = vpack.c.b16 %v663, %v662
      %v670 = vpack.c.b16 %v665, %v664
      %v671 = vpack.c.b16 %v667, %v666
      %v692 = vunpack.c.l.b16 %v644
      %v693 = vunpack.c.l.b16 %v645
      %v694 = vunpack.c.l.b16 %v646
      %v695 = vunpack.c.l.b16 %v647
      %v696 = vunpack.c.l.b16 %v648
      %v697 = vunpack.c.l.b16 %v649
      %v698 = vunpack.c.l.b16 %v650
      %v699 = vunpack.c.l.b16 %v651
      %v700 = vunpack.c.l.b16 %v652
      %v701 = vunpack.c.l.b16 %v653
      %v702 = vunpack.c.l.b16 %v654
      %v703 = vunpack.c.l.b16 %v655
      %v704 = vunpack.c.l.b16 %v656
      %v705 = vunpack.c.l.b16 %v657
      %v706 = vunpack.c.l.b16 %v658
      %v707 = vunpack.c.l.b16 %v659
      %v708 = vpack.c.b16 %v693, %v692
      %v709 = vpack.c.b16 %v695, %v694
      %v710 = vpack.c.b16 %v697, %v696
      %v711 = vpack.c.b16 %v699, %v698
      %v712 = vpack.c.b16 %v701, %v700
      %v713 = vpack.c.b16 %v703, %v702
      %v714 = vpack.c.b16 %v705, %v704
      %v715 = vpack.c.b16 %v707, %v706
      %724 = vmatprep.subr.bf16.mxu0 0
      %725 = vmatpush1.bf16.msra.mxu0 %v708
      %726 = vmatprep.subr.bf16.mxu0 0
      %727 = vmatpush1.bf16.msra.mxu0 %v709
      %728 = vmatprep.subr.bf16.mxu0 0
      %729 = vmatpush1.bf16.msra.mxu0 %v710
      %730 = vmatprep.subr.bf16.mxu0 0
      %731 = vmatpush1.bf16.msra.mxu0 %v711
      %732 = vmatprep.subr.bf16.mxu0 0
      %733 = vmatpush1.bf16.msra.mxu0 %v712
      %734 = vmatprep.subr.bf16.mxu0 0
      %735 = vmatpush1.bf16.msra.mxu0 %v713
      %736 = vmatprep.subr.bf16.mxu0 0
      %737 = vmatpush1.bf16.msra.mxu0 %v714
      %738 = vmatprep.subr.bf16.mxu0 0
      %739 = vmatpush1.bf16.msra.mxu0 %v715
      %740 = vmatprep.subr.bf16.mxu0 0
      %741 = vmatpush1.bf16.msra.mxu0 0
      %742 = vmatprep.subr.bf16.mxu0 0
      %743 = vmatpush1.bf16.msra.mxu0 0
      %744 = vmatprep.subr.bf16.mxu0 0
      %745 = vmatpush1.bf16.msra.mxu0 0
      %746 = vmatprep.subr.bf16.mxu0 0
      %747 = vmatpush1.bf16.msra.mxu0 0
      %748 = vmatprep.subr.bf16.mxu0 0
      %749 = vmatpush1.bf16.msra.mxu0 0
      %750 = vmatprep.subr.bf16.mxu0 0
      %751 = vmatpush1.bf16.msra.mxu0 0
      %752 = vmatprep.subr.bf16.mxu0 0
      %753 = vmatpush1.bf16.msra.mxu0 0
      %754 = vmatprep.subr.bf16.mxu0 0
      %755 = vmatpush1.bf16.msra.mxu0 0
      %756 = vmatprep.mubr.bf16.mxu0 0
      %757 = vmatmul.mubr.bf16.gmra.mrb[0].mxu0 %v668
      %v758 = vpop.f32.mrb[0].mxu0
      %v759 = vadd.f32 0.0, %v758
      %v760 = vpop.f32.mrb[0].mxu0
      %v761 = vpop.f32.mrb[0].mxu0
      %v762 = vadd.f32 0.0, %v761
      %v763 = vpop.f32.mrb[0].mxu0
      %764 = vmatprep.mubr.bf16.mxu0 0
      %765 = vmatmul.mubr.bf16.gmra.mrb[0].mxu0 %v669
      %v766 = vpop.f32.mrb[0].mxu0
      %v767 = vadd.f32 0.0, %v766
      %v768 = vpop.f32.mrb[0].mxu0
      %v769 = vpop.f32.mrb[0].mxu0
      %v770 = vadd.f32 0.0, %v769
      %v771 = vpop.f32.mrb[0].mxu0
      %772 = vmatprep.mubr.bf16.mxu0 0
      %773 = vmatmul.mubr.bf16.gmra.mrb[0].mxu0 %v670
      %v774 = vpop.f32.mrb[0].mxu0
      %v775 = vadd.f32 0.0, %v774
      %v776 = vpop.f32.mrb[0].mxu0
      %v777 = vpop.f32.mrb[0].mxu0
      %v778 = vadd.f32 0.0, %v777
      %v779 = vpop.f32.mrb[0].mxu0
      %780 = vmatprep.mubr.bf16.mxu0 0
      %781 = vmatmul.mubr.bf16.gmra.mrb[0].mxu0 %v671
      %v782 = vpop.f32.mrb[0].mxu0
      %v783 = vadd.f32 0.0, %v782
      %v784 = vpop.f32.mrb[0].mxu0
      %v785 = vpop.f32.mrb[0].mxu0
      %v786 = vadd.f32 0.0, %v785
      %v787 = vpop.f32.mrb[0].mxu0
      %788 = vdwg.mxu0
      %v789 = vadd.f32 %v482, %v759
      %v790 = vadd.f32 %v485, %v762
      %v791 = vadd.f32 %v490, %v767
      %v792 = vadd.f32 %v493, %v770
      %v793 = vadd.f32 %v498, %v775
      %v794 = vadd.f32 %v501, %v778
      %v795 = vadd.f32 %v506, %v783
      %v796 = vadd.f32 %v509, %v786
      %s797 = scalar_lea.vmem %s176, 144
      %v798 = vld [vmem:[%s797] sm:$0xf]
      %v799 = vld [vmem:[%s797 + $0x8] sm:$0xf]
      %v800 = vld [vmem:[%s797 + $0x10] sm:$0xf]
      %v801 = vld [vmem:[%s797 + $0x18] sm:$0xf]
      %v802 = vld [vmem:[%s797 + $0x20] sm:$0xf]
      %v803 = vld [vmem:[%s797 + $0x28] sm:$0xf]
      %v804 = vld [vmem:[%s797 + $0x30] sm:$0xf]
      %v805 = vld [vmem:[%s797 + $0x38] sm:$0xf]
      %s806 = scalar_lea.vmem %s1, 192
      %v807 = vld [vmem:[%s806] sm:$0xf]
      %v808 = vld [vmem:[%s806 + $0x4] sm:$0xf]
      %v809 = vld [vmem:[%s806 + $0x8] sm:$0xf]
      %v810 = vld [vmem:[%s806 + $0xc] sm:$0xf]
      %v811 = vld [vmem:[%s806 + $0x10] sm:$0xf]
      %v812 = vld [vmem:[%s806 + $0x14] sm:$0xf]
      %v813 = vld [vmem:[%s806 + $0x18] sm:$0xf]
      %v814 = vld [vmem:[%s806 + $0x1c] sm:$0xf]
      %v815 = vld [vmem:[%s806 + $0x20] sm:$0xf]
      %v816 = vld [vmem:[%s806 + $0x24] sm:$0xf]
      %v817 = vld [vmem:[%s806 + $0x28] sm:$0xf]
      %v818 = vld [vmem:[%s806 + $0x2c] sm:$0xf]
      %v819 = vld [vmem:[%s806 + $0x30] sm:$0xf]
      %v820 = vld [vmem:[%s806 + $0x34] sm:$0xf]
      %v821 = vld [vmem:[%s806 + $0x38] sm:$0xf]
      %v822 = vld [vmem:[%s806 + $0x3c] sm:$0xf]
      %v831 = vunpack.c.l.b16 %v798
      %v832 = vunpack.c.l.b16 %v799
      %v833 = vunpack.c.l.b16 %v800
      %v834 = vunpack.c.l.b16 %v801
      %v835 = vunpack.c.l.b16 %v802
      %v836 = vunpack.c.l.b16 %v803
      %v837 = vunpack.c.l.b16 %v804
      %v838 = vunpack.c.l.b16 %v805
      %v839 = vpack.c.b16 %v832, %v831
      %v840 = vpack.c.b16 %v834, %v833
      %v841 = vpack.c.b16 %v836, %v835
      %v842 = vpack.c.b16 %v838, %v837
      %v863 = vunpack.c.l.b16 %v807
      %v864 = vunpack.c.l.b16 %v808
      %v865 = vunpack.c.l.b16 %v809
      %v866 = vunpack.c.l.b16 %v810
      %v867 = vunpack.c.l.b16 %v811
      %v868 = vunpack.c.l.b16 %v812
      %v869 = vunpack.c.l.b16 %v813
      %v870 = vunpack.c.l.b16 %v814
      %v871 = vunpack.c.l.b16 %v815
      %v872 = vunpack.c.l.b16 %v816
      %v873 = vunpack.c.l.b16 %v817
      %v874 = vunpack.c.l.b16 %v818
      %v875 = vunpack.c.l.b16 %v819
      %v876 = vunpack.c.l.b16 %v820
      %v877 = vunpack.c.l.b16 %v821
      %v878 = vunpack.c.l.b16 %v822
      %v879 = vpack.c.b16 %v864, %v863
      %v880 = vpack.c.b16 %v866, %v865
      %v881 = vpack.c.b16 %v868, %v867
      %v882 = vpack.c.b16 %v870, %v869
      %v883 = vpack.c.b16 %v872, %v871
      %v884 = vpack.c.b16 %v874, %v873
      %v885 = vpack.c.b16 %v876, %v875
      %v886 = vpack.c.b16 %v878, %v877
      %895 = vmatprep.subr.bf16.mxu0 0
      %896 = vmatpush1.bf16.msra.mxu0 %v879
      %897 = vmatprep.subr.bf16.mxu0 0
      %898 = vmatpush1.bf16.msra.mxu0 %v880
      %899 = vmatprep.subr.bf16.mxu0 0
      %900 = vmatpush1.bf16.msra.mxu0 %v881
      %901 = vmatprep.subr.bf16.mxu0 0
      %902 = vmatpush1.bf16.msra.mxu0 %v882
      %903 = vmatprep.subr.bf16.mxu0 0
      %904 = vmatpush1.bf16.msra.mxu0 %v883
      %905 = vmatprep.subr.bf16.mxu0 0
      %906 = vmatpush1.bf16.msra.mxu0 %v884
      %907 = vmatprep.subr.bf16.mxu0 0
      %908 = vmatpush1.bf16.msra.mxu0 %v885
      %909 = vmatprep.subr.bf16.mxu0 0
      %910 = vmatpush1.bf16.msra.mxu0 %v886
      %911 = vmatprep.subr.bf16.mxu0 0
      %912 = vmatpush1.bf16.msra.mxu0 0
      %913 = vmatprep.subr.bf16.mxu0 0
      %914 = vmatpush1.bf16.msra.mxu0 0
      %915 = vmatprep.subr.bf16.mxu0 0
      %916 = vmatpush1.bf16.msra.mxu0 0
      %917 = vmatprep.subr.bf16.mxu0 0
      %918 = vmatpush1.bf16.msra.mxu0 0
      %919 = vmatprep.subr.bf16.mxu0 0
      %920 = vmatpush1.bf16.msra.mxu0 0
      %921 = vmatprep.subr.bf16.mxu0 0
      %922 = vmatpush1.bf16.msra.mxu0 0
      %923 = vmatprep.subr.bf16.mxu0 0
      %924 = vmatpush1.bf16.msra.mxu0 0
      %925 = vmatprep.subr.bf16.mxu0 0
      %926 = vmatpush1.bf16.msra.mxu0 0
      %927 = vmatprep.mubr.bf16.mxu0 0
      %928 = vmatmul.mubr.bf16.gmra.mrb[0].mxu0 %v839
      %v929 = vpop.f32.mrb[0].mxu0
      %v930 = vadd.f32 0.0, %v929
      %v931 = vpop.f32.mrb[0].mxu0
      %v932 = vpop.f32.mrb[0].mxu0
      %v933 = vadd.f32 0.0, %v932
      %v934 = vpop.f32.mrb[0].mxu0
      %935 = vmatprep.mubr.bf16.mxu0 0
      %936 = vmatmul.mubr.bf16.gmra.mrb[0].mxu0 %v840
      %v937 = vpop.f32.mrb[0].mxu0
      %v938 = vadd.f32 0.0, %v937
      %v939 = vpop.f32.mrb[0].mxu0
      %v940 = vpop.f32.mrb[0].mxu0
      %v941 = vadd.f32 0.0, %v940
      %v942 = vpop.f32.mrb[0].mxu0
      %943 = vmatprep.mubr.bf16.mxu0 0
      %944 = vmatmul.mubr.bf16.gmra.mrb[0].mxu0 %v841
      %v945 = vpop.f32.mrb[0].mxu0
      %v946 = vadd.f32 0.0, %v945
      %v947 = vpop.f32.mrb[0].mxu0
      %v948 = vpop.f32.mrb[0].mxu0
      %v949 = vadd.f32 0.0, %v948
      %v950 = vpop.f32.mrb[0].mxu0
      %951 = vmatprep.mubr.bf16.mxu0 0
      %952 = vmatmul.mubr.bf16.gmra.mrb[0].mxu0 %v842
      %v953 = vpop.f32.mrb[0].mxu0
      %v954 = vadd.f32 0.0, %v953
      %v955 = vpop.f32.mrb[0].mxu0
      %v956 = vpop.f32.mrb[0].mxu0
      %v957 = vadd.f32 0.0, %v956
      %v958 = vpop.f32.mrb[0].mxu0
      %959 = vdwg.mxu0
      %v960 = vadd.f32 %v789, %v930
      %v961 = vadd.f32 %v790, %v933
      %v962 = vadd.f32 %v791, %v938
      %v963 = vadd.f32 %v792, %v941
      %v964 = vadd.f32 %v793, %v946
      %v965 = vadd.f32 %v794, %v949
      %v966 = vadd.f32 %v795, %v954
      %v967 = vadd.f32 %v796, %v957
      %s968 = scalar_lea.vmem %s176, 216
      %v969 = vld [vmem:[%s968] sm:$0xf]
      %v970 = vld [vmem:[%s968 + $0x8] sm:$0xf]
      %v971 = vld [vmem:[%s968 + $0x10] sm:$0xf]
      %v972 = vld [vmem:[%s968 + $0x18] sm:$0xf]
      %v973 = vld [vmem:[%s968 + $0x20] sm:$0xf]
      %v974 = vld [vmem:[%s968 + $0x28] sm:$0xf]
      %v975 = vld [vmem:[%s968 + $0x30] sm:$0xf]
      %v976 = vld [vmem:[%s968 + $0x38] sm:$0xf]
      %s977 = scalar_lea.vmem %s1, 256
      %v978 = vld [vmem:[%s977] sm:$0xf]
      %v979 = vld [vmem:[%s977 + $0x4] sm:$0xf]
      %v980 = vld [vmem:[%s977 + $0x8] sm:$0xf]
      %v981 = vld [vmem:[%s977 + $0xc] sm:$0xf]
      %v982 = vld [vmem:[%s977 + $0x10] sm:$0xf]
      %v983 = vld [vmem:[%s977 + $0x14] sm:$0xf]
      %v984 = vld [vmem:[%s977 + $0x18] sm:$0xf]
      %v985 = vld [vmem:[%s977 + $0x1c] sm:$0xf]
      %v986 = vld [vmem:[%s977 + $0x20] sm:$0xf]
      %v987 = vld [vmem:[%s977 + $0x24] sm:$0xf]
      %v988 = vld [vmem:[%s977 + $0x28] sm:$0xf]
      %v989 = vld [vmem:[%s977 + $0x2c] sm:$0xf]
      %v990 = vld [vmem:[%s977 + $0x30] sm:$0xf]
      %v991 = vld [vmem:[%s977 + $0x34] sm:$0xf]
      %v992 = vld [vmem:[%s977 + $0x38] sm:$0xf]
      %v993 = vld [vmem:[%s977 + $0x3c] sm:$0xf]
      %v1002 = vunpack.c.l.b16 %v969
      %v1003 = vunpack.c.l.b16 %v970
      %v1004 = vunpack.c.l.b16 %v971
      %v1005 = vunpack.c.l.b16 %v972
      %v1006 = vunpack.c.l.b16 %v973
      %v1007 = vunpack.c.l.b16 %v974
      %v1008 = vunpack.c.l.b16 %v975
      %v1009 = vunpack.c.l.b16 %v976
      %v1010 = vpack.c.b16 %v1003, %v1002
      %v1011 = vpack.c.b16 %v1005, %v1004
      %v1012 = vpack.c.b16 %v1007, %v1006
      %v1013 = vpack.c.b16 %v1009, %v1008
      %v1034 = vunpack.c.l.b16 %v978
      %v1035 = vunpack.c.l.b16 %v979
      %v1036 = vunpack.c.l.b16 %v980
      %v1037 = vunpack.c.l.b16 %v981
      %v1038 = vunpack.c.l.b16 %v982
      %v1039 = vunpack.c.l.b16 %v983
      %v1040 = vunpack.c.l.b16 %v984
      %v1041 = vunpack.c.l.b16 %v985
      %v1042 = vunpack.c.l.b16 %v986
      %v1043 = vunpack.c.l.b16 %v987
      %v1044 = vunpack.c.l.b16 %v988
      %v1045 = vunpack.c.l.b16 %v989
      %v1046 = vunpack.c.l.b16 %v990
      %v1047 = vunpack.c.l.b16 %v991
      %v1048 = vunpack.c.l.b16 %v992
      %v1049 = vunpack.c.l.b16 %v993
      %v1050 = vpack.c.b16 %v1035, %v1034
      %v1051 = vpack.c.b16 %v1037, %v1036
      %v1052 = vpack.c.b16 %v1039, %v1038
      %v1053 = vpack.c.b16 %v1041, %v1040
      %v1054 = vpack.c.b16 %v1043, %v1042
      %v1055 = vpack.c.b16 %v1045, %v1044
      %v1056 = vpack.c.b16 %v1047, %v1046
      %v1057 = vpack.c.b16 %v1049, %v1048
      %1066 = vmatprep.subr.bf16.mxu0 0
      %1067 = vmatpush1.bf16.msra.mxu0 %v1050
      %1068 = vmatprep.subr.bf16.mxu0 0
      %1069 = vmatpush1.bf16.msra.mxu0 %v1051
      %1070 = vmatprep.subr.bf16.mxu0 0
      %1071 = vmatpush1.bf16.msra.mxu0 %v1052
      %1072 = vmatprep.subr.bf16.mxu0 0
      %1073 = vmatpush1.bf16.msra.mxu0 %v1053
      %1074 = vmatprep.subr.bf16.mxu0 0
      %1075 = vmatpush1.bf16.msra.mxu0 %v1054
      %1076 = vmatprep.subr.bf16.mxu0 0
      %1077 = vmatpush1.bf16.msra.mxu0 %v1055
      %1078 = vmatprep.subr.bf16.mxu0 0
      %1079 = vmatpush1.bf16.msra.mxu0 %v1056
      %1080 = vmatprep.subr.bf16.mxu0 0
      %1081 = vmatpush1.bf16.msra.mxu0 %v1057
      %1082 = vmatprep.subr.bf16.mxu0 0
      %1083 = vmatpush1.bf16.msra.mxu0 0
      %1084 = vmatprep.subr.bf16.mxu0 0
      %1085 = vmatpush1.bf16.msra.mxu0 0
      %1086 = vmatprep.subr.bf16.mxu0 0
      %1087 = vmatpush1.bf16.msra.mxu0 0
      %1088 = vmatprep.subr.bf16.mxu0 0
      %1089 = vmatpush1.bf16.msra.mxu0 0
      %1090 = vmatprep.subr.bf16.mxu0 0
      %1091 = vmatpush1.bf16.msra.mxu0 0
      %1092 = vmatprep.subr.bf16.mxu0 0
      %1093 = vmatpush1.bf16.msra.mxu0 0
      %1094 = vmatprep.subr.bf16.mxu0 0
      %1095 = vmatpush1.bf16.msra.mxu0 0
      %1096 = vmatprep.subr.bf16.mxu0 0
      %1097 = vmatpush1.bf16.msra.mxu0 0
      %1098 = vmatprep.mubr.bf16.mxu0 0
      %1099 = vmatmul.mubr.bf16.gmra.mrb[0].mxu0 %v1010
      %v1100 = vpop.f32.mrb[0].mxu0
      %v1101 = vadd.f32 0.0, %v1100
      %v1102 = vpop.f32.mrb[0].mxu0
      %v1103 = vpop.f32.mrb[0].mxu0
      %v1104 = vadd.f32 0.0, %v1103
      %v1105 = vpop.f32.mrb[0].mxu0
      %1106 = vmatprep.mubr.bf16.mxu0 0
      %1107 = vmatmul.mubr.bf16.gmra.mrb[0].mxu0 %v1011
      %v1108 = vpop.f32.mrb[0].mxu0
      %v1109 = vadd.f32 0.0, %v1108
      %v1110 = vpop.f32.mrb[0].mxu0
      %v1111 = vpop.f32.mrb[0].mxu0
      %v1112 = vadd.f32 0.0, %v1111
      %v1113 = vpop.f32.mrb[0].mxu0
      %1114 = vmatprep.mubr.bf16.mxu0 0
      %1115 = vmatmul.mubr.bf16.gmra.mrb[0].mxu0 %v1012
      %v1116 = vpop.f32.mrb[0].mxu0
      %v1117 = vadd.f32 0.0, %v1116
      %v1118 = vpop.f32.mrb[0].mxu0
      %v1119 = vpop.f32.mrb[0].mxu0
      %v1120 = vadd.f32 0.0, %v1119
      %v1121 = vpop.f32.mrb[0].mxu0
      %1122 = vmatprep.mubr.bf16.mxu0 0
      %1123 = vmatmul.mubr.bf16.gmra.mrb[0].mxu0 %v1013
      %v1124 = vpop.f32.mrb[0].mxu0
      %v1125 = vadd.f32 0.0, %v1124
      %v1126 = vpop.f32.mrb[0].mxu0
      %v1127 = vpop.f32.mrb[0].mxu0
      %v1128 = vadd.f32 0.0, %v1127
      %v1129 = vpop.f32.mrb[0].mxu0
      %1130 = vdwg.mxu0
      %v1131 = vadd.f32 %v960, %v1101
      %v1132 = vadd.f32 %v961, %v1104
      %v1133 = vadd.f32 %v962, %v1109
      %v1134 = vadd.f32 %v963, %v1112
      %v1135 = vadd.f32 %v964, %v1117
      %v1136 = vadd.f32 %v965, %v1120
      %v1137 = vadd.f32 %v966, %v1125
      %v1138 = vadd.f32 %v967, %v1128
      %v1139 = vld [vmem:[%s797] sm:$0xf]
      %v1140 = vld [vmem:[%s797 + $0x4] sm:$0x1]
      %v1141 = vld [vmem:[%s797 + $0x8] sm:$0xf]
      %v1142 = vld [vmem:[%s797 + $0xc] sm:$0x1]
      %v1143 = vld [vmem:[%s797 + $0x10] sm:$0xf]
      %v1144 = vld [vmem:[%s797 + $0x14] sm:$0x1]
      %v1145 = vld [vmem:[%s797 + $0x18] sm:$0xf]
      %v1146 = vld [vmem:[%s797 + $0x1c] sm:$0x1]
      %v1147 = vld [vmem:[%s797 + $0x20] sm:$0xf]
      %v1148 = vld [vmem:[%s797 + $0x24] sm:$0x1]
      %v1149 = vld [vmem:[%s797 + $0x28] sm:$0xf]
      %v1150 = vld [vmem:[%s797 + $0x2c] sm:$0x1]
      %v1151 = vld [vmem:[%s797 + $0x30] sm:$0xf]
      %v1152 = vld [vmem:[%s797 + $0x34] sm:$0x1]
      %v1153 = vld [vmem:[%s797 + $0x38] sm:$0xf]
      %v1154 = vld [vmem:[%s797 + $0x3c] sm:$0x1]
      %v1156 = vshrl.u32 %v1139, 16
      %v1158 = vrot.slane %v1156, 4
      %v1159 = vshll.u32 %v1139, 16
      %v1161 = vrot.slane %v1159, 5
      %v1162 = vor.u32 %v1158, %v1161
      %v1163 = vrot.slane %v1162, 4
      %v1165 = vshll.u32 %v1140, 16
      %v1167 = vrot.slane %v1165, 5
      %v1168 = vsel %vm530, %v1163, %v1167
      %v1170 = vshrl.u32 %v1141, 16
      %v1172 = vrot.slane %v1170, 4
      %v1173 = vshll.u32 %v1141, 16
      %v1175 = vrot.slane %v1173, 5
      %v1176 = vor.u32 %v1172, %v1175
      %v1177 = vrot.slane %v1176, 4
      %v1179 = vshll.u32 %v1142, 16
      %v1181 = vrot.slane %v1179, 5
      %v1182 = vsel %vm530, %v1177, %v1181
      %v1184 = vshrl.u32 %v1143, 16
      %v1186 = vrot.slane %v1184, 4
      %v1187 = vshll.u32 %v1143, 16
      %v1189 = vrot.slane %v1187, 5
      %v1190 = vor.u32 %v1186, %v1189
      %v1191 = vrot.slane %v1190, 4
      %v1193 = vshll.u32 %v1144, 16
      %v1195 = vrot.slane %v1193, 5
      %v1196 = vsel %vm530, %v1191, %v1195
      %v1198 = vshrl.u32 %v1145, 16
      %v1200 = vrot.slane %v1198, 4
      %v1201 = vshll.u32 %v1145, 16
      %v1203 = vrot.slane %v1201, 5
      %v1204 = vor.u32 %v1200, %v1203
      %v1205 = vrot.slane %v1204, 4
      %v1207 = vshll.u32 %v1146, 16
      %v1209 = vrot.slane %v1207, 5
      %v1210 = vsel %vm530, %v1205, %v1209
      %v1212 = vshrl.u32 %v1147, 16
      %v1214 = vrot.slane %v1212, 4
      %v1215 = vshll.u32 %v1147, 16
      %v1217 = vrot.slane %v1215, 5
      %v1218 = vor.u32 %v1214, %v1217
      %v1219 = vrot.slane %v1218, 4
      %v1221 = vshll.u32 %v1148, 16
      %v1223 = vrot.slane %v1221, 5
      %v1224 = vsel %vm530, %v1219, %v1223
      %v1226 = vshrl.u32 %v1149, 16
      %v1228 = vrot.slane %v1226, 4
      %v1229 = vshll.u32 %v1149, 16
      %v1231 = vrot.slane %v1229, 5
      %v1232 = vor.u32 %v1228, %v1231
      %v1233 = vrot.slane %v1232, 4
      %v1235 = vshll.u32 %v1150, 16
      %v1237 = vrot.slane %v1235, 5
      %v1238 = vsel %vm530, %v1233, %v1237
      %v1240 = vshrl.u32 %v1151, 16
      %v1242 = vrot.slane %v1240, 4
      %v1243 = vshll.u32 %v1151, 16
      %v1245 = vrot.slane %v1243, 5
      %v1246 = vor.u32 %v1242, %v1245
      %v1247 = vrot.slane %v1246, 4
      %v1249 = vshll.u32 %v1152, 16
      %v1251 = vrot.slane %v1249, 5
      %v1252 = vsel %vm530, %v1247, %v1251
      %v1254 = vshrl.u32 %v1153, 16
      %v1256 = vrot.slane %v1254, 4
      %v1257 = vshll.u32 %v1153, 16
      %v1259 = vrot.slane %v1257, 5
      %v1260 = vor.u32 %v1256, %v1259
      %v1261 = vrot.slane %v1260, 4
      %v1263 = vshll.u32 %v1154, 16
      %v1265 = vrot.slane %v1263, 5
      %v1266 = vsel %vm530, %v1261, %v1265
      %s1267 = scalar_lea.vmem %s1, 320
      %v1268 = vld [vmem:[%s1267] sm:$0xf]
      %v1269 = vld [vmem:[%s1267 + $0x4] sm:$0xf]
      %v1270 = vld [vmem:[%s1267 + $0x8] sm:$0xf]
      %v1271 = vld [vmem:[%s1267 + $0xc] sm:$0xf]
      %v1272 = vld [vmem:[%s1267 + $0x10] sm:$0xf]
      %v1273 = vld [vmem:[%s1267 + $0x14] sm:$0xf]
      %v1274 = vld [vmem:[%s1267 + $0x18] sm:$0xf]
      %v1275 = vld [vmem:[%s1267 + $0x1c] sm:$0xf]
      %v1276 = vld [vmem:[%s1267 + $0x20] sm:$0xf]
      %v1277 = vld [vmem:[%s1267 + $0x24] sm:$0xf]
      %v1278 = vld [vmem:[%s1267 + $0x28] sm:$0xf]
      %v1279 = vld [vmem:[%s1267 + $0x2c] sm:$0xf]
      %v1280 = vld [vmem:[%s1267 + $0x30] sm:$0xf]
      %v1281 = vld [vmem:[%s1267 + $0x34] sm:$0xf]
      %v1282 = vld [vmem:[%s1267 + $0x38] sm:$0xf]
      %v1283 = vld [vmem:[%s1267 + $0x3c] sm:$0xf]
      %v1284 = vunpack.c.l.b16 %v1168
      %v1285 = vunpack.c.l.b16 %v1182
      %v1286 = vunpack.c.l.b16 %v1196
      %v1287 = vunpack.c.l.b16 %v1210
      %v1288 = vunpack.c.l.b16 %v1224
      %v1289 = vunpack.c.l.b16 %v1238
      %v1290 = vunpack.c.l.b16 %v1252
      %v1291 = vunpack.c.l.b16 %v1266
      %v1292 = vpack.c.b16 %v1285, %v1284
      %v1293 = vpack.c.b16 %v1287, %v1286
      %v1294 = vpack.c.b16 %v1289, %v1288
      %v1295 = vpack.c.b16 %v1291, %v1290
      %v1316 = vunpack.c.l.b16 %v1268
      %v1317 = vunpack.c.l.b16 %v1269
      %v1318 = vunpack.c.l.b16 %v1270
      %v1319 = vunpack.c.l.b16 %v1271
      %v1320 = vunpack.c.l.b16 %v1272
      %v1321 = vunpack.c.l.b16 %v1273
      %v1322 = vunpack.c.l.b16 %v1274
      %v1323 = vunpack.c.l.b16 %v1275
      %v1324 = vunpack.c.l.b16 %v1276
      %v1325 = vunpack.c.l.b16 %v1277
      %v1326 = vunpack.c.l.b16 %v1278
      %v1327 = vunpack.c.l.b16 %v1279
      %v1328 = vunpack.c.l.b16 %v1280
      %v1329 = vunpack.c.l.b16 %v1281
      %v1330 = vunpack.c.l.b16 %v1282
      %v1331 = vunpack.c.l.b16 %v1283
      %v1332 = vpack.c.b16 %v1317, %v1316
      %v1333 = vpack.c.b16 %v1319, %v1318
      %v1334 = vpack.c.b16 %v1321, %v1320
      %v1335 = vpack.c.b16 %v1323, %v1322
      %v1336 = vpack.c.b16 %v1325, %v1324
      %v1337 = vpack.c.b16 %v1327, %v1326
      %v1338 = vpack.c.b16 %v1329, %v1328
      %v1339 = vpack.c.b16 %v1331, %v1330
      %1348 = vmatprep.subr.bf16.mxu0 0
      %1349 = vmatpush1.bf16.msra.mxu0 %v1332
      %1350 = vmatprep.subr.bf16.mxu0 0
      %1351 = vmatpush1.bf16.msra.mxu0 %v1333
      %1352 = vmatprep.subr.bf16.mxu0 0
      %1353 = vmatpush1.bf16.msra.mxu0 %v1334
      %1354 = vmatprep.subr.bf16.mxu0 0
      %1355 = vmatpush1.bf16.msra.mxu0 %v1335
      %1356 = vmatprep.subr.bf16.mxu0 0
      %1357 = vmatpush1.bf16.msra.mxu0 %v1336
      %1358 = vmatprep.subr.bf16.mxu0 0
      %1359 = vmatpush1.bf16.msra.mxu0 %v1337
      %1360 = vmatprep.subr.bf16.mxu0 0
      %1361 = vmatpush1.bf16.msra.mxu0 %v1338
      %1362 = vmatprep.subr.bf16.mxu0 0
      %1363 = vmatpush1.bf16.msra.mxu0 %v1339
      %1364 = vmatprep.subr.bf16.mxu0 0
      %1365 = vmatpush1.bf16.msra.mxu0 0
      %1366 = vmatprep.subr.bf16.mxu0 0
      %1367 = vmatpush1.bf16.msra.mxu0 0
      %1368 = vmatprep.subr.bf16.mxu0 0
      %1369 = vmatpush1.bf16.msra.mxu0 0
      %1370 = vmatprep.subr.bf16.mxu0 0
      %1371 = vmatpush1.bf16.msra.mxu0 0
      %1372 = vmatprep.subr.bf16.mxu0 0
      %1373 = vmatpush1.bf16.msra.mxu0 0
      %1374 = vmatprep.subr.bf16.mxu0 0
      %1375 = vmatpush1.bf16.msra.mxu0 0
      %1376 = vmatprep.subr.bf16.mxu0 0
      %1377 = vmatpush1.bf16.msra.mxu0 0
      %1378 = vmatprep.subr.bf16.mxu0 0
      %1379 = vmatpush1.bf16.msra.mxu0 0
      %1380 = vmatprep.mubr.bf16.mxu0 0
      %1381 = vmatmul.mubr.bf16.gmra.mrb[0].mxu0 %v1292
      %v1382 = vpop.f32.mrb[0].mxu0
      %v1383 = vadd.f32 0.0, %v1382
      %v1384 = vpop.f32.mrb[0].mxu0
      %v1385 = vpop.f32.mrb[0].mxu0
      %v1386 = vadd.f32 0.0, %v1385
      %v1387 = vpop.f32.mrb[0].mxu0
      %1388 = vmatprep.mubr.bf16.mxu0 0
      %1389 = vmatmul.mubr.bf16.gmra.mrb[0].mxu0 %v1293
      %v1390 = vpop.f32.mrb[0].mxu0
      %v1391 = vadd.f32 0.0, %v1390
      %v1392 = vpop.f32.mrb[0].mxu0
      %v1393 = vpop.f32.mrb[0].mxu0
      %v1394 = vadd.f32 0.0, %v1393
      %v1395 = vpop.f32.mrb[0].mxu0
      %1396 = vmatprep.mubr.bf16.mxu0 0
      %1397 = vmatmul.mubr.bf16.gmra.mrb[0].mxu0 %v1294
      %v1398 = vpop.f32.mrb[0].mxu0
      %v1399 = vadd.f32 0.0, %v1398
      %v1400 = vpop.f32.mrb[0].mxu0
      %v1401 = vpop.f32.mrb[0].mxu0
      %v1402 = vadd.f32 0.0, %v1401
      %v1403 = vpop.f32.mrb[0].mxu0
      %1404 = vmatprep.mubr.bf16.mxu0 0
      %1405 = vmatmul.mubr.bf16.gmra.mrb[0].mxu0 %v1295
      %v1406 = vpop.f32.mrb[0].mxu0
      %v1407 = vadd.f32 0.0, %v1406
      %v1408 = vpop.f32.mrb[0].mxu0
      %v1409 = vpop.f32.mrb[0].mxu0
      %v1410 = vadd.f32 0.0, %v1409
      %v1411 = vpop.f32.mrb[0].mxu0
      %1412 = vdwg.mxu0
      %v1413 = vadd.f32 %v1131, %v1383
      %v1414 = vadd.f32 %v1132, %v1386
      %v1415 = vadd.f32 %v1133, %v1391
      %v1416 = vadd.f32 %v1134, %v1394
      %v1417 = vadd.f32 %v1135, %v1399
      %v1418 = vadd.f32 %v1136, %v1402
      %v1419 = vadd.f32 %v1137, %v1407
      %v1420 = vadd.f32 %v1138, %v1410
      %s1421 = scalar_lea.vmem %s176, 8
      %v1422 = vld [vmem:[%s1421] sm:$0xf]
      %v1423 = vld [vmem:[%s1421 + $0x8] sm:$0xf]
      %v1424 = vld [vmem:[%s1421 + $0x10] sm:$0xf]
      %v1425 = vld [vmem:[%s1421 + $0x18] sm:$0xf]
      %v1426 = vld [vmem:[%s1421 + $0x20] sm:$0xf]
      %v1427 = vld [vmem:[%s1421 + $0x28] sm:$0xf]
      %v1428 = vld [vmem:[%s1421 + $0x30] sm:$0xf]
      %v1429 = vld [vmem:[%s1421 + $0x38] sm:$0xf]
      %s1430 = scalar_lea.vmem %s1, 384
      %v1431 = vld [vmem:[%s1430] sm:$0xf]
      %v1432 = vld [vmem:[%s1430 + $0x4] sm:$0xf]
      %v1433 = vld [vmem:[%s1430 + $0x8] sm:$0xf]
      %v1434 = vld [vmem:[%s1430 + $0xc] sm:$0xf]
      %v1435 = vld [vmem:[%s1430 + $0x10] sm:$0xf]
      %v1436 = vld [vmem:[%s1430 + $0x14] sm:$0xf]
      %v1437 = vld [vmem:[%s1430 + $0x18] sm:$0xf]
      %v1438 = vld [vmem:[%s1430 + $0x1c] sm:$0xf]
      %v1439 = vld [vmem:[%s1430 + $0x20] sm:$0xf]
      %v1440 = vld [vmem:[%s1430 + $0x24] sm:$0xf]
      %v1441 = vld [vmem:[%s1430 + $0x28] sm:$0xf]
      %v1442 = vld [vmem:[%s1430 + $0x2c] sm:$0xf]
      %v1443 = vld [vmem:[%s1430 + $0x30] sm:$0xf]
      %v1444 = vld [vmem:[%s1430 + $0x34] sm:$0xf]
      %v1445 = vld [vmem:[%s1430 + $0x38] sm:$0xf]
      %v1446 = vld [vmem:[%s1430 + $0x3c] sm:$0xf]
      %v1455 = vunpack.c.l.b16 %v1422
      %v1456 = vunpack.c.l.b16 %v1423
      %v1457 = vunpack.c.l.b16 %v1424
      %v1458 = vunpack.c.l.b16 %v1425
      %v1459 = vunpack.c.l.b16 %v1426
      %v1460 = vunpack.c.l.b16 %v1427
      %v1461 = vunpack.c.l.b16 %v1428
      %v1462 = vunpack.c.l.b16 %v1429
      %v1463 = vpack.c.b16 %v1456, %v1455
      %v1464 = vpack.c.b16 %v1458, %v1457
      %v1465 = vpack.c.b16 %v1460, %v1459
      %v1466 = vpack.c.b16 %v1462, %v1461
      %v1487 = vunpack.c.l.b16 %v1431
      %v1488 = vunpack.c.l.b16 %v1432
      %v1489 = vunpack.c.l.b16 %v1433
      %v1490 = vunpack.c.l.b16 %v1434
      %v1491 = vunpack.c.l.b16 %v1435
      %v1492 = vunpack.c.l.b16 %v1436
      %v1493 = vunpack.c.l.b16 %v1437
      %v1494 = vunpack.c.l.b16 %v1438
      %v1495 = vunpack.c.l.b16 %v1439
      %v1496 = vunpack.c.l.b16 %v1440
      %v1497 = vunpack.c.l.b16 %v1441
      %v1498 = vunpack.c.l.b16 %v1442
      %v1499 = vunpack.c.l.b16 %v1443
      %v1500 = vunpack.c.l.b16 %v1444
      %v1501 = vunpack.c.l.b16 %v1445
      %v1502 = vunpack.c.l.b16 %v1446
      %v1503 = vpack.c.b16 %v1488, %v1487
      %v1504 = vpack.c.b16 %v1490, %v1489
      %v1505 = vpack.c.b16 %v1492, %v1491
      %v1506 = vpack.c.b16 %v1494, %v1493
      %v1507 = vpack.c.b16 %v1496, %v1495
      %v1508 = vpack.c.b16 %v1498, %v1497
      %v1509 = vpack.c.b16 %v1500, %v1499
      %v1510 = vpack.c.b16 %v1502, %v1501
      %1519 = vmatprep.subr.bf16.mxu0 0
      %1520 = vmatpush1.bf16.msra.mxu0 %v1503
      %1521 = vmatprep.subr.bf16.mxu0 0
      %1522 = vmatpush1.bf16.msra.mxu0 %v1504
      %1523 = vmatprep.subr.bf16.mxu0 0
      %1524 = vmatpush1.bf16.msra.mxu0 %v1505
      %1525 = vmatprep.subr.bf16.mxu0 0
      %1526 = vmatpush1.bf16.msra.mxu0 %v1506
      %1527 = vmatprep.subr.bf16.mxu0 0
      %1528 = vmatpush1.bf16.msra.mxu0 %v1507
      %1529 = vmatprep.subr.bf16.mxu0 0
      %1530 = vmatpush1.bf16.msra.mxu0 %v1508
      %1531 = vmatprep.subr.bf16.mxu0 0
      %1532 = vmatpush1.bf16.msra.mxu0 %v1509
      %1533 = vmatprep.subr.bf16.mxu0 0
      %1534 = vmatpush1.bf16.msra.mxu0 %v1510
      %1535 = vmatprep.subr.bf16.mxu0 0
      %1536 = vmatpush1.bf16.msra.mxu0 0
      %1537 = vmatprep.subr.bf16.mxu0 0
      %1538 = vmatpush1.bf16.msra.mxu0 0
      %1539 = vmatprep.subr.bf16.mxu0 0
      %1540 = vmatpush1.bf16.msra.mxu0 0
      %1541 = vmatprep.subr.bf16.mxu0 0
      %1542 = vmatpush1.bf16.msra.mxu0 0
      %1543 = vmatprep.subr.bf16.mxu0 0
      %1544 = vmatpush1.bf16.msra.mxu0 0
      %1545 = vmatprep.subr.bf16.mxu0 0
      %1546 = vmatpush1.bf16.msra.mxu0 0
      %1547 = vmatprep.subr.bf16.mxu0 0
      %1548 = vmatpush1.bf16.msra.mxu0 0
      %1549 = vmatprep.subr.bf16.mxu0 0
      %1550 = vmatpush1.bf16.msra.mxu0 0
      %1551 = vmatprep.mubr.bf16.mxu0 0
      %1552 = vmatmul.mubr.bf16.gmra.mrb[0].mxu0 %v1463
      %v1553 = vpop.f32.mrb[0].mxu0
      %v1554 = vadd.f32 0.0, %v1553
      %v1555 = vpop.f32.mrb[0].mxu0
      %v1556 = vpop.f32.mrb[0].mxu0
      %v1557 = vadd.f32 0.0, %v1556
      %v1558 = vpop.f32.mrb[0].mxu0
      %1559 = vmatprep.mubr.bf16.mxu0 0
      %1560 = vmatmul.mubr.bf16.gmra.mrb[0].mxu0 %v1464
      %v1561 = vpop.f32.mrb[0].mxu0
      %v1562 = vadd.f32 0.0, %v1561
      %v1563 = vpop.f32.mrb[0].mxu0
      %v1564 = vpop.f32.mrb[0].mxu0
      %v1565 = vadd.f32 0.0, %v1564
      %v1566 = vpop.f32.mrb[0].mxu0
      %1567 = vmatprep.mubr.bf16.mxu0 0
      %1568 = vmatmul.mubr.bf16.gmra.mrb[0].mxu0 %v1465
      %v1569 = vpop.f32.mrb[0].mxu0
      %v1570 = vadd.f32 0.0, %v1569
      %v1571 = vpop.f32.mrb[0].mxu0
      %v1572 = vpop.f32.mrb[0].mxu0
      %v1573 = vadd.f32 0.0, %v1572
      %v1574 = vpop.f32.mrb[0].mxu0
      %1575 = vmatprep.mubr.bf16.mxu0 0
      %1576 = vmatmul.mubr.bf16.gmra.mrb[0].mxu0 %v1466
      %v1577 = vpop.f32.mrb[0].mxu0
      %v1578 = vadd.f32 0.0, %v1577
      %v1579 = vpop.f32.mrb[0].mxu0
      %v1580 = vpop.f32.mrb[0].mxu0
      %v1581 = vadd.f32 0.0, %v1580
      %v1582 = vpop.f32.mrb[0].mxu0
      %1583 = vdwg.mxu0
      %v1584 = vadd.f32 %v1413, %v1554
      %v1585 = vadd.f32 %v1414, %v1557
      %v1586 = vadd.f32 %v1415, %v1562
      %v1587 = vadd.f32 %v1416, %v1565
      %v1588 = vadd.f32 %v1417, %v1570
      %v1589 = vadd.f32 %v1418, %v1573
      %v1590 = vadd.f32 %v1419, %v1578
      %v1591 = vadd.f32 %v1420, %v1581
      %s1592 = scalar_lea.vmem %s176, 80
      %v1593 = vld [vmem:[%s1592] sm:$0xf]
      %v1594 = vld [vmem:[%s1592 + $0x8] sm:$0xf]
      %v1595 = vld [vmem:[%s1592 + $0x10] sm:$0xf]
      %v1596 = vld [vmem:[%s1592 + $0x18] sm:$0xf]
      %v1597 = vld [vmem:[%s1592 + $0x20] sm:$0xf]
      %v1598 = vld [vmem:[%s1592 + $0x28] sm:$0xf]
      %v1599 = vld [vmem:[%s1592 + $0x30] sm:$0xf]
      %v1600 = vld [vmem:[%s1592 + $0x38] sm:$0xf]
      %s1601 = scalar_lea.vmem %s1, 448
      %v1602 = vld [vmem:[%s1601] sm:$0xf]
      %v1603 = vld [vmem:[%s1601 + $0x4] sm:$0xf]
      %v1604 = vld [vmem:[%s1601 + $0x8] sm:$0xf]
      %v1605 = vld [vmem:[%s1601 + $0xc] sm:$0xf]
      %v1606 = vld [vmem:[%s1601 + $0x10] sm:$0xf]
      %v1607 = vld [vmem:[%s1601 + $0x14] sm:$0xf]
      %v1608 = vld [vmem:[%s1601 + $0x18] sm:$0xf]
      %v1609 = vld [vmem:[%s1601 + $0x1c] sm:$0xf]
      %v1610 = vld [vmem:[%s1601 + $0x20] sm:$0xf]
      %v1611 = vld [vmem:[%s1601 + $0x24] sm:$0xf]
      %v1612 = vld [vmem:[%s1601 + $0x28] sm:$0xf]
      %v1613 = vld [vmem:[%s1601 + $0x2c] sm:$0xf]
      %v1614 = vld [vmem:[%s1601 + $0x30] sm:$0xf]
      %v1615 = vld [vmem:[%s1601 + $0x34] sm:$0xf]
      %v1616 = vld [vmem:[%s1601 + $0x38] sm:$0xf]
      %v1617 = vld [vmem:[%s1601 + $0x3c] sm:$0xf]
      %v1626 = vunpack.c.l.b16 %v1593
      %v1627 = vunpack.c.l.b16 %v1594
      %v1628 = vunpack.c.l.b16 %v1595
      %v1629 = vunpack.c.l.b16 %v1596
      %v1630 = vunpack.c.l.b16 %v1597
      %v1631 = vunpack.c.l.b16 %v1598
      %v1632 = vunpack.c.l.b16 %v1599
      %v1633 = vunpack.c.l.b16 %v1600
      %v1634 = vpack.c.b16 %v1627, %v1626
      %v1635 = vpack.c.b16 %v1629, %v1628
      %v1636 = vpack.c.b16 %v1631, %v1630
      %v1637 = vpack.c.b16 %v1633, %v1632
      %v1658 = vunpack.c.l.b16 %v1602
      %v1659 = vunpack.c.l.b16 %v1603
      %v1660 = vunpack.c.l.b16 %v1604
      %v1661 = vunpack.c.l.b16 %v1605
      %v1662 = vunpack.c.l.b16 %v1606
      %v1663 = vunpack.c.l.b16 %v1607
      %v1664 = vunpack.c.l.b16 %v1608
      %v1665 = vunpack.c.l.b16 %v1609
      %v1666 = vunpack.c.l.b16 %v1610
      %v1667 = vunpack.c.l.b16 %v1611
      %v1668 = vunpack.c.l.b16 %v1612
      %v1669 = vunpack.c.l.b16 %v1613
      %v1670 = vunpack.c.l.b16 %v1614
      %v1671 = vunpack.c.l.b16 %v1615
      %v1672 = vunpack.c.l.b16 %v1616
      %v1673 = vunpack.c.l.b16 %v1617
      %v1674 = vpack.c.b16 %v1659, %v1658
      %v1675 = vpack.c.b16 %v1661, %v1660
      %v1676 = vpack.c.b16 %v1663, %v1662
      %v1677 = vpack.c.b16 %v1665, %v1664
      %v1678 = vpack.c.b16 %v1667, %v1666
      %v1679 = vpack.c.b16 %v1669, %v1668
      %v1680 = vpack.c.b16 %v1671, %v1670
      %v1681 = vpack.c.b16 %v1673, %v1672
      %1690 = vmatprep.subr.bf16.mxu0 0
      %1691 = vmatpush1.bf16.msra.mxu0 %v1674
      %1692 = vmatprep.subr.bf16.mxu0 0
      %1693 = vmatpush1.bf16.msra.mxu0 %v1675
      %1694 = vmatprep.subr.bf16.mxu0 0
      %1695 = vmatpush1.bf16.msra.mxu0 %v1676
      %1696 = vmatprep.subr.bf16.mxu0 0
      %1697 = vmatpush1.bf16.msra.mxu0 %v1677
      %1698 = vmatprep.subr.bf16.mxu0 0
      %1699 = vmatpush1.bf16.msra.mxu0 %v1678
      %1700 = vmatprep.subr.bf16.mxu0 0
      %1701 = vmatpush1.bf16.msra.mxu0 %v1679
      %1702 = vmatprep.subr.bf16.mxu0 0
      %1703 = vmatpush1.bf16.msra.mxu0 %v1680
      %1704 = vmatprep.subr.bf16.mxu0 0
      %1705 = vmatpush1.bf16.msra.mxu0 %v1681
      %1706 = vmatprep.subr.bf16.mxu0 0
      %1707 = vmatpush1.bf16.msra.mxu0 0
      %1708 = vmatprep.subr.bf16.mxu0 0
      %1709 = vmatpush1.bf16.msra.mxu0 0
      %1710 = vmatprep.subr.bf16.mxu0 0
      %1711 = vmatpush1.bf16.msra.mxu0 0
      %1712 = vmatprep.subr.bf16.mxu0 0
      %1713 = vmatpush1.bf16.msra.mxu0 0
      %1714 = vmatprep.subr.bf16.mxu0 0
      %1715 = vmatpush1.bf16.msra.mxu0 0
      %1716 = vmatprep.subr.bf16.mxu0 0
      %1717 = vmatpush1.bf16.msra.mxu0 0
      %1718 = vmatprep.subr.bf16.mxu0 0
      %1719 = vmatpush1.bf16.msra.mxu0 0
      %1720 = vmatprep.subr.bf16.mxu0 0
      %1721 = vmatpush1.bf16.msra.mxu0 0
      %1722 = vmatprep.mubr.bf16.mxu0 0
      %1723 = vmatmul.mubr.bf16.gmra.mrb[0].mxu0 %v1634
      %v1724 = vpop.f32.mrb[0].mxu0
      %v1725 = vadd.f32 0.0, %v1724
      %v1726 = vpop.f32.mrb[0].mxu0
      %v1727 = vpop.f32.mrb[0].mxu0
      %v1728 = vadd.f32 0.0, %v1727
      %v1729 = vpop.f32.mrb[0].mxu0
      %1730 = vmatprep.mubr.bf16.mxu0 0
      %1731 = vmatmul.mubr.bf16.gmra.mrb[0].mxu0 %v1635
      %v1732 = vpop.f32.mrb[0].mxu0
      %v1733 = vadd.f32 0.0, %v1732
      %v1734 = vpop.f32.mrb[0].mxu0
      %v1735 = vpop.f32.mrb[0].mxu0
      %v1736 = vadd.f32 0.0, %v1735
      %v1737 = vpop.f32.mrb[0].mxu0
      %1738 = vmatprep.mubr.bf16.mxu0 0
      %1739 = vmatmul.mubr.bf16.gmra.mrb[0].mxu0 %v1636
      %v1740 = vpop.f32.mrb[0].mxu0
      %v1741 = vadd.f32 0.0, %v1740
      %v1742 = vpop.f32.mrb[0].mxu0
      %v1743 = vpop.f32.mrb[0].mxu0
      %v1744 = vadd.f32 0.0, %v1743
      %v1745 = vpop.f32.mrb[0].mxu0
      %1746 = vmatprep.mubr.bf16.mxu0 0
      %1747 = vmatmul.mubr.bf16.gmra.mrb[0].mxu0 %v1637
      %v1748 = vpop.f32.mrb[0].mxu0
      %v1749 = vadd.f32 0.0, %v1748
      %v1750 = vpop.f32.mrb[0].mxu0
      %v1751 = vpop.f32.mrb[0].mxu0
      %v1752 = vadd.f32 0.0, %v1751
      %v1753 = vpop.f32.mrb[0].mxu0
      %1754 = vdwg.mxu0
      %v1755 = vadd.f32 %v1584, %v1725
      %v1756 = vadd.f32 %v1585, %v1728
      %v1757 = vadd.f32 %v1586, %v1733
      %v1758 = vadd.f32 %v1587, %v1736
      %v1759 = vadd.f32 %v1588, %v1741
      %v1760 = vadd.f32 %v1589, %v1744
      %v1761 = vadd.f32 %v1590, %v1749
      %v1762 = vadd.f32 %v1591, %v1752
      %v1763 = vld [vmem:[%s1421] sm:$0xf]
      %v1764 = vld [vmem:[%s1421 + $0x4] sm:$0x1]
      %v1765 = vld [vmem:[%s1421 + $0x8] sm:$0xf]
      %v1766 = vld [vmem:[%s1421 + $0xc] sm:$0x1]
      %v1767 = vld [vmem:[%s1421 + $0x10] sm:$0xf]
      %v1768 = vld [vmem:[%s1421 + $0x14] sm:$0x1]
      %v1769 = vld [vmem:[%s1421 + $0x18] sm:$0xf]
      %v1770 = vld [vmem:[%s1421 + $0x1c] sm:$0x1]
      %v1771 = vld [vmem:[%s1421 + $0x20] sm:$0xf]
      %v1772 = vld [vmem:[%s1421 + $0x24] sm:$0x1]
      %v1773 = vld [vmem:[%s1421 + $0x28] sm:$0xf]
      %v1774 = vld [vmem:[%s1421 + $0x2c] sm:$0x1]
      %v1775 = vld [vmem:[%s1421 + $0x30] sm:$0xf]
      %v1776 = vld [vmem:[%s1421 + $0x34] sm:$0x1]
      %v1777 = vld [vmem:[%s1421 + $0x38] sm:$0xf]
      %v1778 = vld [vmem:[%s1421 + $0x3c] sm:$0x1]
      %v1780 = vshrl.u32 %v1763, 16
      %v1782 = vrot.slane %v1780, 4
      %v1783 = vshll.u32 %v1763, 16
      %v1785 = vrot.slane %v1783, 5
      %v1786 = vor.u32 %v1782, %v1785
      %v1787 = vrot.slane %v1786, 4
      %v1789 = vshll.u32 %v1764, 16
      %v1791 = vrot.slane %v1789, 5
      %v1792 = vsel %vm530, %v1787, %v1791
      %v1794 = vshrl.u32 %v1765, 16
      %v1796 = vrot.slane %v1794, 4
      %v1797 = vshll.u32 %v1765, 16
      %v1799 = vrot.slane %v1797, 5
      %v1800 = vor.u32 %v1796, %v1799
      %v1801 = vrot.slane %v1800, 4
      %v1803 = vshll.u32 %v1766, 16
      %v1805 = vrot.slane %v1803, 5
      %v1806 = vsel %vm530, %v1801, %v1805
      %v1808 = vshrl.u32 %v1767, 16
      %v1810 = vrot.slane %v1808, 4
      %v1811 = vshll.u32 %v1767, 16
      %v1813 = vrot.slane %v1811, 5
      %v1814 = vor.u32 %v1810, %v1813
      %v1815 = vrot.slane %v1814, 4
      %v1817 = vshll.u32 %v1768, 16
      %v1819 = vrot.slane %v1817, 5
      %v1820 = vsel %vm530, %v1815, %v1819
      %v1822 = vshrl.u32 %v1769, 16
      %v1824 = vrot.slane %v1822, 4
      %v1825 = vshll.u32 %v1769, 16
      %v1827 = vrot.slane %v1825, 5
      %v1828 = vor.u32 %v1824, %v1827
      %v1829 = vrot.slane %v1828, 4
      %v1831 = vshll.u32 %v1770, 16
      %v1833 = vrot.slane %v1831, 5
      %v1834 = vsel %vm530, %v1829, %v1833
      %v1836 = vshrl.u32 %v1771, 16
      %v1838 = vrot.slane %v1836, 4
      %v1839 = vshll.u32 %v1771, 16
      %v1841 = vrot.slane %v1839, 5
      %v1842 = vor.u32 %v1838, %v1841
      %v1843 = vrot.slane %v1842, 4
      %v1845 = vshll.u32 %v1772, 16
      %v1847 = vrot.slane %v1845, 5
      %v1848 = vsel %vm530, %v1843, %v1847
      %v1850 = vshrl.u32 %v1773, 16
      %v1852 = vrot.slane %v1850, 4
      %v1853 = vshll.u32 %v1773, 16
      %v1855 = vrot.slane %v1853, 5
      %v1856 = vor.u32 %v1852, %v1855
      %v1857 = vrot.slane %v1856, 4
      %v1859 = vshll.u32 %v1774, 16
      %v1861 = vrot.slane %v1859, 5
      %v1862 = vsel %vm530, %v1857, %v1861
      %v1864 = vshrl.u32 %v1775, 16
      %v1866 = vrot.slane %v1864, 4
      %v1867 = vshll.u32 %v1775, 16
      %v1869 = vrot.slane %v1867, 5
      %v1870 = vor.u32 %v1866, %v1869
      %v1871 = vrot.slane %v1870, 4
      %v1873 = vshll.u32 %v1776, 16
      %v1875 = vrot.slane %v1873, 5
      %v1876 = vsel %vm530, %v1871, %v1875
      %v1878 = vshrl.u32 %v1777, 16
      %v1880 = vrot.slane %v1878, 4
      %v1881 = vshll.u32 %v1777, 16
      %v1883 = vrot.slane %v1881, 5
      %v1884 = vor.u32 %v1880, %v1883
      %v1885 = vrot.slane %v1884, 4
      %v1887 = vshll.u32 %v1778, 16
      %v1889 = vrot.slane %v1887, 5
      %v1890 = vsel %vm530, %v1885, %v1889
      %s1891 = scalar_lea.vmem %s1, 512
      %v1892 = vld [vmem:[%s1891] sm:$0xf]
      %v1893 = vld [vmem:[%s1891 + $0x4] sm:$0xf]
      %v1894 = vld [vmem:[%s1891 + $0x8] sm:$0xf]
      %v1895 = vld [vmem:[%s1891 + $0xc] sm:$0xf]
      %v1896 = vld [vmem:[%s1891 + $0x10] sm:$0xf]
      %v1897 = vld [vmem:[%s1891 + $0x14] sm:$0xf]
      %v1898 = vld [vmem:[%s1891 + $0x18] sm:$0xf]
      %v1899 = vld [vmem:[%s1891 + $0x1c] sm:$0xf]
      %v1900 = vld [vmem:[%s1891 + $0x20] sm:$0xf]
      %v1901 = vld [vmem:[%s1891 + $0x24] sm:$0xf]
      %v1902 = vld [vmem:[%s1891 + $0x28] sm:$0xf]
      %v1903 = vld [vmem:[%s1891 + $0x2c] sm:$0xf]
      %v1904 = vld [vmem:[%s1891 + $0x30] sm:$0xf]
      %v1905 = vld [vmem:[%s1891 + $0x34] sm:$0xf]
      %v1906 = vld [vmem:[%s1891 + $0x38] sm:$0xf]
      %v1907 = vld [vmem:[%s1891 + $0x3c] sm:$0xf]
      %v1908 = vunpack.c.l.b16 %v1792
      %v1909 = vunpack.c.l.b16 %v1806
      %v1910 = vunpack.c.l.b16 %v1820
      %v1911 = vunpack.c.l.b16 %v1834
      %v1912 = vunpack.c.l.b16 %v1848
      %v1913 = vunpack.c.l.b16 %v1862
      %v1914 = vunpack.c.l.b16 %v1876
      %v1915 = vunpack.c.l.b16 %v1890
      %v1916 = vpack.c.b16 %v1909, %v1908
      %v1917 = vpack.c.b16 %v1911, %v1910
      %v1918 = vpack.c.b16 %v1913, %v1912
      %v1919 = vpack.c.b16 %v1915, %v1914
      %v1940 = vunpack.c.l.b16 %v1892
      %v1941 = vunpack.c.l.b16 %v1893
      %v1942 = vunpack.c.l.b16 %v1894
      %v1943 = vunpack.c.l.b16 %v1895
      %v1944 = vunpack.c.l.b16 %v1896
      %v1945 = vunpack.c.l.b16 %v1897
      %v1946 = vunpack.c.l.b16 %v1898
      %v1947 = vunpack.c.l.b16 %v1899
      %v1948 = vunpack.c.l.b16 %v1900
      %v1949 = vunpack.c.l.b16 %v1901
      %v1950 = vunpack.c.l.b16 %v1902
      %v1951 = vunpack.c.l.b16 %v1903
      %v1952 = vunpack.c.l.b16 %v1904
      %v1953 = vunpack.c.l.b16 %v1905
      %v1954 = vunpack.c.l.b16 %v1906
      %v1955 = vunpack.c.l.b16 %v1907
      %v1956 = vpack.c.b16 %v1941, %v1940
      %v1957 = vpack.c.b16 %v1943, %v1942
      %v1958 = vpack.c.b16 %v1945, %v1944
      %v1959 = vpack.c.b16 %v1947, %v1946
      %v1960 = vpack.c.b16 %v1949, %v1948
      %v1961 = vpack.c.b16 %v1951, %v1950
      %v1962 = vpack.c.b16 %v1953, %v1952
      %v1963 = vpack.c.b16 %v1955, %v1954
      %1972 = vmatprep.subr.bf16.mxu0 0
      %1973 = vmatpush1.bf16.msra.mxu0 %v1956
      %1974 = vmatprep.subr.bf16.mxu0 0
      %1975 = vmatpush1.bf16.msra.mxu0 %v1957
      %1976 = vmatprep.subr.bf16.mxu0 0
      %1977 = vmatpush1.bf16.msra.mxu0 %v1958
      %1978 = vmatprep.subr.bf16.mxu0 0
      %1979 = vmatpush1.bf16.msra.mxu0 %v1959
      %1980 = vmatprep.subr.bf16.mxu0 0
      %1981 = vmatpush1.bf16.msra.mxu0 %v1960
      %1982 = vmatprep.subr.bf16.mxu0 0
      %1983 = vmatpush1.bf16.msra.mxu0 %v1961
      %1984 = vmatprep.subr.bf16.mxu0 0
      %1985 = vmatpush1.bf16.msra.mxu0 %v1962
      %1986 = vmatprep.subr.bf16.mxu0 0
      %1987 = vmatpush1.bf16.msra.mxu0 %v1963
      %1988 = vmatprep.subr.bf16.mxu0 0
      %1989 = vmatpush1.bf16.msra.mxu0 0
      %1990 = vmatprep.subr.bf16.mxu0 0
      %1991 = vmatpush1.bf16.msra.mxu0 0
      %1992 = vmatprep.subr.bf16.mxu0 0
      %1993 = vmatpush1.bf16.msra.mxu0 0
      %1994 = vmatprep.subr.bf16.mxu0 0
      %1995 = vmatpush1.bf16.msra.mxu0 0
      %1996 = vmatprep.subr.bf16.mxu0 0
      %1997 = vmatpush1.bf16.msra.mxu0 0
      %1998 = vmatprep.subr.bf16.mxu0 0
      %1999 = vmatpush1.bf16.msra.mxu0 0
      %2000 = vmatprep.subr.bf16.mxu0 0
      %2001 = vmatpush1.bf16.msra.mxu0 0
      %2002 = vmatprep.subr.bf16.mxu0 0
      %2003 = vmatpush1.bf16.msra.mxu0 0
      %2004 = vmatprep.mubr.bf16.mxu0 0
      %2005 = vmatmul.mubr.bf16.gmra.mrb[0].mxu0 %v1916
      %v2006 = vpop.f32.mrb[0].mxu0
      %v2007 = vadd.f32 0.0, %v2006
      %v2008 = vpop.f32.mrb[0].mxu0
      %v2009 = vpop.f32.mrb[0].mxu0
      %v2010 = vadd.f32 0.0, %v2009
      %v2011 = vpop.f32.mrb[0].mxu0
      %2012 = vmatprep.mubr.bf16.mxu0 0
      %2013 = vmatmul.mubr.bf16.gmra.mrb[0].mxu0 %v1917
      %v2014 = vpop.f32.mrb[0].mxu0
      %v2015 = vadd.f32 0.0, %v2014
      %v2016 = vpop.f32.mrb[0].mxu0
      %v2017 = vpop.f32.mrb[0].mxu0
      %v2018 = vadd.f32 0.0, %v2017
      %v2019 = vpop.f32.mrb[0].mxu0
      %2020 = vmatprep.mubr.bf16.mxu0 0
      %2021 = vmatmul.mubr.bf16.gmra.mrb[0].mxu0 %v1918
      %v2022 = vpop.f32.mrb[0].mxu0
      %v2023 = vadd.f32 0.0, %v2022
      %v2024 = vpop.f32.mrb[0].mxu0
      %v2025 = vpop.f32.mrb[0].mxu0
      %v2026 = vadd.f32 0.0, %v2025
      %v2027 = vpop.f32.mrb[0].mxu0
      %2028 = vmatprep.mubr.bf16.mxu0 0
      %2029 = vmatmul.mubr.bf16.gmra.mrb[0].mxu0 %v1919
      %v2030 = vpop.f32.mrb[0].mxu0
      %v2031 = vadd.f32 0.0, %v2030
      %v2032 = vpop.f32.mrb[0].mxu0
      %v2033 = vpop.f32.mrb[0].mxu0
      %v2034 = vadd.f32 0.0, %v2033
      %v2035 = vpop.f32.mrb[0].mxu0
      %2036 = vdwg.mxu0
      %v2037 = vadd.f32 %v1755, %v2007
      %v2038 = vadd.f32 %v1756, %v2010
      %v2039 = vadd.f32 %v1757, %v2015
      %v2040 = vadd.f32 %v1758, %v2018
      %v2041 = vadd.f32 %v1759, %v2023
      %v2042 = vadd.f32 %v1760, %v2026
      %v2043 = vadd.f32 %v1761, %v2031
      %v2044 = vadd.f32 %v1762, %v2034
      %2045 = vst [vmem:[%s182] sm:$0xff] %v2037
      %2046 = vst [vmem:[%s182 + $0x8] sm:$0xff] %v2038
      %2047 = vst [vmem:[%s182 + $0x10] sm:$0xff] %v2039
      %2048 = vst [vmem:[%s182 + $0x18] sm:$0xff] %v2040
      %2049 = vst [vmem:[%s182 + $0x20] sm:$0xff] %v2041
      %2050 = vst [vmem:[%s182 + $0x28] sm:$0xff] %v2042
      %2051 = vst [vmem:[%s182 + $0x30] sm:$0xff] %v2043
      %2052 = vst [vmem:[%s182 + $0x38] sm:$0xff] %v2044
      %v2053 = vadd.f32 %v2037, %v2038
      %v2054 = vadd.f32 %v2053, %v2039
      %v2055 = vadd.f32 %v2054, %v2040
      %v2056 = vadd.f32 %v2055, %v2041
      %v2057 = vadd.f32 %v2056, %v2042
      %v2058 = vadd.f32 %v2057, %v2043
      %v2059 = vadd.f32 %v2058, %v2044
      %v2060 = vrot.slane %v2059, 4
      %v2061 = vadd.f32 %v2059, %v2060
      %v2062 = vrot.slane %v2061, 2
      %v2063 = vadd.f32 %v2061, %v2062
      %v2064 = vrot.slane %v2063, 1
      %v2065 = vadd.f32 %v2063, %v2064
      %v2066 = vmul.f32 %v2037, %v2037
      %v2067 = vmul.f32 %v2038, %v2038
      %v2068 = vmul.f32 %v2039, %v2039
      %v2069 = vmul.f32 %v2040, %v2040
      %v2070 = vmul.f32 %v2041, %v2041
      %v2071 = vmul.f32 %v2042, %v2042
      %v2072 = vmul.f32 %v2043, %v2043
      %v2073 = vmul.f32 %v2044, %v2044
      %v2074 = vadd.f32 %v2066, %v2067
      %v2075 = vadd.f32 %v2074, %v2068
      %v2076 = vadd.f32 %v2075, %v2069
      %v2077 = vadd.f32 %v2076, %v2070
      %v2078 = vadd.f32 %v2077, %v2071
      %v2079 = vadd.f32 %v2078, %v2072
      %v2080 = vadd.f32 %v2079, %v2073
      %v2081 = vrot.slane %v2080, 4
      %v2082 = vadd.f32 %v2080, %v2081
      %v2083 = vrot.slane %v2082, 2
      %v2084 = vadd.f32 %v2082, %v2083
      %v2085 = vrot.slane %v2084, 1
      %v2086 = vadd.f32 %v2084, %v2085
      %vm2087 = vcmask 1040384
      %v2088 = vsel %vm2087, %v2065, %v2086
      %2089 = vst [vmem:[%s186] sm:$0x3] %v2088
      %p2090 = scmp.lt.s32.totalorder %s15, 1
      %s2091 = scalar_select %p2090, %s15, 1
      %s2092 = smul.addr %s2091, 8
      %s2093 = smul.addr %s2092, 8
      %s2094 = scalar_lea.vmem %s2, %s2093
      %p2095 = scmp.lt.s32.totalorder %s15, 1
      %s2096 = scalar_select %p2095, %s15, 1
      %s2097 = smul.addr %s2096, 2
      %s2098 = scalar_lea.vmem %s3, %s2097
      // Predicated region
      $region29: #{basic_block_forward.3} parent=27 // pred_check
        %p2099 = pneg %p80
      $region30: #{basic_block_forward.3} parent=27 // pred_check_branch
        %2101 = sbr.rel (%p2099) target = $region32
      $region31: #{basic_block_forward.3} parent=27 // pred_region
        _
      $region32: #{basic_block_forward.3} parent=27 // pred_fallthru
        _
      // Predicated region
      $region33: #{basic_block_forward.3} parent=27 // pred_check
        %p2102 = pneg %p106
      $region34: #{basic_block_forward.3} parent=27 // pred_check_branch
        %2104 = sbr.rel (%p2102) target = $region36
      $region35: #{basic_block_forward.3} parent=27 // pred_region
        _
      $region36: #{basic_block_forward.3} parent=27 // pred_fallthru
        _
    $region28: #{basic_block_forward.3} parent=5 // pred_fallthru
      _
    %p2105 = scmp.le.s32.totalorder 2, %s10
    // Predicated region
    $region37: #{basic_block_forward.3} parent=5 // pred_check
      %p2106 = pneg %p2105
    $region38: #{basic_block_forward.3} parent=5 // pred_check_branch
      %2108 = sbr.rel (%p2106) target = $region40
    $region39: #{basic_block_forward.3} parent=5 // pred_region
      %s2109 = ssub.s32 %s10, 2
      // Predicated region
      $region41: #{basic_block_forward.3} parent=39 // pred_check
        %p2110 = pneg %p86
      $region42: #{basic_block_forward.3} parent=39 // pred_check_branch
        %2112 = sbr.rel (%p2110) target = $region44
      $region43: #{basic_block_forward.3} parent=39 // pred_region
        %p2113 = scmp.lt.s32.totalorder %s16, 1
        %s2114 = scalar_select %p2113, %s16, 1
        %s2115 = smul.addr %s2114, 8
        %s2116 = smul.addr %s2115, 8
        %s2117 = scalar_lea.vmem %s2, %s2116
      $region44: #{basic_block_forward.3} parent=39 // pred_fallthru
        _
      // Predicated region
      $region45: #{basic_block_forward.3} parent=39 // pred_check
        %p2118 = pneg %p112
      $region46: #{basic_block_forward.3} parent=39 // pred_check_branch
        %2120 = sbr.rel (%p2118) target = $region48
      $region47: #{basic_block_forward.3} parent=39 // pred_region
        %p2121 = scmp.lt.s32.totalorder %s16, 1
        %s2122 = scalar_select %p2121, %s16, 1
        %s2123 = smul.addr %s2122, 2
        %s2124 = scalar_lea.vmem %s3, %s2123
      $region48: #{basic_block_forward.3} parent=39 // pred_fallthru
        _
    $region40: #{basic_block_forward.3} parent=5 // pred_fallthru
      _
  $region6: #{basic_block_forward.3} parent=0 // loop_footer
    %s14 = sadd.s32 1, %s10
  $region7: #{basic_block_forward.3} parent=0 // loop_footer_branch
    %9 = sbr.rel target = $region3
  $region8: #{basic_block_forward.3} parent=0 // loop_exit
    _

// kernel: basic_block_forward.4
$region0: #{basic_block_forward.4}
  #allocation0 [shape = 'u32[]', space=smem, size = 0x4, offset = 0x4, fixed_abs, tag = 'smem constant byte address 0x4 - core index']
  #allocation1 [shape = 'u32[144,128]{1,0:T(1,128)}', space=vmem, size = 0x12000, scoped, tag = 'internal scratch']
  #allocation2 [shape = 'f32[10,10,128]{2,1,0:T(8,128)}', space=vmem, size = 0x14000, scoped, tag = 'scratch operand']
  %s0 = inlined_call_operand.vmem [shape: f32[2,8,8,128], index: 0, kind: input, shape index: {}]
  %s1 = inlined_call_operand.vmem [shape: f32[2,128], index: 1, kind: input, shape index: {}]
  %s2 = inlined_call_operand.vmem [shape: bf16[9,128,128], index: 2, kind: input, shape index: {}]
  %s3 = inlined_call_operand.vmem [shape: bf16[8,9,9,128], index: 3, kind: input, shape index: {}]
  %s4 = inlined_call_operand.vmem [shape: bf16[128,128], index: 4, kind: input, shape index: {}]
  %s5 = inlined_call_operand.vmem [shape: f32[2,64,128], index: 5, kind: output, shape index: {0}]
  %s6 = inlined_call_operand.vmem [shape: f32[2,64,128], index: 6, kind: output, shape index: {1}]
  %s7 = inlined_call_operand.vmem [shape: f32[2,2,128], index: 7, kind: output, shape index: {2}]
  %s8 = inlined_call_operand.vmem [shape: f32[2,2,128], index: 8, kind: output, shape index: {3}]
  %9 = xla_tuple %s5, %s6, %s7, %s8
  %s10 = sld [smem:[#allocation0]]
  $region77: #{basic_block_forward.4} parent=0
    _
  %s12 = ssub.s32 1, %s10
  %s13 = scalar_select 0, %s12, %s10
  loop: start=0, step=1, limit=4
  $region2: #{basic_block_forward.4} parent=0 // loop_pre_header
    _
  $region3: #{basic_block_forward.4} parent=0 // loop_header
    %s15 = sphi 0, %s19
    %p16 = scmp.ge.s32.totalorder %s15, 4
    %s25 = sphi 0, %s27
    %s28 = sphi 0, %s25
    %s29 = sphi 0, %s28
    %s45 = sphi 0, %s29
    %s49 = sphi 0, %s49
    %s51 = sphi 0, %s49
    %s52 = sphi 0, %s51
    %s66 = sphi 0, %s52
    %s70 = sphi 0, %s70
    %s72 = sphi 0, %s70
    %s73 = sphi 0, %s72
    %s87 = sphi 0, %s73
    %s93 = sphi 0, %s95
    %s96 = sphi 0, %s93
    %s97 = sphi 0, %s96
    %s113 = sphi 0, %s97
    %s117 = sphi 0, %s117
    %s119 = sphi 0, %s117
    %s120 = sphi 0, %s119
    %s134 = sphi 0, %s120
    %s140 = sphi 0, %s142
    %s143 = sphi 0, %s140
    %s144 = sphi 0, %s143
    %s160 = sphi 0, %s144
    %s166 = sphi 0, %s168
    %s169 = sphi 0, %s166
    %s170 = sphi 0, %s169
    %s186 = sphi 0, %s170
    %s192 = sphi 0, %s194
    %s195 = sphi 0, %s192
    %s196 = sphi 0, %s195
    %s212 = sphi 0, %s196
    %s218 = sphi 0, %s220
    %s221 = sphi 0, %s218
    %s222 = sphi 0, %s221
    %s238 = sphi 0, %s222
  $region4: #{basic_block_forward.4} parent=0 // loop_header_branch
    %18 = sbr.rel (%p16) target = $region8
  $region5: #{basic_block_forward.4} parent=0 // loop_body
    %s20 = ssub.s32 %s15, 1
    %s21 = ssub.s32 %s15, 2
    %s22 = sadd.s32 %s15, 1
    %s23 = ssub.s32 %s15, %s22
    %p24 = scmp.eq.s32.totalorder %s23, 0
    %s26 = sadd.s32 %s25, 1
    %s27 = scalar_select %p24, %s25, %s26
    %p30 = pneg %p24
    %p31 = scmp.eq.s32.totalorder %s15, 1
    %p32 = por %p30, %p31
    %p33 = scmp.ne.s32.totalorder %s25, %s28
    %p34 = scmp.eq.s32.totalorder %s15, 0
    %p35 = por %p33, %p34
    %p36 = scmp.ne.s32.totalorder %s25, %s28
    %p37 = scmp.eq.s32.totalorder %s20, 1
    %p38 = por %p36, %p37
    %p39 = scmp.ne.s32.totalorder %s28, %s29
    %p40 = scmp.eq.s32.totalorder %s20, 0
    %p41 = por %p39, %p40
    %p42 = scmp.ne.s32.totalorder %s28, %s29
    %p43 = scmp.eq.s32.totalorder %s21, 1
    %p44 = por %p42, %p43
    %p46 = scmp.ne.s32.totalorder %s29, %s45
    %p47 = scmp.eq.s32.totalorder %s21, 0
    %p48 = por %p46, %p47
    %s50 = sadd.s32 %s49, 1
    %p53 = scmp.eq.s32.totalorder %s15, 1
    %p54 = scmp.ne.s32.totalorder %s49, %s51
    %p55 = scmp.eq.s32.totalorder %s15, 0
    %p56 = por %p54, %p55
    %p57 = scmp.ne.s32.totalorder %s49, %s51
    %p58 = scmp.eq.s32.totalorder %s20, 1
    %p59 = por %p57, %p58
    %p60 = scmp.ne.s32.totalorder %s51, %s52
    %p61 = scmp.eq.s32.totalorder %s20, 0
    %p62 = por %p60, %p61
    %p63 = scmp.ne.s32.totalorder %s51, %s52
    %p64 = scmp.eq.s32.totalorder %s21, 1
    %p65 = por %p63, %p64
    %p67 = scmp.ne.s32.totalorder %s52, %s66
    %p68 = scmp.eq.s32.totalorder %s21, 0
    %p69 = por %p67, %p68
    %s71 = sadd.s32 %s70, 1
    %p74 = scmp.eq.s32.totalorder %s15, 1
    %p75 = scmp.ne.s32.totalorder %s70, %s72
    %p76 = scmp.eq.s32.totalorder %s15, 0
    %p77 = por %p75, %p76
    %p78 = scmp.ne.s32.totalorder %s70, %s72
    %p79 = scmp.eq.s32.totalorder %s20, 1
    %p80 = por %p78, %p79
    %p81 = scmp.ne.s32.totalorder %s72, %s73
    %p82 = scmp.eq.s32.totalorder %s20, 0
    %p83 = por %p81, %p82
    %p84 = scmp.ne.s32.totalorder %s72, %s73
    %p85 = scmp.eq.s32.totalorder %s21, 1
    %p86 = por %p84, %p85
    %p88 = scmp.ne.s32.totalorder %s73, %s87
    %p89 = scmp.eq.s32.totalorder %s21, 0
    %p90 = por %p88, %p89
    %s91 = ssub.s32 %s15, %s22
    %p92 = scmp.eq.s32.totalorder %s91, 0
    %s94 = sadd.s32 %s93, 1
    %s95 = scalar_select %p92, %s93, %s94
    %p98 = pneg %p92
    %p99 = scmp.eq.s32.totalorder %s15, 1
    %p100 = por %p98, %p99
    %p101 = scmp.ne.s32.totalorder %s93, %s96
    %p102 = scmp.eq.s32.totalorder %s15, 0
    %p103 = por %p101, %p102
    %p104 = scmp.ne.s32.totalorder %s93, %s96
    %p105 = scmp.eq.s32.totalorder %s20, 1
    %p106 = por %p104, %p105
    %p107 = scmp.ne.s32.totalorder %s96, %s97
    %p108 = scmp.eq.s32.totalorder %s20, 0
    %p109 = por %p107, %p108
    %p110 = scmp.ne.s32.totalorder %s96, %s97
    %p111 = scmp.eq.s32.totalorder %s21, 1
    %p112 = por %p110, %p111
    %p114 = scmp.ne.s32.totalorder %s97, %s113
    %p115 = scmp.eq.s32.totalorder %s21, 0
    %p116 = por %p114, %p115
    %s118 = sadd.s32 %s117, 1
    %p121 = scmp.eq.s32.totalorder %s15, 1
    %p122 = scmp.ne.s32.totalorder %s117, %s119
    %p123 = scmp.eq.s32.totalorder %s15, 0
    %p124 = por %p122, %p123
    %p125 = scmp.ne.s32.totalorder %s117, %s119
    %p126 = scmp.eq.s32.totalorder %s20, 1
    %p127 = por %p125, %p126
    %p128 = scmp.ne.s32.totalorder %s119, %s120
    %p129 = scmp.eq.s32.totalorder %s20, 0
    %p130 = por %p128, %p129
    %p131 = scmp.ne.s32.totalorder %s119, %s120
    %p132 = scmp.eq.s32.totalorder %s21, 1
    %p133 = por %p131, %p132
    %p135 = scmp.ne.s32.totalorder %s120, %s134
    %p136 = scmp.eq.s32.totalorder %s21, 0
    %p137 = por %p135, %p136
    %s138 = ssub.s32 %s15, %s22
    %p139 = scmp.eq.s32.totalorder %s138, 0
    %s141 = sadd.s32 %s140, 1
    %s142 = scalar_select %p139, %s140, %s141
    %p145 = pneg %p139
    %p146 = scmp.eq.s32.totalorder %s15, 1
    %p147 = por %p145, %p146
    %p148 = scmp.ne.s32.totalorder %s140, %s143
    %p149 = scmp.eq.s32.totalorder %s15, 0
    %p150 = por %p148, %p149
    %p151 = scmp.ne.s32.totalorder %s140, %s143
    %p152 = scmp.eq.s32.totalorder %s20, 1
    %p153 = por %p151, %p152
    %p154 = scmp.ne.s32.totalorder %s143, %s144
    %p155 = scmp.eq.s32.totalorder %s20, 0
    %p156 = por %p154, %p155
    %p157 = scmp.ne.s32.totalorder %s143, %s144
    %p158 = scmp.eq.s32.totalorder %s21, 1
    %p159 = por %p157, %p158
    %p161 = scmp.ne.s32.totalorder %s144, %s160
    %p162 = scmp.eq.s32.totalorder %s21, 0
    %p163 = por %p161, %p162
    %s164 = ssub.s32 %s15, %s22
    %p165 = scmp.eq.s32.totalorder %s164, 0
    %s167 = sadd.s32 %s166, 1
    %s168 = scalar_select %p165, %s166, %s167
    %p171 = pneg %p165
    %p172 = scmp.eq.s32.totalorder %s15, 1
    %p173 = por %p171, %p172
    %p174 = scmp.ne.s32.totalorder %s166, %s169
    %p175 = scmp.eq.s32.totalorder %s15, 0
    %p176 = por %p174, %p175
    %p177 = scmp.ne.s32.totalorder %s166, %s169
    %p178 = scmp.eq.s32.totalorder %s20, 1
    %p179 = por %p177, %p178
    %p180 = scmp.ne.s32.totalorder %s169, %s170
    %p181 = scmp.eq.s32.totalorder %s20, 0
    %p182 = por %p180, %p181
    %p183 = scmp.ne.s32.totalorder %s169, %s170
    %p184 = scmp.eq.s32.totalorder %s21, 1
    %p185 = por %p183, %p184
    %p187 = scmp.ne.s32.totalorder %s170, %s186
    %p188 = scmp.eq.s32.totalorder %s21, 0
    %p189 = por %p187, %p188
    %s190 = ssub.s32 %s15, %s22
    %p191 = scmp.eq.s32.totalorder %s190, 0
    %s193 = sadd.s32 %s192, 1
    %s194 = scalar_select %p191, %s192, %s193
    %p197 = pneg %p191
    %p198 = scmp.eq.s32.totalorder %s15, 1
    %p199 = por %p197, %p198
    %p200 = scmp.ne.s32.totalorder %s192, %s195
    %p201 = scmp.eq.s32.totalorder %s15, 0
    %p202 = por %p200, %p201
    %p203 = scmp.ne.s32.totalorder %s192, %s195
    %p204 = scmp.eq.s32.totalorder %s20, 1
    %p205 = por %p203, %p204
    %p206 = scmp.ne.s32.totalorder %s195, %s196
    %p207 = scmp.eq.s32.totalorder %s20, 0
    %p208 = por %p206, %p207
    %p209 = scmp.ne.s32.totalorder %s195, %s196
    %p210 = scmp.eq.s32.totalorder %s21, 1
    %p211 = por %p209, %p210
    %p213 = scmp.ne.s32.totalorder %s196, %s212
    %p214 = scmp.eq.s32.totalorder %s21, 0
    %p215 = por %p213, %p214
    %s216 = ssub.s32 %s15, %s22
    %p217 = scmp.eq.s32.totalorder %s216, 0
    %s219 = sadd.s32 %s218, 1
    %s220 = scalar_select %p217, %s218, %s219
    %p223 = pneg %p217
    %p224 = scmp.eq.s32.totalorder %s15, 1
    %p225 = por %p223, %p224
    %p226 = scmp.ne.s32.totalorder %s218, %s221
    %p227 = scmp.eq.s32.totalorder %s15, 0
    %p228 = por %p226, %p227
    %p229 = scmp.ne.s32.totalorder %s218, %s221
    %p230 = scmp.eq.s32.totalorder %s20, 1
    %p231 = por %p229, %p230
    %p232 = scmp.ne.s32.totalorder %s221, %s222
    %p233 = scmp.eq.s32.totalorder %s20, 0
    %p234 = por %p232, %p233
    %p235 = scmp.ne.s32.totalorder %s221, %s222
    %p236 = scmp.eq.s32.totalorder %s21, 1
    %p237 = por %p235, %p236
    %p239 = scmp.ne.s32.totalorder %s222, %s238
    %p240 = scmp.eq.s32.totalorder %s21, 0
    %p241 = por %p239, %p240
    %p242 = scmp.le.s32.totalorder 1, %s15
    %p243 = scmp.lt.s32.totalorder %s15, 3
    %p244 = pnand %p242, %p243
    %p245 = pneg %p244
    // Predicated region
    $region9: #{basic_block_forward.4} parent=5 // pred_check
      _
    $region10: #{basic_block_forward.4} parent=5 // pred_check_branch
      %247 = sbr.rel (%p244) target = $region12
    $region11: #{basic_block_forward.4} parent=5 // pred_region
      %s248 = ssub.s32 %s15, 1
      // Predicated region
      $region13: #{basic_block_forward.4} parent=11 // pred_check
        %p249 = pneg %p62
      $region14: #{basic_block_forward.4} parent=11 // pred_check_branch
        %251 = sbr.rel (%p249) target = $region16
      $region15: #{basic_block_forward.4} parent=11 // pred_region
        _
      $region16: #{basic_block_forward.4} parent=11 // pred_fallthru
        _
      // Predicated region
      $region17: #{basic_block_forward.4} parent=11 // pred_check
        %p252 = pneg %p83
      $region18: #{basic_block_forward.4} parent=11 // pred_check_branch
        %254 = sbr.rel (%p252) target = $region20
      $region19: #{basic_block_forward.4} parent=11 // pred_region
        _
      $region20: #{basic_block_forward.4} parent=11 // pred_fallthru
        _
      // Predicated region
      $region21: #{basic_block_forward.4} parent=11 // pred_check
        %p255 = pneg %p130
      $region22: #{basic_block_forward.4} parent=11 // pred_check_branch
        %257 = sbr.rel (%p255) target = $region24
      $region23: #{basic_block_forward.4} parent=11 // pred_region
        _
      $region24: #{basic_block_forward.4} parent=11 // pred_fallthru
        _
    $region12: #{basic_block_forward.4} parent=5 // pred_fallthru
      _
    %p258 = scmp.lt.s32.totalorder %s15, 2
    // Predicated region
    $region25: #{basic_block_forward.4} parent=5 // pred_check
      %p259 = pneg %p258
    $region26: #{basic_block_forward.4} parent=5 // pred_check_branch
      %261 = sbr.rel (%p259) target = $region28
    $region27: #{basic_block_forward.4} parent=5 // pred_region
      // Predicated region
      $region29: #{basic_block_forward.4} parent=27 // pred_check
        %p262 = pneg %p35
      $region30: #{basic_block_forward.4} parent=27 // pred_check_branch
        %264 = sbr.rel (%p262) target = $region32
      $region31: #{basic_block_forward.4} parent=27 // pred_region
        %p265 = scmp.lt.s32.totalorder %s15, 1
        %s266 = scalar_select %p265, %s15, 1
        %s267 = smul.addr %s266, 8
        %s268 = smul.addr %s267, 8
        %s269 = scalar_lea.vmem %s0, %s268
      $region32: #{basic_block_forward.4} parent=27 // pred_fallthru
        _
      // Predicated region
      $region33: #{basic_block_forward.4} parent=27 // pred_check
        %p270 = pneg %p103
      $region34: #{basic_block_forward.4} parent=27 // pred_check_branch
        %272 = sbr.rel (%p270) target = $region36
      $region35: #{basic_block_forward.4} parent=27 // pred_region
        %s273 = smul.u32 4, %s15
        %p274 = scmp.lt.s32.totalorder %s273, 7
        %s275 = scalar_select %p274, %s273, 7
        %s276 = smul.addr %s275, 18
        %s277 = smul.addr %s276, 4
        %s278 = scalar_lea.vmem %s3, %s277
        %s279 = smul.u32 4, %s15
      $region36: #{basic_block_forward.4} parent=27 // pred_fallthru
        _
    $region28: #{basic_block_forward.4} parent=5 // pred_fallthru
      _
    %p280 = scmp.le.s32.totalorder 1, %s15
    %p281 = scmp.lt.s32.totalorder %s15, 3
    %p282 = pnand %p280, %p281
    %p283 = pneg %p282
    // Predicated region
    $region37: #{basic_block_forward.4} parent=5 // pred_check
      _
    $region38: #{basic_block_forward.4} parent=5 // pred_check_branch
      %285 = sbr.rel (%p282) target = $region40
    $region39: #{basic_block_forward.4} parent=5 // pred_region
      %s286 = ssub.s32 %s15, 1
      %p287 = scmp.lt.s32.totalorder %s20, 1
      %s288 = scalar_select %p287, %s20, 1
      %s289 = smul.addr %s288, 8
      %s290 = smul.addr %s289, 8
      %s291 = scalar_lea.vmem %s0, %s290
      %p292 = pneg %p41
      %p293 = pneg %p38
      %p294 = pneg %p62
      %p295 = pneg %p59
      %p296 = pneg %p83
      %p297 = pneg %p80
      %s298 = smul.u32 4, %s20
      %p299 = scmp.lt.s32.totalorder %s298, 7
      %s300 = scalar_select %p299, %s298, 7
      %s301 = smul.addr %s300, 18
      %s302 = smul.addr %s301, 4
      %s303 = scalar_lea.vmem %s3, %s302
      %p304 = pneg %p109
      %p305 = pneg %p106
      %p306 = pneg %p130
      %p307 = pneg %p127
      %p308 = pneg %p156
      %p309 = pneg %p153
      %p310 = scmp.lt.s32.totalorder %s20, 1
      %s311 = scalar_select %p310, %s20, 1
      %s312 = smul.addr %s311, 8
      %s313 = smul.addr %s312, 8
      %s314 = scalar_lea.vmem %s5, %s313
      %p315 = pneg %p182
      %p316 = pneg %p179
      %p317 = scmp.lt.s32.totalorder %s20, 1
      %s318 = scalar_select %p317, %s20, 1
      %s319 = smul.addr %s318, 8
      %s320 = smul.addr %s319, 8
      %s321 = scalar_lea.vmem %s6, %s320
      %p322 = pneg %p208
      %p323 = pneg %p205
      %p324 = scmp.lt.s32.totalorder %s20, 1
      %s325 = scalar_select %p324, %s20, 1
      %s326 = smul.addr %s325, 2
      %s327 = scalar_lea.vmem %s7, %s326
      %p328 = pneg %p234
      %p329 = pneg %p231
      %p330 = scmp.lt.s32.totalorder %s20, 1
      %s331 = scalar_select %p330, %s20, 1
      %s332 = smul.addr %s331, 2
      %s333 = scalar_lea.vmem %s8, %s332
      %p334 = scmp.lt.s32.totalorder %s20, 1
      %s335 = scalar_select %p334, %s20, 1
      %s336 = smul.addr %s335, 8
      %s337 = smul.addr %s336, 8
      %s338 = scalar_lea.vmem %s0, %s337
      %s339 = smul.u32 4, %s20
      %p340 = scmp.lt.s32.totalorder %s339, 7
      %s341 = scalar_select %p340, %s339, 7
      %s342 = smul.addr %s341, 18
      %s343 = smul.addr %s342, 4
      %s344 = scalar_lea.vmem %s3, %s343
      %s345 = smul.u32 4, %s20
      %p346 = scmp.lt.s32.totalorder %s20, 1
      %s347 = scalar_select %p346, %s20, 1
      %s348 = smul.addr %s347, 8
      %s349 = smul.addr %s348, 8
      %s350 = scalar_lea.vmem %s5, %s349
      %p351 = scmp.lt.s32.totalorder %s20, 1
      %s352 = scalar_select %p351, %s20, 1
      %s353 = smul.addr %s352, 8
      %s354 = smul.addr %s353, 8
      %s355 = scalar_lea.vmem %s6, %s354
      %p356 = scmp.lt.s32.totalorder %s20, 1
      %s357 = scalar_select %p356, %s20, 1
      %s358 = smul.addr %s357, 2
      %s359 = scalar_lea.vmem %s7, %s358
      %p360 = scmp.lt.s32.totalorder %s20, 1
      %s361 = scalar_select %p360, %s20, 1
      %s362 = smul.addr %s361, 2
      %s363 = scalar_lea.vmem %s8, %s362
      %v365 = vld [vmem:[%s1] sm:$0x3]
      %v366 = vld [vmem:[%s338] sm:$0xff]
      %v367 = vld [vmem:[%s338 + $0x8] sm:$0xff]
      %v368 = vld [vmem:[%s338 + $0x10] sm:$0xff]
      %v369 = vld [vmem:[%s338 + $0x18] sm:$0xff]
      %v370 = vld [vmem:[%s338 + $0x20] sm:$0xff]
      %v371 = vld [vmem:[%s338 + $0x28] sm:$0xff]
      %v372 = vld [vmem:[%s338 + $0x30] sm:$0xff]
      %v373 = vld [vmem:[%s338 + $0x38] sm:$0xff]
      %v374 = vlaneseq
      %v375 = vshrl.u32 %v374, 7
      %v376 = vsub.s32 0, %v375
      %v377 = vrot.slane %v365, %v376
      %v378 = vmul.f32 %v366, %v377
      %v379 = vmul.f32 %v367, %v377
      %v380 = vmul.f32 %v368, %v377
      %v381 = vmul.f32 %v369, %v377
      %v382 = vmul.f32 %v370, %v377
      %v383 = vmul.f32 %v371, %v377
      %v384 = vmul.f32 %v372, %v377
      %v385 = vmul.f32 %v373, %v377
      %v386 = vlaneseq
      %v387 = vshrl.u32 %v386, 7
      %v388 = vsub.s32 1, %v387
      %v389 = vrot.slane %v365, %v388
      %v390 = vadd.f32 %v378, %v389
      %v391 = vadd.f32 %v379, %v389
      %v392 = vadd.f32 %v380, %v389
      %v393 = vadd.f32 %v381, %v389
      %v394 = vadd.f32 %v382, %v389
      %v395 = vadd.f32 %v383, %v389
      %v396 = vadd.f32 %v384, %v389
      %v397 = vadd.f32 %v385, %v389
      %v398 = vmax.f32 %v390, 0.0
      %v399 = vmax.f32 %v391, 0.0
      %v400 = vmax.f32 %v392, 0.0
      %v401 = vmax.f32 %v393, 0.0
      %v402 = vmax.f32 %v394, 0.0
      %v403 = vmax.f32 %v395, 0.0
      %v404 = vmax.f32 %v396, 0.0
      %v405 = vmax.f32 %v397, 0.0
      %406 = vst [vmem:[#allocation2] sm:$0xff] 0.0
      %407 = vst [vmem:[#allocation2 + $0x8] sm:$0x3] 0.0
      %408 = vst [vmem:[#allocation2 + $0x10] sm:$0xff] 0.0
      %409 = vst [vmem:[#allocation2 + $0x18] sm:$0x3] 0.0
      %410 = vst [vmem:[#allocation2 + $0x20] sm:$0xff] 0.0
      %411 = vst [vmem:[#allocation2 + $0x28] sm:$0x3] 0.0
      %412 = vst [vmem:[#allocation2 + $0x30] sm:$0xff] 0.0
      %413 = vst [vmem:[#allocation2 + $0x38] sm:$0x3] 0.0
      %414 = vst [vmem:[#allocation2 + $0x40] sm:$0xff] 0.0
      %415 = vst [vmem:[#allocation2 + $0x48] sm:$0x3] 0.0
      %416 = vst [vmem:[#allocation2 + $0x50] sm:$0xff] 0.0
      %417 = vst [vmem:[#allocation2 + $0x58] sm:$0x3] 0.0
      %418 = vst [vmem:[#allocation2 + $0x60] sm:$0xff] 0.0
      %419 = vst [vmem:[#allocation2 + $0x68] sm:$0x3] 0.0
      %420 = vst [vmem:[#allocation2 + $0x70] sm:$0xff] 0.0
      %421 = vst [vmem:[#allocation2 + $0x78] sm:$0x3] 0.0
      %422 = vst [vmem:[#allocation2 + $0x80] sm:$0xff] 0.0
      %423 = vst [vmem:[#allocation2 + $0x88] sm:$0x3] 0.0
      %424 = vst [vmem:[#allocation2 + $0x90] sm:$0xff] 0.0
      %425 = vst [vmem:[#allocation2 + $0x98] sm:$0x3] 0.0
      %s426 = scalar_lea.vmem [#allocation2], 16
      %427 = vst [vmem:[%s426 + $0x1] sm:$0xff] %v398
      %428 = vst [vmem:[%s426 + $0x11] sm:$0xff] %v399
      %429 = vst [vmem:[%s426 + $0x21] sm:$0xff] %v400
      %430 = vst [vmem:[%s426 + $0x31] sm:$0xff] %v401
      %431 = vst [vmem:[%s426 + $0x41] sm:$0xff] %v402
      %432 = vst [vmem:[%s426 + $0x51] sm:$0xff] %v403
      %433 = vst [vmem:[%s426 + $0x61] sm:$0xff] %v404
      %434 = vst [vmem:[%s426 + $0x71] sm:$0xff] %v405
      %v435 = vld [vmem:[#allocation2] sm:$0xff]
      %v436 = vld [vmem:[#allocation2 + $0x10] sm:$0xff]
      %v437 = vld [vmem:[#allocation2 + $0x20] sm:$0xff]
      %v438 = vld [vmem:[#allocation2 + $0x30] sm:$0xff]
      %v439 = vld [vmem:[#allocation2 + $0x40] sm:$0xff]
      %v440 = vld [vmem:[#allocation2 + $0x50] sm:$0xff]
      %v441 = vld [vmem:[#allocation2 + $0x60] sm:$0xff]
      %v442 = vld [vmem:[#allocation2 + $0x70] sm:$0xff]
      %v443 = vpack.c.bf16 %v435, %v435
      %v444 = vpack.c.bf16 %v436, %v436
      %v445 = vpack.c.bf16 %v437, %v437
      %v446 = vpack.c.bf16 %v438, %v438
      %v447 = vpack.c.bf16 %v439, %v439
      %v448 = vpack.c.bf16 %v440, %v440
      %v449 = vpack.c.bf16 %v441, %v441
      %v450 = vpack.c.bf16 %v442, %v442
      %v451 = vld [vmem:[%s2] sm:$0xf]
      %v452 = vld [vmem:[%s2 + $0x4] sm:$0xf]
      %v453 = vld [vmem:[%s2 + $0x8] sm:$0xf]
      %v454 = vld [vmem:[%s2 + $0xc] sm:$0xf]
      %v455 = vld [vmem:[%s2 + $0x10] sm:$0xf]
      %v456 = vld [vmem:[%s2 + $0x14] sm:$0xf]
      %v457 = vld [vmem:[%s2 + $0x18] sm:$0xf]
      %v458 = vld [vmem:[%s2 + $0x1c] sm:$0xf]
      %v459 = vld [vmem:[%s2 + $0x20] sm:$0xf]
      %v460 = vld [vmem:[%s2 + $0x24] sm:$0xf]
      %v461 = vld [vmem:[%s2 + $0x28] sm:$0xf]
      %v462 = vld [vmem:[%s2 + $0x2c] sm:$0xf]
      %v463 = vld [vmem:[%s2 + $0x30] sm:$0xf]
      %v464 = vld [vmem:[%s2 + $0x34] sm:$0xf]
      %v465 = vld [vmem:[%s2 + $0x38] sm:$0xf]
      %v466 = vld [vmem:[%s2 + $0x3c] sm:$0xf]
      %v467 = vld [vmem:[#allocation2 + $0x1] sm:$0xff]
      %v468 = vld [vmem:[#allocation2 + $0x11] sm:$0xff]
      %v469 = vld [vmem:[#allocation2 + $0x21] sm:$0xff]
      %v470 = vld [vmem:[#allocation2 + $0x31] sm:$0xff]
      %v471 = vld [vmem:[#allocation2 + $0x41] sm:$0xff]
      %v472 = vld [vmem:[#allocation2 + $0x51] sm:$0xff]
      %v473 = vld [vmem:[#allocation2 + $0x61] sm:$0xff]
      %v474 = vld [vmem:[#allocation2 + $0x71] sm:$0xff]
      %v475 = vpack.c.bf16 %v467, %v467
      %v476 = vpack.c.bf16 %v468, %v468
      %v477 = vpack.c.bf16 %v469, %v469
      %v478 = vpack.c.bf16 %v470, %v470
      %v479 = vpack.c.bf16 %v471, %v471
      %v480 = vpack.c.bf16 %v472, %v472
      %v481 = vpack.c.bf16 %v473, %v473
      %v482 = vpack.c.bf16 %v474, %v474
      %s483 = scalar_lea.vmem %s2, 64
      %v484 = vld [vmem:[%s483] sm:$0xf]
      %v485 = vld [vmem:[%s483 + $0x4] sm:$0xf]
      %v486 = vld [vmem:[%s483 + $0x8] sm:$0xf]
      %v487 = vld [vmem:[%s483 + $0xc] sm:$0xf]
      %v488 = vld [vmem:[%s483 + $0x10] sm:$0xf]
      %v489 = vld [vmem:[%s483 + $0x14] sm:$0xf]
      %v490 = vld [vmem:[%s483 + $0x18] sm:$0xf]
      %v491 = vld [vmem:[%s483 + $0x1c] sm:$0xf]
      %v492 = vld [vmem:[%s483 + $0x20] sm:$0xf]
      %v493 = vld [vmem:[%s483 + $0x24] sm:$0xf]
      %v494 = vld [vmem:[%s483 + $0x28] sm:$0xf]
      %v495 = vld [vmem:[%s483 + $0x2c] sm:$0xf]
      %v496 = vld [vmem:[%s483 + $0x30] sm:$0xf]
      %v497 = vld [vmem:[%s483 + $0x34] sm:$0xf]
      %v498 = vld [vmem:[%s483 + $0x38] sm:$0xf]
      %v499 = vld [vmem:[%s483 + $0x3c] sm:$0xf]
      %v508 = vunpack.c.l.b16 %v475
      %v509 = vunpack.c.l.b16 %v476
      %v510 = vunpack.c.l.b16 %v477
      %v511 = vunpack.c.l.b16 %v478
      %v512 = vunpack.c.l.b16 %v479
      %v513 = vunpack.c.l.b16 %v480
      %v514 = vunpack.c.l.b16 %v481
      %v515 = vunpack.c.l.b16 %v482
      %v516 = vpack.c.b16 %v509, %v508
      %v517 = vpack.c.b16 %v511, %v510
      %v518 = vpack.c.b16 %v513, %v512
      %v519 = vpack.c.b16 %v515, %v514
      %v540 = vunpack.c.l.b16 %v484
      %v541 = vunpack.c.l.b16 %v485
      %v542 = vunpack.c.l.b16 %v486
      %v543 = vunpack.c.l.b16 %v487
      %v544 = vunpack.c.l.b16 %v488
      %v545 = vunpack.c.l.b16 %v489
      %v546 = vunpack.c.l.b16 %v490
      %v547 = vunpack.c.l.b16 %v491
      %v548 = vunpack.c.l.b16 %v492
      %v549 = vunpack.c.l.b16 %v493
      %v550 = vunpack.c.l.b16 %v494
      %v551 = vunpack.c.l.b16 %v495
      %v552 = vunpack.c.l.b16 %v496
      %v553 = vunpack.c.l.b16 %v497
      %v554 = vunpack.c.l.b16 %v498
      %v555 = vunpack.c.l.b16 %v499
      %v556 = vpack.c.b16 %v541, %v540
      %v557 = vpack.c.b16 %v543, %v542
      %v558 = vpack.c.b16 %v545, %v544
      %v559 = vpack.c.b16 %v547, %v546
      %v560 = vpack.c.b16 %v549, %v548
      %v561 = vpack.c.b16 %v551, %v550
      %v562 = vpack.c.b16 %v553, %v552
      %v563 = vpack.c.b16 %v555, %v554
      %572 = vmatprep.subr.bf16.mxu0 0
      %573 = vmatpush1.bf16.msra.mxu0 %v556
      %574 = vmatprep.subr.bf16.mxu0 0
      %575 = vmatpush1.bf16.msra.mxu0 %v557
      %576 = vmatprep.subr.bf16.mxu0 0
      %577 = vmatpush1.bf16.msra.mxu0 %v558
      %578 = vmatprep.subr.bf16.mxu0 0
      %579 = vmatpush1.bf16.msra.mxu0 %v559
      %580 = vmatprep.subr.bf16.mxu0 0
      %581 = vmatpush1.bf16.msra.mxu0 %v560
      %582 = vmatprep.subr.bf16.mxu0 0
      %583 = vmatpush1.bf16.msra.mxu0 %v561
      %584 = vmatprep.subr.bf16.mxu0 0
      %585 = vmatpush1.bf16.msra.mxu0 %v562
      %586 = vmatprep.subr.bf16.mxu0 0
      %587 = vmatpush1.bf16.msra.mxu0 %v563
      %588 = vmatprep.subr.bf16.mxu0 0
      %589 = vmatpush1.bf16.msra.mxu0 0
      %590 = vmatprep.subr.bf16.mxu0 0
      %591 = vmatpush1.bf16.msra.mxu0 0
      %592 = vmatprep.subr.bf16.mxu0 0
      %593 = vmatpush1.bf16.msra.mxu0 0
      %594 = vmatprep.subr.bf16.mxu0 0
      %595 = vmatpush1.bf16.msra.mxu0 0
      %596 = vmatprep.subr.bf16.mxu0 0
      %597 = vmatpush1.bf16.msra.mxu0 0
      %598 = vmatprep.subr.bf16.mxu0 0
      %599 = vmatpush1.bf16.msra.mxu0 0
      %600 = vmatprep.subr.bf16.mxu0 0
      %601 = vmatpush1.bf16.msra.mxu0 0
      %602 = vmatprep.subr.bf16.mxu0 0
      %603 = vmatpush1.bf16.msra.mxu0 0
      %604 = vmatprep.mubr.bf16.mxu0 0
      %605 = vmatmul.mubr.bf16.gmra.mrb[0].mxu0 %v516
      %v606 = vpop.f32.mrb[0].mxu0
      %v607 = vadd.f32 0.0, %v606
      %v608 = vpop.f32.mrb[0].mxu0
      %v609 = vpop.f32.mrb[0].mxu0
      %v610 = vadd.f32 0.0, %v609
      %v611 = vpop.f32.mrb[0].mxu0
      %612 = vmatprep.mubr.bf16.mxu0 0
      %613 = vmatmul.mubr.bf16.gmra.mrb[0].mxu0 %v517
      %v614 = vpop.f32.mrb[0].mxu0
      %v615 = vadd.f32 0.0, %v614
      %v616 = vpop.f32.mrb[0].mxu0
      %v617 = vpop.f32.mrb[0].mxu0
      %v618 = vadd.f32 0.0, %v617
      %v619 = vpop.f32.mrb[0].mxu0
      %620 = vmatprep.mubr.bf16.mxu0 0
      %621 = vmatmul.mubr.bf16.gmra.mrb[0].mxu0 %v518
      %v622 = vpop.f32.mrb[0].mxu0
      %v623 = vadd.f32 0.0, %v622
      %v624 = vpop.f32.mrb[0].mxu0
      %v625 = vpop.f32.mrb[0].mxu0
      %v626 = vadd.f32 0.0, %v625
      %v627 = vpop.f32.mrb[0].mxu0
      %628 = vmatprep.mubr.bf16.mxu0 0
      %629 = vmatmul.mubr.bf16.gmra.mrb[0].mxu0 %v519
      %v630 = vpop.f32.mrb[0].mxu0
      %v631 = vadd.f32 0.0, %v630
      %v632 = vpop.f32.mrb[0].mxu0
      %v633 = vpop.f32.mrb[0].mxu0
      %v634 = vadd.f32 0.0, %v633
      %v635 = vpop.f32.mrb[0].mxu0
      %636 = vdwg.mxu0
      %v645 = vunpack.c.l.b16 %v443
      %v646 = vunpack.c.l.b16 %v444
      %v647 = vunpack.c.l.b16 %v445
      %v648 = vunpack.c.l.b16 %v446
      %v649 = vunpack.c.l.b16 %v447
      %v650 = vunpack.c.l.b16 %v448
      %v651 = vunpack.c.l.b16 %v449
      %v652 = vunpack.c.l.b16 %v450
      %v653 = vpack.c.b16 %v646, %v645
      %v654 = vpack.c.b16 %v648, %v647
      %v655 = vpack.c.b16 %v650, %v649
      %v656 = vpack.c.b16 %v652, %v651
      %v677 = vunpack.c.l.b16 %v451
      %v678 = vunpack.c.l.b16 %v452
      %v679 = vunpack.c.l.b16 %v453
      %v680 = vunpack.c.l.b16 %v454
      %v681 = vunpack.c.l.b16 %v455
      %v682 = vunpack.c.l.b16 %v456
      %v683 = vunpack.c.l.b16 %v457
      %v684 = vunpack.c.l.b16 %v458
      %v685 = vunpack.c.l.b16 %v459
      %v686 = vunpack.c.l.b16 %v460
      %v687 = vunpack.c.l.b16 %v461
      %v688 = vunpack.c.l.b16 %v462
      %v689 = vunpack.c.l.b16 %v463
      %v690 = vunpack.c.l.b16 %v464
      %v691 = vunpack.c.l.b16 %v465
      %v692 = vunpack.c.l.b16 %v466
      %v693 = vpack.c.b16 %v678, %v677
      %v694 = vpack.c.b16 %v680, %v679
      %v695 = vpack.c.b16 %v682, %v681
      %v696 = vpack.c.b16 %v684, %v683
      %v697 = vpack.c.b16 %v686, %v685
      %v698 = vpack.c.b16 %v688, %v687
      %v699 = vpack.c.b16 %v690, %v689
      %v700 = vpack.c.b16 %v692, %v691
      %709 = vmatprep.subr.bf16.mxu0 0
      %710 = vmatpush1.bf16.msra.mxu0 %v693
      %711 = vmatprep.subr.bf16.mxu0 0
      %712 = vmatpush1.bf16.msra.mxu0 %v694
      %713 = vmatprep.subr.bf16.mxu0 0
      %714 = vmatpush1.bf16.msra.mxu0 %v695
      %715 = vmatprep.subr.bf16.mxu0 0
      %716 = vmatpush1.bf16.msra.mxu0 %v696
      %717 = vmatprep.subr.bf16.mxu0 0
      %718 = vmatpush1.bf16.msra.mxu0 %v697
      %719 = vmatprep.subr.bf16.mxu0 0
      %720 = vmatpush1.bf16.msra.mxu0 %v698
      %721 = vmatprep.subr.bf16.mxu0 0
      %722 = vmatpush1.bf16.msra.mxu0 %v699
      %723 = vmatprep.subr.bf16.mxu0 0
      %724 = vmatpush1.bf16.msra.mxu0 %v700
      %725 = vmatprep.subr.bf16.mxu0 0
      %726 = vmatpush1.bf16.msra.mxu0 0
      %727 = vmatprep.subr.bf16.mxu0 0
      %728 = vmatpush1.bf16.msra.mxu0 0
      %729 = vmatprep.subr.bf16.mxu0 0
      %730 = vmatpush1.bf16.msra.mxu0 0
      %731 = vmatprep.subr.bf16.mxu0 0
      %732 = vmatpush1.bf16.msra.mxu0 0
      %733 = vmatprep.subr.bf16.mxu0 0
      %734 = vmatpush1.bf16.msra.mxu0 0
      %735 = vmatprep.subr.bf16.mxu0 0
      %736 = vmatpush1.bf16.msra.mxu0 0
      %737 = vmatprep.subr.bf16.mxu0 0
      %738 = vmatpush1.bf16.msra.mxu0 0
      %739 = vmatprep.subr.bf16.mxu0 0
      %740 = vmatpush1.bf16.msra.mxu0 0
      %741 = vmatprep.mubr.bf16.mxu0 0
      %742 = vmatmul.mubr.bf16.gmra.mrb[0].mxu0 %v653
      %v743 = vpop.f32.mrb[0].mxu0
      %v744 = vadd.f32 %v607, %v743
      %v745 = vpop.f32.mrb[0].mxu0
      %v746 = vpop.f32.mrb[0].mxu0
      %v747 = vadd.f32 %v610, %v746
      %v748 = vpop.f32.mrb[0].mxu0
      %749 = vmatprep.mubr.bf16.mxu0 0
      %750 = vmatmul.mubr.bf16.gmra.mrb[0].mxu0 %v654
      %v751 = vpop.f32.mrb[0].mxu0
      %v752 = vadd.f32 %v615, %v751
      %v753 = vpop.f32.mrb[0].mxu0
      %v754 = vpop.f32.mrb[0].mxu0
      %v755 = vadd.f32 %v618, %v754
      %v756 = vpop.f32.mrb[0].mxu0
      %757 = vmatprep.mubr.bf16.mxu0 0
      %758 = vmatmul.mubr.bf16.gmra.mrb[0].mxu0 %v655
      %v759 = vpop.f32.mrb[0].mxu0
      %v760 = vadd.f32 %v623, %v759
      %v761 = vpop.f32.mrb[0].mxu0
      %v762 = vpop.f32.mrb[0].mxu0
      %v763 = vadd.f32 %v626, %v762
      %v764 = vpop.f32.mrb[0].mxu0
      %765 = vmatprep.mubr.bf16.mxu0 0
      %766 = vmatmul.mubr.bf16.gmra.mrb[0].mxu0 %v656
      %v767 = vpop.f32.mrb[0].mxu0
      %v768 = vadd.f32 %v631, %v767
      %v769 = vpop.f32.mrb[0].mxu0
      %v770 = vpop.f32.mrb[0].mxu0
      %v771 = vadd.f32 %v634, %v770
      %v772 = vpop.f32.mrb[0].mxu0
      %773 = vdwg.mxu0
      %v774 = vld [vmem:[#allocation2 + $0x2] sm:$0xff]
      %v775 = vld [vmem:[#allocation2 + $0x12] sm:$0xff]
      %v776 = vld [vmem:[#allocation2 + $0x22] sm:$0xff]
      %v777 = vld [vmem:[#allocation2 + $0x32] sm:$0xff]
      %v778 = vld [vmem:[#allocation2 + $0x42] sm:$0xff]
      %v779 = vld [vmem:[#allocation2 + $0x52] sm:$0xff]
      %v780 = vld [vmem:[#allocation2 + $0x62] sm:$0xff]
      %v781 = vld [vmem:[#allocation2 + $0x72] sm:$0xff]
      %v782 = vpack.c.bf16 %v774, %v774
      %v783 = vpack.c.bf16 %v775, %v775
      %v784 = vpack.c.bf16 %v776, %v776
      %v785 = vpack.c.bf16 %v777, %v777
      %v786 = vpack.c.bf16 %v778, %v778
      %v787 = vpack.c.bf16 %v779, %v779
      %v788 = vpack.c.bf16 %v780, %v780
      %v789 = vpack.c.bf16 %v781, %v781
      %s790 = scalar_lea.vmem %s2, 128
      %v791 = vld [vmem:[%s790] sm:$0xf]
      %v792 = vld [vmem:[%s790 + $0x4] sm:$0xf]
      %v793 = vld [vmem:[%s790 + $0x8] sm:$0xf]
      %v794 = vld [vmem:[%s790 + $0xc] sm:$0xf]
      %v795 = vld [vmem:[%s790 + $0x10] sm:$0xf]
      %v796 = vld [vmem:[%s790 + $0x14] sm:$0xf]
      %v797 = vld [vmem:[%s790 + $0x18] sm:$0xf]
      %v798 = vld [vmem:[%s790 + $0x1c] sm:$0xf]
      %v799 = vld [vmem:[%s790 + $0x20] sm:$0xf]
      %v800 = vld [vmem:[%s790 + $0x24] sm:$0xf]
      %v801 = vld [vmem:[%s790 + $0x28] sm:$0xf]
      %v802 = vld [vmem:[%s790 + $0x2c] sm:$0xf]
      %v803 = vld [vmem:[%s790 + $0x30] sm:$0xf]
      %v804 = vld [vmem:[%s790 + $0x34] sm:$0xf]
      %v805 = vld [vmem:[%s790 + $0x38] sm:$0xf]
      %v806 = vld [vmem:[%s790 + $0x3c] sm:$0xf]
      %v815 = vunpack.c.l.b16 %v782
      %v816 = vunpack.c.l.b16 %v783
      %v817 = vunpack.c.l.b16 %v784
      %v818 = vunpack.c.l.b16 %v785
      %v819 = vunpack.c.l.b16 %v786
      %v820 = vunpack.c.l.b16 %v787
      %v821 = vunpack.c.l.b16 %v788
      %v822 = vunpack.c.l.b16 %v789
      %v823 = vpack.c.b16 %v816, %v815
      %v824 = vpack.c.b16 %v818, %v817
      %v825 = vpack.c.b16 %v820, %v819
      %v826 = vpack.c.b16 %v822, %v821
      %v847 = vunpack.c.l.b16 %v791
      %v848 = vunpack.c.l.b16 %v792
      %v849 = vunpack.c.l.b16 %v793
      %v850 = vunpack.c.l.b16 %v794
      %v851 = vunpack.c.l.b16 %v795
      %v852 = vunpack.c.l.b16 %v796
      %v853 = vunpack.c.l.b16 %v797
      %v854 = vunpack.c.l.b16 %v798
      %v855 = vunpack.c.l.b16 %v799
      %v856 = vunpack.c.l.b16 %v800
      %v857 = vunpack.c.l.b16 %v801
      %v858 = vunpack.c.l.b16 %v802
      %v859 = vunpack.c.l.b16 %v803
      %v860 = vunpack.c.l.b16 %v804
      %v861 = vunpack.c.l.b16 %v805
      %v862 = vunpack.c.l.b16 %v806
      %v863 = vpack.c.b16 %v848, %v847
      %v864 = vpack.c.b16 %v850, %v849
      %v865 = vpack.c.b16 %v852, %v851
      %v866 = vpack.c.b16 %v854, %v853
      %v867 = vpack.c.b16 %v856, %v855
      %v868 = vpack.c.b16 %v858, %v857
      %v869 = vpack.c.b16 %v860, %v859
      %v870 = vpack.c.b16 %v862, %v861
      %879 = vmatprep.subr.bf16.mxu0 0
      %880 = vmatpush1.bf16.msra.mxu0 %v863
      %881 = vmatprep.subr.bf16.mxu0 0
      %882 = vmatpush1.bf16.msra.mxu0 %v864
      %883 = vmatprep.subr.bf16.mxu0 0
      %884 = vmatpush1.bf16.msra.mxu0 %v865
      %885 = vmatprep.subr.bf16.mxu0 0
      %886 = vmatpush1.bf16.msra.mxu0 %v866
      %887 = vmatprep.subr.bf16.mxu0 0
      %888 = vmatpush1.bf16.msra.mxu0 %v867
      %889 = vmatprep.subr.bf16.mxu0 0
      %890 = vmatpush1.bf16.msra.mxu0 %v868
      %891 = vmatprep.subr.bf16.mxu0 0
      %892 = vmatpush1.bf16.msra.mxu0 %v869
      %893 = vmatprep.subr.bf16.mxu0 0
      %894 = vmatpush1.bf16.msra.mxu0 %v870
      %895 = vmatprep.subr.bf16.mxu0 0
      %896 = vmatpush1.bf16.msra.mxu0 0
      %897 = vmatprep.subr.bf16.mxu0 0
      %898 = vmatpush1.bf16.msra.mxu0 0
      %899 = vmatprep.subr.bf16.mxu0 0
      %900 = vmatpush1.bf16.msra.mxu0 0
      %901 = vmatprep.subr.bf16.mxu0 0
      %902 = vmatpush1.bf16.msra.mxu0 0
      %903 = vmatprep.subr.bf16.mxu0 0
      %904 = vmatpush1.bf16.msra.mxu0 0
      %905 = vmatprep.subr.bf16.mxu0 0
      %906 = vmatpush1.bf16.msra.mxu0 0
      %907 = vmatprep.subr.bf16.mxu0 0
      %908 = vmatpush1.bf16.msra.mxu0 0
      %909 = vmatprep.subr.bf16.mxu0 0
      %910 = vmatpush1.bf16.msra.mxu0 0
      %911 = vmatprep.mubr.bf16.mxu0 0
      %912 = vmatmul.mubr.bf16.gmra.mrb[0].mxu0 %v823
      %v913 = vpop.f32.mrb[0].mxu0
      %v914 = vadd.f32 0.0, %v913
      %v915 = vpop.f32.mrb[0].mxu0
      %v916 = vpop.f32.mrb[0].mxu0
      %v917 = vadd.f32 0.0, %v916
      %v918 = vpop.f32.mrb[0].mxu0
      %919 = vmatprep.mubr.bf16.mxu0 0
      %920 = vmatmul.mubr.bf16.gmra.mrb[0].mxu0 %v824
      %v921 = vpop.f32.mrb[0].mxu0
      %v922 = vadd.f32 0.0, %v921
      %v923 = vpop.f32.mrb[0].mxu0
      %v924 = vpop.f32.mrb[0].mxu0
      %v925 = vadd.f32 0.0, %v924
      %v926 = vpop.f32.mrb[0].mxu0
      %927 = vmatprep.mubr.bf16.mxu0 0
      %928 = vmatmul.mubr.bf16.gmra.mrb[0].mxu0 %v825
      %v929 = vpop.f32.mrb[0].mxu0
      %v930 = vadd.f32 0.0, %v929
      %v931 = vpop.f32.mrb[0].mxu0
      %v932 = vpop.f32.mrb[0].mxu0
      %v933 = vadd.f32 0.0, %v932
      %v934 = vpop.f32.mrb[0].mxu0
      %935 = vmatprep.mubr.bf16.mxu0 0
      %936 = vmatmul.mubr.bf16.gmra.mrb[0].mxu0 %v826
      %v937 = vpop.f32.mrb[0].mxu0
      %v938 = vadd.f32 0.0, %v937
      %v939 = vpop.f32.mrb[0].mxu0
      %v940 = vpop.f32.mrb[0].mxu0
      %v941 = vadd.f32 0.0, %v940
      %v942 = vpop.f32.mrb[0].mxu0
      %943 = vdwg.mxu0
      %v944 = vadd.f32 %v744, %v914
      %v945 = vadd.f32 %v747, %v917
      %v946 = vadd.f32 %v752, %v922
      %v947 = vadd.f32 %v755, %v925
      %v948 = vadd.f32 %v760, %v930
      %v949 = vadd.f32 %v763, %v933
      %v950 = vadd.f32 %v768, %v938
      %v951 = vadd.f32 %v771, %v941
      %v952 = vld [vmem:[%s426] sm:$0xff]
      %v953 = vld [vmem:[%s426 + $0x10] sm:$0xff]
      %v954 = vld [vmem:[%s426 + $0x20] sm:$0xff]
      %v955 = vld [vmem:[%s426 + $0x30] sm:$0xff]
      %v956 = vld [vmem:[%s426 + $0x40] sm:$0xff]
      %v957 = vld [vmem:[%s426 + $0x50] sm:$0xff]
      %v958 = vld [vmem:[%s426 + $0x60] sm:$0xff]
      %v959 = vld [vmem:[%s426 + $0x70] sm:$0xff]
      %v960 = vpack.c.bf16 %v952, %v952
      %v961 = vpack.c.bf16 %v953, %v953
      %v962 = vpack.c.bf16 %v954, %v954
      %v963 = vpack.c.bf16 %v955, %v955
      %v964 = vpack.c.bf16 %v956, %v956
      %v965 = vpack.c.bf16 %v957, %v957
      %v966 = vpack.c.bf16 %v958, %v958
      %v967 = vpack.c.bf16 %v959, %v959
      %s968 = scalar_lea.vmem %s2, 192
      %v969 = vld [vmem:[%s968] sm:$0xf]
      %v970 = vld [vmem:[%s968 + $0x4] sm:$0xf]
      %v971 = vld [vmem:[%s968 + $0x8] sm:$0xf]
      %v972 = vld [vmem:[%s968 + $0xc] sm:$0xf]
      %v973 = vld [vmem:[%s968 + $0x10] sm:$0xf]
      %v974 = vld [vmem:[%s968 + $0x14] sm:$0xf]
      %v975 = vld [vmem:[%s968 + $0x18] sm:$0xf]
      %v976 = vld [vmem:[%s968 + $0x1c] sm:$0xf]
      %v977 = vld [vmem:[%s968 + $0x20] sm:$0xf]
      %v978 = vld [vmem:[%s968 + $0x24] sm:$0xf]
      %v979 = vld [vmem:[%s968 + $0x28] sm:$0xf]
      %v980 = vld [vmem:[%s968 + $0x2c] sm:$0xf]
      %v981 = vld [vmem:[%s968 + $0x30] sm:$0xf]
      %v982 = vld [vmem:[%s968 + $0x34] sm:$0xf]
      %v983 = vld [vmem:[%s968 + $0x38] sm:$0xf]
      %v984 = vld [vmem:[%s968 + $0x3c] sm:$0xf]
      %v993 = vunpack.c.l.b16 %v960
      %v994 = vunpack.c.l.b16 %v961
      %v995 = vunpack.c.l.b16 %v962
      %v996 = vunpack.c.l.b16 %v963
      %v997 = vunpack.c.l.b16 %v964
      %v998 = vunpack.c.l.b16 %v965
      %v999 = vunpack.c.l.b16 %v966
      %v1000 = vunpack.c.l.b16 %v967
      %v1001 = vpack.c.b16 %v994, %v993
      %v1002 = vpack.c.b16 %v996, %v995
      %v1003 = vpack.c.b16 %v998, %v997
      %v1004 = vpack.c.b16 %v1000, %v999
      %v1025 = vunpack.c.l.b16 %v969
      %v1026 = vunpack.c.l.b16 %v970
      %v1027 = vunpack.c.l.b16 %v971
      %v1028 = vunpack.c.l.b16 %v972
      %v1029 = vunpack.c.l.b16 %v973
      %v1030 = vunpack.c.l.b16 %v974
      %v1031 = vunpack.c.l.b16 %v975
      %v1032 = vunpack.c.l.b16 %v976
      %v1033 = vunpack.c.l.b16 %v977
      %v1034 = vunpack.c.l.b16 %v978
      %v1035 = vunpack.c.l.b16 %v979
      %v1036 = vunpack.c.l.b16 %v980
      %v1037 = vunpack.c.l.b16 %v981
      %v1038 = vunpack.c.l.b16 %v982
      %v1039 = vunpack.c.l.b16 %v983
      %v1040 = vunpack.c.l.b16 %v984
      %v1041 = vpack.c.b16 %v1026, %v1025
      %v1042 = vpack.c.b16 %v1028, %v1027
      %v1043 = vpack.c.b16 %v1030, %v1029
      %v1044 = vpack.c.b16 %v1032, %v1031
      %v1045 = vpack.c.b16 %v1034, %v1033
      %v1046 = vpack.c.b16 %v1036, %v1035
      %v1047 = vpack.c.b16 %v1038, %v1037
      %v1048 = vpack.c.b16 %v1040, %v1039
      %1057 = vmatprep.subr.bf16.mxu0 0
      %1058 = vmatpush1.bf16.msra.mxu0 %v1041
      %1059 = vmatprep.subr.bf16.mxu0 0
      %1060 = vmatpush1.bf16.msra.mxu0 %v1042
      %1061 = vmatprep.subr.bf16.mxu0 0
      %1062 = vmatpush1.bf16.msra.mxu0 %v1043
      %1063 = vmatprep.subr.bf16.mxu0 0
      %1064 = vmatpush1.bf16.msra.mxu0 %v1044
      %1065 = vmatprep.subr.bf16.mxu0 0
      %1066 = vmatpush1.bf16.msra.mxu0 %v1045
      %1067 = vmatprep.subr.bf16.mxu0 0
      %1068 = vmatpush1.bf16.msra.mxu0 %v1046
      %1069 = vmatprep.subr.bf16.mxu0 0
      %1070 = vmatpush1.bf16.msra.mxu0 %v1047
      %1071 = vmatprep.subr.bf16.mxu0 0
      %1072 = vmatpush1.bf16.msra.mxu0 %v1048
      %1073 = vmatprep.subr.bf16.mxu0 0
      %1074 = vmatpush1.bf16.msra.mxu0 0
      %1075 = vmatprep.subr.bf16.mxu0 0
      %1076 = vmatpush1.bf16.msra.mxu0 0
      %1077 = vmatprep.subr.bf16.mxu0 0
      %1078 = vmatpush1.bf16.msra.mxu0 0
      %1079 = vmatprep.subr.bf16.mxu0 0
      %1080 = vmatpush1.bf16.msra.mxu0 0
      %1081 = vmatprep.subr.bf16.mxu0 0
      %1082 = vmatpush1.bf16.msra.mxu0 0
      %1083 = vmatprep.subr.bf16.mxu0 0
      %1084 = vmatpush1.bf16.msra.mxu0 0
      %1085 = vmatprep.subr.bf16.mxu0 0
      %1086 = vmatpush1.bf16.msra.mxu0 0
      %1087 = vmatprep.subr.bf16.mxu0 0
      %1088 = vmatpush1.bf16.msra.mxu0 0
      %1089 = vmatprep.mubr.bf16.mxu0 0
      %1090 = vmatmul.mubr.bf16.gmra.mrb[0].mxu0 %v1001
      %v1091 = vpop.f32.mrb[0].mxu0
      %v1092 = vadd.f32 0.0, %v1091
      %v1093 = vpop.f32.mrb[0].mxu0
      %v1094 = vpop.f32.mrb[0].mxu0
      %v1095 = vadd.f32 0.0, %v1094
      %v1096 = vpop.f32.mrb[0].mxu0
      %1097 = vmatprep.mubr.bf16.mxu0 0
      %1098 = vmatmul.mubr.bf16.gmra.mrb[0].mxu0 %v1002
      %v1099 = vpop.f32.mrb[0].mxu0
      %v1100 = vadd.f32 0.0, %v1099
      %v1101 = vpop.f32.mrb[0].mxu0
      %v1102 = vpop.f32.mrb[0].mxu0
      %v1103 = vadd.f32 0.0, %v1102
      %v1104 = vpop.f32.mrb[0].mxu0
      %1105 = vmatprep.mubr.bf16.mxu0 0
      %1106 = vmatmul.mubr.bf16.gmra.mrb[0].mxu0 %v1003
      %v1107 = vpop.f32.mrb[0].mxu0
      %v1108 = vadd.f32 0.0, %v1107
      %v1109 = vpop.f32.mrb[0].mxu0
      %v1110 = vpop.f32.mrb[0].mxu0
      %v1111 = vadd.f32 0.0, %v1110
      %v1112 = vpop.f32.mrb[0].mxu0
      %1113 = vmatprep.mubr.bf16.mxu0 0
      %1114 = vmatmul.mubr.bf16.gmra.mrb[0].mxu0 %v1004
      %v1115 = vpop.f32.mrb[0].mxu0
      %v1116 = vadd.f32 0.0, %v1115
      %v1117 = vpop.f32.mrb[0].mxu0
      %v1118 = vpop.f32.mrb[0].mxu0
      %v1119 = vadd.f32 0.0, %v1118
      %v1120 = vpop.f32.mrb[0].mxu0
      %1121 = vdwg.mxu0
      %v1122 = vadd.f32 %v944, %v1092
      %v1123 = vadd.f32 %v945, %v1095
      %v1124 = vadd.f32 %v946, %v1100
      %v1125 = vadd.f32 %v947, %v1103
      %v1126 = vadd.f32 %v948, %v1108
      %v1127 = vadd.f32 %v949, %v1111
      %v1128 = vadd.f32 %v950, %v1116
      %v1129 = vadd.f32 %v951, %v1119
      %v1130 = vld [vmem:[%s426 + $0x1] sm:$0xff]
      %v1131 = vld [vmem:[%s426 + $0x11] sm:$0xff]
      %v1132 = vld [vmem:[%s426 + $0x21] sm:$0xff]
      %v1133 = vld [vmem:[%s426 + $0x31] sm:$0xff]
      %v1134 = vld [vmem:[%s426 + $0x41] sm:$0xff]
      %v1135 = vld [vmem:[%s426 + $0x51] sm:$0xff]
      %v1136 = vld [vmem:[%s426 + $0x61] sm:$0xff]
      %v1137 = vld [vmem:[%s426 + $0x71] sm:$0xff]
      %v1138 = vpack.c.bf16 %v1130, %v1130
      %v1139 = vpack.c.bf16 %v1131, %v1131
      %v1140 = vpack.c.bf16 %v1132, %v1132
      %v1141 = vpack.c.bf16 %v1133, %v1133
      %v1142 = vpack.c.bf16 %v1134, %v1134
      %v1143 = vpack.c.bf16 %v1135, %v1135
      %v1144 = vpack.c.bf16 %v1136, %v1136
      %v1145 = vpack.c.bf16 %v1137, %v1137
      %s1146 = scalar_lea.vmem %s2, 256
      %v1147 = vld [vmem:[%s1146] sm:$0xf]
      %v1148 = vld [vmem:[%s1146 + $0x4] sm:$0xf]
      %v1149 = vld [vmem:[%s1146 + $0x8] sm:$0xf]
      %v1150 = vld [vmem:[%s1146 + $0xc] sm:$0xf]
      %v1151 = vld [vmem:[%s1146 + $0x10] sm:$0xf]
      %v1152 = vld [vmem:[%s1146 + $0x14] sm:$0xf]
      %v1153 = vld [vmem:[%s1146 + $0x18] sm:$0xf]
      %v1154 = vld [vmem:[%s1146 + $0x1c] sm:$0xf]
      %v1155 = vld [vmem:[%s1146 + $0x20] sm:$0xf]
      %v1156 = vld [vmem:[%s1146 + $0x24] sm:$0xf]
      %v1157 = vld [vmem:[%s1146 + $0x28] sm:$0xf]
      %v1158 = vld [vmem:[%s1146 + $0x2c] sm:$0xf]
      %v1159 = vld [vmem:[%s1146 + $0x30] sm:$0xf]
      %v1160 = vld [vmem:[%s1146 + $0x34] sm:$0xf]
      %v1161 = vld [vmem:[%s1146 + $0x38] sm:$0xf]
      %v1162 = vld [vmem:[%s1146 + $0x3c] sm:$0xf]
      %v1171 = vunpack.c.l.b16 %v1138
      %v1172 = vunpack.c.l.b16 %v1139
      %v1173 = vunpack.c.l.b16 %v1140
      %v1174 = vunpack.c.l.b16 %v1141
      %v1175 = vunpack.c.l.b16 %v1142
      %v1176 = vunpack.c.l.b16 %v1143
      %v1177 = vunpack.c.l.b16 %v1144
      %v1178 = vunpack.c.l.b16 %v1145
      %v1179 = vpack.c.b16 %v1172, %v1171
      %v1180 = vpack.c.b16 %v1174, %v1173
      %v1181 = vpack.c.b16 %v1176, %v1175
      %v1182 = vpack.c.b16 %v1178, %v1177
      %v1203 = vunpack.c.l.b16 %v1147
      %v1204 = vunpack.c.l.b16 %v1148
      %v1205 = vunpack.c.l.b16 %v1149
      %v1206 = vunpack.c.l.b16 %v1150
      %v1207 = vunpack.c.l.b16 %v1151
      %v1208 = vunpack.c.l.b16 %v1152
      %v1209 = vunpack.c.l.b16 %v1153
      %v1210 = vunpack.c.l.b16 %v1154
      %v1211 = vunpack.c.l.b16 %v1155
      %v1212 = vunpack.c.l.b16 %v1156
      %v1213 = vunpack.c.l.b16 %v1157
      %v1214 = vunpack.c.l.b16 %v1158
      %v1215 = vunpack.c.l.b16 %v1159
      %v1216 = vunpack.c.l.b16 %v1160
      %v1217 = vunpack.c.l.b16 %v1161
      %v1218 = vunpack.c.l.b16 %v1162
      %v1219 = vpack.c.b16 %v1204, %v1203
      %v1220 = vpack.c.b16 %v1206, %v1205
      %v1221 = vpack.c.b16 %v1208, %v1207
      %v1222 = vpack.c.b16 %v1210, %v1209
      %v1223 = vpack.c.b16 %v1212, %v1211
      %v1224 = vpack.c.b16 %v1214, %v1213
      %v1225 = vpack.c.b16 %v1216, %v1215
      %v1226 = vpack.c.b16 %v1218, %v1217
      %1235 = vmatprep.subr.bf16.mxu0 0
      %1236 = vmatpush1.bf16.msra.mxu0 %v1219
      %1237 = vmatprep.subr.bf16.mxu0 0
      %1238 = vmatpush1.bf16.msra.mxu0 %v1220
      %1239 = vmatprep.subr.bf16.mxu0 0
      %1240 = vmatpush1.bf16.msra.mxu0 %v1221
      %1241 = vmatprep.subr.bf16.mxu0 0
      %1242 = vmatpush1.bf16.msra.mxu0 %v1222
      %1243 = vmatprep.subr.bf16.mxu0 0
      %1244 = vmatpush1.bf16.msra.mxu0 %v1223
      %1245 = vmatprep.subr.bf16.mxu0 0
      %1246 = vmatpush1.bf16.msra.mxu0 %v1224
      %1247 = vmatprep.subr.bf16.mxu0 0
      %1248 = vmatpush1.bf16.msra.mxu0 %v1225
      %1249 = vmatprep.subr.bf16.mxu0 0
      %1250 = vmatpush1.bf16.msra.mxu0 %v1226
      %1251 = vmatprep.subr.bf16.mxu0 0
      %1252 = vmatpush1.bf16.msra.mxu0 0
      %1253 = vmatprep.subr.bf16.mxu0 0
      %1254 = vmatpush1.bf16.msra.mxu0 0
      %1255 = vmatprep.subr.bf16.mxu0 0
      %1256 = vmatpush1.bf16.msra.mxu0 0
      %1257 = vmatprep.subr.bf16.mxu0 0
      %1258 = vmatpush1.bf16.msra.mxu0 0
      %1259 = vmatprep.subr.bf16.mxu0 0
      %1260 = vmatpush1.bf16.msra.mxu0 0
      %1261 = vmatprep.subr.bf16.mxu0 0
      %1262 = vmatpush1.bf16.msra.mxu0 0
      %1263 = vmatprep.subr.bf16.mxu0 0
      %1264 = vmatpush1.bf16.msra.mxu0 0
      %1265 = vmatprep.subr.bf16.mxu0 0
      %1266 = vmatpush1.bf16.msra.mxu0 0
      %1267 = vmatprep.mubr.bf16.mxu0 0
      %1268 = vmatmul.mubr.bf16.gmra.mrb[0].mxu0 %v1179
      %v1269 = vpop.f32.mrb[0].mxu0
      %v1270 = vadd.f32 0.0, %v1269
      %v1271 = vpop.f32.mrb[0].mxu0
      %v1272 = vpop.f32.mrb[0].mxu0
      %v1273 = vadd.f32 0.0, %v1272
      %v1274 = vpop.f32.mrb[0].mxu0
      %1275 = vmatprep.mubr.bf16.mxu0 0
      %1276 = vmatmul.mubr.bf16.gmra.mrb[0].mxu0 %v1180
      %v1277 = vpop.f32.mrb[0].mxu0
      %v1278 = vadd.f32 0.0, %v1277
      %v1279 = vpop.f32.mrb[0].mxu0
      %v1280 = vpop.f32.mrb[0].mxu0
      %v1281 = vadd.f32 0.0, %v1280
      %v1282 = vpop.f32.mrb[0].mxu0
      %1283 = vmatprep.mubr.bf16.mxu0 0
      %1284 = vmatmul.mubr.bf16.gmra.mrb[0].mxu0 %v1181
      %v1285 = vpop.f32.mrb[0].mxu0
      %v1286 = vadd.f32 0.0, %v1285
      %v1287 = vpop.f32.mrb[0].mxu0
      %v1288 = vpop.f32.mrb[0].mxu0
      %v1289 = vadd.f32 0.0, %v1288
      %v1290 = vpop.f32.mrb[0].mxu0
      %1291 = vmatprep.mubr.bf16.mxu0 0
      %1292 = vmatmul.mubr.bf16.gmra.mrb[0].mxu0 %v1182
      %v1293 = vpop.f32.mrb[0].mxu0
      %v1294 = vadd.f32 0.0, %v1293
      %v1295 = vpop.f32.mrb[0].mxu0
      %v1296 = vpop.f32.mrb[0].mxu0
      %v1297 = vadd.f32 0.0, %v1296
      %v1298 = vpop.f32.mrb[0].mxu0
      %1299 = vdwg.mxu0
      %v1300 = vadd.f32 %v1122, %v1270
      %v1301 = vadd.f32 %v1123, %v1273
      %v1302 = vadd.f32 %v1124, %v1278
      %v1303 = vadd.f32 %v1125, %v1281
      %v1304 = vadd.f32 %v1126, %v1286
      %v1305 = vadd.f32 %v1127, %v1289
      %v1306 = vadd.f32 %v1128, %v1294
      %v1307 = vadd.f32 %v1129, %v1297
      %v1308 = vld [vmem:[%s426 + $0x2] sm:$0xff]
      %v1309 = vld [vmem:[%s426 + $0x12] sm:$0xff]
      %v1310 = vld [vmem:[%s426 + $0x22] sm:$0xff]
      %v1311 = vld [vmem:[%s426 + $0x32] sm:$0xff]
      %v1312 = vld [vmem:[%s426 + $0x42] sm:$0xff]
      %v1313 = vld [vmem:[%s426 + $0x52] sm:$0xff]
      %v1314 = vld [vmem:[%s426 + $0x62] sm:$0xff]
      %v1315 = vld [vmem:[%s426 + $0x72] sm:$0xff]
      %v1316 = vpack.c.bf16 %v1308, %v1308
      %v1317 = vpack.c.bf16 %v1309, %v1309
      %v1318 = vpack.c.bf16 %v1310, %v1310
      %v1319 = vpack.c.bf16 %v1311, %v1311
      %v1320 = vpack.c.bf16 %v1312, %v1312
      %v1321 = vpack.c.bf16 %v1313, %v1313
      %v1322 = vpack.c.bf16 %v1314, %v1314
      %v1323 = vpack.c.bf16 %v1315, %v1315
      %s1324 = scalar_lea.vmem %s2, 320
      %v1325 = vld [vmem:[%s1324] sm:$0xf]
      %v1326 = vld [vmem:[%s1324 + $0x4] sm:$0xf]
      %v1327 = vld [vmem:[%s1324 + $0x8] sm:$0xf]
      %v1328 = vld [vmem:[%s1324 + $0xc] sm:$0xf]
      %v1329 = vld [vmem:[%s1324 + $0x10] sm:$0xf]
      %v1330 = vld [vmem:[%s1324 + $0x14] sm:$0xf]
      %v1331 = vld [vmem:[%s1324 + $0x18] sm:$0xf]
      %v1332 = vld [vmem:[%s1324 + $0x1c] sm:$0xf]
      %v1333 = vld [vmem:[%s1324 + $0x20] sm:$0xf]
      %v1334 = vld [vmem:[%s1324 + $0x24] sm:$0xf]
      %v1335 = vld [vmem:[%s1324 + $0x28] sm:$0xf]
      %v1336 = vld [vmem:[%s1324 + $0x2c] sm:$0xf]
      %v1337 = vld [vmem:[%s1324 + $0x30] sm:$0xf]
      %v1338 = vld [vmem:[%s1324 + $0x34] sm:$0xf]
      %v1339 = vld [vmem:[%s1324 + $0x38] sm:$0xf]
      %v1340 = vld [vmem:[%s1324 + $0x3c] sm:$0xf]
      %v1349 = vunpack.c.l.b16 %v1316
      %v1350 = vunpack.c.l.b16 %v1317
      %v1351 = vunpack.c.l.b16 %v1318
      %v1352 = vunpack.c.l.b16 %v1319
      %v1353 = vunpack.c.l.b16 %v1320
      %v1354 = vunpack.c.l.b16 %v1321
      %v1355 = vunpack.c.l.b16 %v1322
      %v1356 = vunpack.c.l.b16 %v1323
      %v1357 = vpack.c.b16 %v1350, %v1349
      %v1358 = vpack.c.b16 %v1352, %v1351
      %v1359 = vpack.c.b16 %v1354, %v1353
      %v1360 = vpack.c.b16 %v1356, %v1355
      %v1381 = vunpack.c.l.b16 %v1325
      %v1382 = vunpack.c.l.b16 %v1326
      %v1383 = vunpack.c.l.b16 %v1327
      %v1384 = vunpack.c.l.b16 %v1328
      %v1385 = vunpack.c.l.b16 %v1329
      %v1386 = vunpack.c.l.b16 %v1330
      %v1387 = vunpack.c.l.b16 %v1331
      %v1388 = vunpack.c.l.b16 %v1332
      %v1389 = vunpack.c.l.b16 %v1333
      %v1390 = vunpack.c.l.b16 %v1334
      %v1391 = vunpack.c.l.b16 %v1335
      %v1392 = vunpack.c.l.b16 %v1336
      %v1393 = vunpack.c.l.b16 %v1337
      %v1394 = vunpack.c.l.b16 %v1338
      %v1395 = vunpack.c.l.b16 %v1339
      %v1396 = vunpack.c.l.b16 %v1340
      %v1397 = vpack.c.b16 %v1382, %v1381
      %v1398 = vpack.c.b16 %v1384, %v1383
      %v1399 = vpack.c.b16 %v1386, %v1385
      %v1400 = vpack.c.b16 %v1388, %v1387
      %v1401 = vpack.c.b16 %v1390, %v1389
      %v1402 = vpack.c.b16 %v1392, %v1391
      %v1403 = vpack.c.b16 %v1394, %v1393
      %v1404 = vpack.c.b16 %v1396, %v1395
      %1413 = vmatprep.subr.bf16.mxu0 0
      %1414 = vmatpush1.bf16.msra.mxu0 %v1397
      %1415 = vmatprep.subr.bf16.mxu0 0
      %1416 = vmatpush1.bf16.msra.mxu0 %v1398
      %1417 = vmatprep.subr.bf16.mxu0 0
      %1418 = vmatpush1.bf16.msra.mxu0 %v1399
      %1419 = vmatprep.subr.bf16.mxu0 0
      %1420 = vmatpush1.bf16.msra.mxu0 %v1400
      %1421 = vmatprep.subr.bf16.mxu0 0
      %1422 = vmatpush1.bf16.msra.mxu0 %v1401
      %1423 = vmatprep.subr.bf16.mxu0 0
      %1424 = vmatpush1.bf16.msra.mxu0 %v1402
      %1425 = vmatprep.subr.bf16.mxu0 0
      %1426 = vmatpush1.bf16.msra.mxu0 %v1403
      %1427 = vmatprep.subr.bf16.mxu0 0
      %1428 = vmatpush1.bf16.msra.mxu0 %v1404
      %1429 = vmatprep.subr.bf16.mxu0 0
      %1430 = vmatpush1.bf16.msra.mxu0 0
      %1431 = vmatprep.subr.bf16.mxu0 0
      %1432 = vmatpush1.bf16.msra.mxu0 0
      %1433 = vmatprep.subr.bf16.mxu0 0
      %1434 = vmatpush1.bf16.msra.mxu0 0
      %1435 = vmatprep.subr.bf16.mxu0 0
      %1436 = vmatpush1.bf16.msra.mxu0 0
      %1437 = vmatprep.subr.bf16.mxu0 0
      %1438 = vmatpush1.bf16.msra.mxu0 0
      %1439 = vmatprep.subr.bf16.mxu0 0
      %1440 = vmatpush1.bf16.msra.mxu0 0
      %1441 = vmatprep.subr.bf16.mxu0 0
      %1442 = vmatpush1.bf16.msra.mxu0 0
      %1443 = vmatprep.subr.bf16.mxu0 0
      %1444 = vmatpush1.bf16.msra.mxu0 0
      %1445 = vmatprep.mubr.bf16.mxu0 0
      %1446 = vmatmul.mubr.bf16.gmra.mrb[0].mxu0 %v1357
      %v1447 = vpop.f32.mrb[0].mxu0
      %v1448 = vadd.f32 0.0, %v1447
      %v1449 = vpop.f32.mrb[0].mxu0
      %v1450 = vpop.f32.mrb[0].mxu0
      %v1451 = vadd.f32 0.0, %v1450
      %v1452 = vpop.f32.mrb[0].mxu0
      %1453 = vmatprep.mubr.bf16.mxu0 0
      %1454 = vmatmul.mubr.bf16.gmra.mrb[0].mxu0 %v1358
      %v1455 = vpop.f32.mrb[0].mxu0
      %v1456 = vadd.f32 0.0, %v1455
      %v1457 = vpop.f32.mrb[0].mxu0
      %v1458 = vpop.f32.mrb[0].mxu0
      %v1459 = vadd.f32 0.0, %v1458
      %v1460 = vpop.f32.mrb[0].mxu0
      %1461 = vmatprep.mubr.bf16.mxu0 0
      %1462 = vmatmul.mubr.bf16.gmra.mrb[0].mxu0 %v1359
      %v1463 = vpop.f32.mrb[0].mxu0
      %v1464 = vadd.f32 0.0, %v1463
      %v1465 = vpop.f32.mrb[0].mxu0
      %v1466 = vpop.f32.mrb[0].mxu0
      %v1467 = vadd.f32 0.0, %v1466
      %v1468 = vpop.f32.mrb[0].mxu0
      %1469 = vmatprep.mubr.bf16.mxu0 0
      %1470 = vmatmul.mubr.bf16.gmra.mrb[0].mxu0 %v1360
      %v1471 = vpop.f32.mrb[0].mxu0
      %v1472 = vadd.f32 0.0, %v1471
      %v1473 = vpop.f32.mrb[0].mxu0
      %v1474 = vpop.f32.mrb[0].mxu0
      %v1475 = vadd.f32 0.0, %v1474
      %v1476 = vpop.f32.mrb[0].mxu0
      %1477 = vdwg.mxu0
      %v1478 = vadd.f32 %v1300, %v1448
      %v1479 = vadd.f32 %v1301, %v1451
      %v1480 = vadd.f32 %v1302, %v1456
      %v1481 = vadd.f32 %v1303, %v1459
      %v1482 = vadd.f32 %v1304, %v1464
      %v1483 = vadd.f32 %v1305, %v1467
      %v1484 = vadd.f32 %v1306, %v1472
      %v1485 = vadd.f32 %v1307, %v1475
      %s1486 = scalar_lea.vmem [#allocation2], 32
      %v1487 = vld [vmem:[%s1486] sm:$0xff]
      %v1488 = vld [vmem:[%s1486 + $0x10] sm:$0xff]
      %v1489 = vld [vmem:[%s1486 + $0x20] sm:$0xff]
      %v1490 = vld [vmem:[%s1486 + $0x30] sm:$0xff]
      %v1491 = vld [vmem:[%s1486 + $0x40] sm:$0xff]
      %v1492 = vld [vmem:[%s1486 + $0x50] sm:$0xff]
      %v1493 = vld [vmem:[%s1486 + $0x60] sm:$0xff]
      %v1494 = vld [vmem:[%s1486 + $0x70] sm:$0xff]
      %v1495 = vpack.c.bf16 %v1487, %v1487
      %v1496 = vpack.c.bf16 %v1488, %v1488
      %v1497 = vpack.c.bf16 %v1489, %v1489
      %v1498 = vpack.c.bf16 %v1490, %v1490
      %v1499 = vpack.c.bf16 %v1491, %v1491
      %v1500 = vpack.c.bf16 %v1492, %v1492
      %v1501 = vpack.c.bf16 %v1493, %v1493
      %v1502 = vpack.c.bf16 %v1494, %v1494
      %s1503 = scalar_lea.vmem %s2, 384
      %v1504 = vld [vmem:[%s1503] sm:$0xf]
      %v1505 = vld [vmem:[%s1503 + $0x4] sm:$0xf]
      %v1506 = vld [vmem:[%s1503 + $0x8] sm:$0xf]
      %v1507 = vld [vmem:[%s1503 + $0xc] sm:$0xf]
      %v1508 = vld [vmem:[%s1503 + $0x10] sm:$0xf]
      %v1509 = vld [vmem:[%s1503 + $0x14] sm:$0xf]
      %v1510 = vld [vmem:[%s1503 + $0x18] sm:$0xf]
      %v1511 = vld [vmem:[%s1503 + $0x1c] sm:$0xf]
      %v1512 = vld [vmem:[%s1503 + $0x20] sm:$0xf]
      %v1513 = vld [vmem:[%s1503 + $0x24] sm:$0xf]
      %v1514 = vld [vmem:[%s1503 + $0x28] sm:$0xf]
      %v1515 = vld [vmem:[%s1503 + $0x2c] sm:$0xf]
      %v1516 = vld [vmem:[%s1503 + $0x30] sm:$0xf]
      %v1517 = vld [vmem:[%s1503 + $0x34] sm:$0xf]
      %v1518 = vld [vmem:[%s1503 + $0x38] sm:$0xf]
      %v1519 = vld [vmem:[%s1503 + $0x3c] sm:$0xf]
      %v1528 = vunpack.c.l.b16 %v1495
      %v1529 = vunpack.c.l.b16 %v1496
      %v1530 = vunpack.c.l.b16 %v1497
      %v1531 = vunpack.c.l.b16 %v1498
      %v1532 = vunpack.c.l.b16 %v1499
      %v1533 = vunpack.c.l.b16 %v1500
      %v1534 = vunpack.c.l.b16 %v1501
      %v1535 = vunpack.c.l.b16 %v1502
      %v1536 = vpack.c.b16 %v1529, %v1528
      %v1537 = vpack.c.b16 %v1531, %v1530
      %v1538 = vpack.c.b16 %v1533, %v1532
      %v1539 = vpack.c.b16 %v1535, %v1534
      %v1560 = vunpack.c.l.b16 %v1504
      %v1561 = vunpack.c.l.b16 %v1505
      %v1562 = vunpack.c.l.b16 %v1506
      %v1563 = vunpack.c.l.b16 %v1507
      %v1564 = vunpack.c.l.b16 %v1508
      %v1565 = vunpack.c.l.b16 %v1509
      %v1566 = vunpack.c.l.b16 %v1510
      %v1567 = vunpack.c.l.b16 %v1511
      %v1568 = vunpack.c.l.b16 %v1512
      %v1569 = vunpack.c.l.b16 %v1513
      %v1570 = vunpack.c.l.b16 %v1514
      %v1571 = vunpack.c.l.b16 %v1515
      %v1572 = vunpack.c.l.b16 %v1516
      %v1573 = vunpack.c.l.b16 %v1517
      %v1574 = vunpack.c.l.b16 %v1518
      %v1575 = vunpack.c.l.b16 %v1519
      %v1576 = vpack.c.b16 %v1561, %v1560
      %v1577 = vpack.c.b16 %v1563, %v1562
      %v1578 = vpack.c.b16 %v1565, %v1564
      %v1579 = vpack.c.b16 %v1567, %v1566
      %v1580 = vpack.c.b16 %v1569, %v1568
      %v1581 = vpack.c.b16 %v1571, %v1570
      %v1582 = vpack.c.b16 %v1573, %v1572
      %v1583 = vpack.c.b16 %v1575, %v1574
      %1592 = vmatprep.subr.bf16.mxu0 0
      %1593 = vmatpush1.bf16.msra.mxu0 %v1576
      %1594 = vmatprep.subr.bf16.mxu0 0
      %1595 = vmatpush1.bf16.msra.mxu0 %v1577
      %1596 = vmatprep.subr.bf16.mxu0 0
      %1597 = vmatpush1.bf16.msra.mxu0 %v1578
      %1598 = vmatprep.subr.bf16.mxu0 0
      %1599 = vmatpush1.bf16.msra.mxu0 %v1579
      %1600 = vmatprep.subr.bf16.mxu0 0
      %1601 = vmatpush1.bf16.msra.mxu0 %v1580
      %1602 = vmatprep.subr.bf16.mxu0 0
      %1603 = vmatpush1.bf16.msra.mxu0 %v1581
      %1604 = vmatprep.subr.bf16.mxu0 0
      %1605 = vmatpush1.bf16.msra.mxu0 %v1582
      %1606 = vmatprep.subr.bf16.mxu0 0
      %1607 = vmatpush1.bf16.msra.mxu0 %v1583
      %1608 = vmatprep.subr.bf16.mxu0 0
      %1609 = vmatpush1.bf16.msra.mxu0 0
      %1610 = vmatprep.subr.bf16.mxu0 0
      %1611 = vmatpush1.bf16.msra.mxu0 0
      %1612 = vmatprep.subr.bf16.mxu0 0
      %1613 = vmatpush1.bf16.msra.mxu0 0
      %1614 = vmatprep.subr.bf16.mxu0 0
      %1615 = vmatpush1.bf16.msra.mxu0 0
      %1616 = vmatprep.subr.bf16.mxu0 0
      %1617 = vmatpush1.bf16.msra.mxu0 0
      %1618 = vmatprep.subr.bf16.mxu0 0
      %1619 = vmatpush1.bf16.msra.mxu0 0
      %1620 = vmatprep.subr.bf16.mxu0 0
      %1621 = vmatpush1.bf16.msra.mxu0 0
      %1622 = vmatprep.subr.bf16.mxu0 0
      %1623 = vmatpush1.bf16.msra.mxu0 0
      %1624 = vmatprep.mubr.bf16.mxu0 0
      %1625 = vmatmul.mubr.bf16.gmra.mrb[0].mxu0 %v1536
      %v1626 = vpop.f32.mrb[0].mxu0
      %v1627 = vadd.f32 0.0, %v1626
      %v1628 = vpop.f32.mrb[0].mxu0
      %v1629 = vpop.f32.mrb[0].mxu0
      %v1630 = vadd.f32 0.0, %v1629
      %v1631 = vpop.f32.mrb[0].mxu0
      %1632 = vmatprep.mubr.bf16.mxu0 0
      %1633 = vmatmul.mubr.bf16.gmra.mrb[0].mxu0 %v1537
      %v1634 = vpop.f32.mrb[0].mxu0
      %v1635 = vadd.f32 0.0, %v1634
      %v1636 = vpop.f32.mrb[0].mxu0
      %v1637 = vpop.f32.mrb[0].mxu0
      %v1638 = vadd.f32 0.0, %v1637
      %v1639 = vpop.f32.mrb[0].mxu0
      %1640 = vmatprep.mubr.bf16.mxu0 0
      %1641 = vmatmul.mubr.bf16.gmra.mrb[0].mxu0 %v1538
      %v1642 = vpop.f32.mrb[0].mxu0
      %v1643 = vadd.f32 0.0, %v1642
      %v1644 = vpop.f32.mrb[0].mxu0
      %v1645 = vpop.f32.mrb[0].mxu0
      %v1646 = vadd.f32 0.0, %v1645
      %v1647 = vpop.f32.mrb[0].mxu0
      %1648 = vmatprep.mubr.bf16.mxu0 0
      %1649 = vmatmul.mubr.bf16.gmra.mrb[0].mxu0 %v1539
      %v1650 = vpop.f32.mrb[0].mxu0
      %v1651 = vadd.f32 0.0, %v1650
      %v1652 = vpop.f32.mrb[0].mxu0
      %v1653 = vpop.f32.mrb[0].mxu0
      %v1654 = vadd.f32 0.0, %v1653
      %v1655 = vpop.f32.mrb[0].mxu0
      %1656 = vdwg.mxu0
      %v1657 = vadd.f32 %v1478, %v1627
      %v1658 = vadd.f32 %v1479, %v1630
      %v1659 = vadd.f32 %v1480, %v1635
      %v1660 = vadd.f32 %v1481, %v1638
      %v1661 = vadd.f32 %v1482, %v1643
      %v1662 = vadd.f32 %v1483, %v1646
      %v1663 = vadd.f32 %v1484, %v1651
      %v1664 = vadd.f32 %v1485, %v1654
      %v1665 = vld [vmem:[%s1486 + $0x1] sm:$0xff]
      %v1666 = vld [vmem:[%s1486 + $0x11] sm:$0xff]
      %v1667 = vld [vmem:[%s1486 + $0x21] sm:$0xff]
      %v1668 = vld [vmem:[%s1486 + $0x31] sm:$0xff]
      %v1669 = vld [vmem:[%s1486 + $0x41] sm:$0xff]
      %v1670 = vld [vmem:[%s1486 + $0x51] sm:$0xff]
      %v1671 = vld [vmem:[%s1486 + $0x61] sm:$0xff]
      %v1672 = vld [vmem:[%s1486 + $0x71] sm:$0xff]
      %v1673 = vpack.c.bf16 %v1665, %v1665
      %v1674 = vpack.c.bf16 %v1666, %v1666
      %v1675 = vpack.c.bf16 %v1667, %v1667
      %v1676 = vpack.c.bf16 %v1668, %v1668
      %v1677 = vpack.c.bf16 %v1669, %v1669
      %v1678 = vpack.c.bf16 %v1670, %v1670
      %v1679 = vpack.c.bf16 %v1671, %v1671
      %v1680 = vpack.c.bf16 %v1672, %v1672
      %s1681 = scalar_lea.vmem %s2, 448
      %v1682 = vld [vmem:[%s1681] sm:$0xf]
      %v1683 = vld [vmem:[%s1681 + $0x4] sm:$0xf]
      %v1684 = vld [vmem:[%s1681 + $0x8] sm:$0xf]
      %v1685 = vld [vmem:[%s1681 + $0xc] sm:$0xf]
      %v1686 = vld [vmem:[%s1681 + $0x10] sm:$0xf]
      %v1687 = vld [vmem:[%s1681 + $0x14] sm:$0xf]
      %v1688 = vld [vmem:[%s1681 + $0x18] sm:$0xf]
      %v1689 = vld [vmem:[%s1681 + $0x1c] sm:$0xf]
      %v1690 = vld [vmem:[%s1681 + $0x20] sm:$0xf]
      %v1691 = vld [vmem:[%s1681 + $0x24] sm:$0xf]
      %v1692 = vld [vmem:[%s1681 + $0x28] sm:$0xf]
      %v1693 = vld [vmem:[%s1681 + $0x2c] sm:$0xf]
      %v1694 = vld [vmem:[%s1681 + $0x30] sm:$0xf]
      %v1695 = vld [vmem:[%s1681 + $0x34] sm:$0xf]
      %v1696 = vld [vmem:[%s1681 + $0x38] sm:$0xf]
      %v1697 = vld [vmem:[%s1681 + $0x3c] sm:$0xf]
      %v1706 = vunpack.c.l.b16 %v1673
      %v1707 = vunpack.c.l.b16 %v1674
      %v1708 = vunpack.c.l.b16 %v1675
      %v1709 = vunpack.c.l.b16 %v1676
      %v1710 = vunpack.c.l.b16 %v1677
      %v1711 = vunpack.c.l.b16 %v1678
      %v1712 = vunpack.c.l.b16 %v1679
      %v1713 = vunpack.c.l.b16 %v1680
      %v1714 = vpack.c.b16 %v1707, %v1706
      %v1715 = vpack.c.b16 %v1709, %v1708
      %v1716 = vpack.c.b16 %v1711, %v1710
      %v1717 = vpack.c.b16 %v1713, %v1712
      %v1738 = vunpack.c.l.b16 %v1682
      %v1739 = vunpack.c.l.b16 %v1683
      %v1740 = vunpack.c.l.b16 %v1684
      %v1741 = vunpack.c.l.b16 %v1685
      %v1742 = vunpack.c.l.b16 %v1686
      %v1743 = vunpack.c.l.b16 %v1687
      %v1744 = vunpack.c.l.b16 %v1688
      %v1745 = vunpack.c.l.b16 %v1689
      %v1746 = vunpack.c.l.b16 %v1690
      %v1747 = vunpack.c.l.b16 %v1691
      %v1748 = vunpack.c.l.b16 %v1692
      %v1749 = vunpack.c.l.b16 %v1693
      %v1750 = vunpack.c.l.b16 %v1694
      %v1751 = vunpack.c.l.b16 %v1695
      %v1752 = vunpack.c.l.b16 %v1696
      %v1753 = vunpack.c.l.b16 %v1697
      %v1754 = vpack.c.b16 %v1739, %v1738
      %v1755 = vpack.c.b16 %v1741, %v1740
      %v1756 = vpack.c.b16 %v1743, %v1742
      %v1757 = vpack.c.b16 %v1745, %v1744
      %v1758 = vpack.c.b16 %v1747, %v1746
      %v1759 = vpack.c.b16 %v1749, %v1748
      %v1760 = vpack.c.b16 %v1751, %v1750
      %v1761 = vpack.c.b16 %v1753, %v1752
      %1770 = vmatprep.subr.bf16.mxu0 0
      %1771 = vmatpush1.bf16.msra.mxu0 %v1754
      %1772 = vmatprep.subr.bf16.mxu0 0
      %1773 = vmatpush1.bf16.msra.mxu0 %v1755
      %1774 = vmatprep.subr.bf16.mxu0 0
      %1775 = vmatpush1.bf16.msra.mxu0 %v1756
      %1776 = vmatprep.subr.bf16.mxu0 0
      %1777 = vmatpush1.bf16.msra.mxu0 %v1757
      %1778 = vmatprep.subr.bf16.mxu0 0
      %1779 = vmatpush1.bf16.msra.mxu0 %v1758
      %1780 = vmatprep.subr.bf16.mxu0 0
      %1781 = vmatpush1.bf16.msra.mxu0 %v1759
      %1782 = vmatprep.subr.bf16.mxu0 0
      %1783 = vmatpush1.bf16.msra.mxu0 %v1760
      %1784 = vmatprep.subr.bf16.mxu0 0
      %1785 = vmatpush1.bf16.msra.mxu0 %v1761
      %1786 = vmatprep.subr.bf16.mxu0 0
      %1787 = vmatpush1.bf16.msra.mxu0 0
      %1788 = vmatprep.subr.bf16.mxu0 0
      %1789 = vmatpush1.bf16.msra.mxu0 0
      %1790 = vmatprep.subr.bf16.mxu0 0
      %1791 = vmatpush1.bf16.msra.mxu0 0
      %1792 = vmatprep.subr.bf16.mxu0 0
      %1793 = vmatpush1.bf16.msra.mxu0 0
      %1794 = vmatprep.subr.bf16.mxu0 0
      %1795 = vmatpush1.bf16.msra.mxu0 0
      %1796 = vmatprep.subr.bf16.mxu0 0
      %1797 = vmatpush1.bf16.msra.mxu0 0
      %1798 = vmatprep.subr.bf16.mxu0 0
      %1799 = vmatpush1.bf16.msra.mxu0 0
      %1800 = vmatprep.subr.bf16.mxu0 0
      %1801 = vmatpush1.bf16.msra.mxu0 0
      %1802 = vmatprep.mubr.bf16.mxu0 0
      %1803 = vmatmul.mubr.bf16.gmra.mrb[0].mxu0 %v1714
      %v1804 = vpop.f32.mrb[0].mxu0
      %v1805 = vadd.f32 0.0, %v1804
      %v1806 = vpop.f32.mrb[0].mxu0
      %v1807 = vpop.f32.mrb[0].mxu0
      %v1808 = vadd.f32 0.0, %v1807
      %v1809 = vpop.f32.mrb[0].mxu0
      %1810 = vmatprep.mubr.bf16.mxu0 0
      %1811 = vmatmul.mubr.bf16.gmra.mrb[0].mxu0 %v1715
      %v1812 = vpop.f32.mrb[0].mxu0
      %v1813 = vadd.f32 0.0, %v1812
      %v1814 = vpop.f32.mrb[0].mxu0
      %v1815 = vpop.f32.mrb[0].mxu0
      %v1816 = vadd.f32 0.0, %v1815
      %v1817 = vpop.f32.mrb[0].mxu0
      %1818 = vmatprep.mubr.bf16.mxu0 0
      %1819 = vmatmul.mubr.bf16.gmra.mrb[0].mxu0 %v1716
      %v1820 = vpop.f32.mrb[0].mxu0
      %v1821 = vadd.f32 0.0, %v1820
      %v1822 = vpop.f32.mrb[0].mxu0
      %v1823 = vpop.f32.mrb[0].mxu0
      %v1824 = vadd.f32 0.0, %v1823
      %v1825 = vpop.f32.mrb[0].mxu0
      %1826 = vmatprep.mubr.bf16.mxu0 0
      %1827 = vmatmul.mubr.bf16.gmra.mrb[0].mxu0 %v1717
      %v1828 = vpop.f32.mrb[0].mxu0
      %v1829 = vadd.f32 0.0, %v1828
      %v1830 = vpop.f32.mrb[0].mxu0
      %v1831 = vpop.f32.mrb[0].mxu0
      %v1832 = vadd.f32 0.0, %v1831
      %v1833 = vpop.f32.mrb[0].mxu0
      %1834 = vdwg.mxu0
      %v1835 = vadd.f32 %v1657, %v1805
      %v1836 = vadd.f32 %v1658, %v1808
      %v1837 = vadd.f32 %v1659, %v1813
      %v1838 = vadd.f32 %v1660, %v1816
      %v1839 = vadd.f32 %v1661, %v1821
      %v1840 = vadd.f32 %v1662, %v1824
      %v1841 = vadd.f32 %v1663, %v1829
      %v1842 = vadd.f32 %v1664, %v1832
      %v1843 = vld [vmem:[%s1486 + $0x2] sm:$0xff]
      %v1844 = vld [vmem:[%s1486 + $0x12] sm:$0xff]
      %v1845 = vld [vmem:[%s1486 + $0x22] sm:$0xff]
      %v1846 = vld [vmem:[%s1486 + $0x32] sm:$0xff]
      %v1847 = vld [vmem:[%s1486 + $0x42] sm:$0xff]
      %v1848 = vld [vmem:[%s1486 + $0x52] sm:$0xff]
      %v1849 = vld [vmem:[%s1486 + $0x62] sm:$0xff]
      %v1850 = vld [vmem:[%s1486 + $0x72] sm:$0xff]
      %v1851 = vpack.c.bf16 %v1843, %v1843
      %v1852 = vpack.c.bf16 %v1844, %v1844
      %v1853 = vpack.c.bf16 %v1845, %v1845
      %v1854 = vpack.c.bf16 %v1846, %v1846
      %v1855 = vpack.c.bf16 %v1847, %v1847
      %v1856 = vpack.c.bf16 %v1848, %v1848
      %v1857 = vpack.c.bf16 %v1849, %v1849
      %v1858 = vpack.c.bf16 %v1850, %v1850
      %s1859 = scalar_lea.vmem %s2, 512
      %v1860 = vld [vmem:[%s1859] sm:$0xf]
      %v1861 = vld [vmem:[%s1859 + $0x4] sm:$0xf]
      %v1862 = vld [vmem:[%s1859 + $0x8] sm:$0xf]
      %v1863 = vld [vmem:[%s1859 + $0xc] sm:$0xf]
      %v1864 = vld [vmem:[%s1859 + $0x10] sm:$0xf]
      %v1865 = vld [vmem:[%s1859 + $0x14] sm:$0xf]
      %v1866 = vld [vmem:[%s1859 + $0x18] sm:$0xf]
      %v1867 = vld [vmem:[%s1859 + $0x1c] sm:$0xf]
      %v1868 = vld [vmem:[%s1859 + $0x20] sm:$0xf]
      %v1869 = vld [vmem:[%s1859 + $0x24] sm:$0xf]
      %v1870 = vld [vmem:[%s1859 + $0x28] sm:$0xf]
      %v1871 = vld [vmem:[%s1859 + $0x2c] sm:$0xf]
      %v1872 = vld [vmem:[%s1859 + $0x30] sm:$0xf]
      %v1873 = vld [vmem:[%s1859 + $0x34] sm:$0xf]
      %v1874 = vld [vmem:[%s1859 + $0x38] sm:$0xf]
      %v1875 = vld [vmem:[%s1859 + $0x3c] sm:$0xf]
      %v1884 = vunpack.c.l.b16 %v1851
      %v1885 = vunpack.c.l.b16 %v1852
      %v1886 = vunpack.c.l.b16 %v1853
      %v1887 = vunpack.c.l.b16 %v1854
      %v1888 = vunpack.c.l.b16 %v1855
      %v1889 = vunpack.c.l.b16 %v1856
      %v1890 = vunpack.c.l.b16 %v1857
      %v1891 = vunpack.c.l.b16 %v1858
      %v1892 = vpack.c.b16 %v1885, %v1884
      %v1893 = vpack.c.b16 %v1887, %v1886
      %v1894 = vpack.c.b16 %v1889, %v1888
      %v1895 = vpack.c.b16 %v1891, %v1890
      %v1916 = vunpack.c.l.b16 %v1860
      %v1917 = vunpack.c.l.b16 %v1861
      %v1918 = vunpack.c.l.b16 %v1862
      %v1919 = vunpack.c.l.b16 %v1863
      %v1920 = vunpack.c.l.b16 %v1864
      %v1921 = vunpack.c.l.b16 %v1865
      %v1922 = vunpack.c.l.b16 %v1866
      %v1923 = vunpack.c.l.b16 %v1867
      %v1924 = vunpack.c.l.b16 %v1868
      %v1925 = vunpack.c.l.b16 %v1869
      %v1926 = vunpack.c.l.b16 %v1870
      %v1927 = vunpack.c.l.b16 %v1871
      %v1928 = vunpack.c.l.b16 %v1872
      %v1929 = vunpack.c.l.b16 %v1873
      %v1930 = vunpack.c.l.b16 %v1874
      %v1931 = vunpack.c.l.b16 %v1875
      %v1932 = vpack.c.b16 %v1917, %v1916
      %v1933 = vpack.c.b16 %v1919, %v1918
      %v1934 = vpack.c.b16 %v1921, %v1920
      %v1935 = vpack.c.b16 %v1923, %v1922
      %v1936 = vpack.c.b16 %v1925, %v1924
      %v1937 = vpack.c.b16 %v1927, %v1926
      %v1938 = vpack.c.b16 %v1929, %v1928
      %v1939 = vpack.c.b16 %v1931, %v1930
      %1948 = vmatprep.subr.bf16.mxu0 0
      %1949 = vmatpush1.bf16.msra.mxu0 %v1932
      %1950 = vmatprep.subr.bf16.mxu0 0
      %1951 = vmatpush1.bf16.msra.mxu0 %v1933
      %1952 = vmatprep.subr.bf16.mxu0 0
      %1953 = vmatpush1.bf16.msra.mxu0 %v1934
      %1954 = vmatprep.subr.bf16.mxu0 0
      %1955 = vmatpush1.bf16.msra.mxu0 %v1935
      %1956 = vmatprep.subr.bf16.mxu0 0
      %1957 = vmatpush1.bf16.msra.mxu0 %v1936
      %1958 = vmatprep.subr.bf16.mxu0 0
      %1959 = vmatpush1.bf16.msra.mxu0 %v1937
      %1960 = vmatprep.subr.bf16.mxu0 0
      %1961 = vmatpush1.bf16.msra.mxu0 %v1938
      %1962 = vmatprep.subr.bf16.mxu0 0
      %1963 = vmatpush1.bf16.msra.mxu0 %v1939
      %1964 = vmatprep.subr.bf16.mxu0 0
      %1965 = vmatpush1.bf16.msra.mxu0 0
      %1966 = vmatprep.subr.bf16.mxu0 0
      %1967 = vmatpush1.bf16.msra.mxu0 0
      %1968 = vmatprep.subr.bf16.mxu0 0
      %1969 = vmatpush1.bf16.msra.mxu0 0
      %1970 = vmatprep.subr.bf16.mxu0 0
      %1971 = vmatpush1.bf16.msra.mxu0 0
      %1972 = vmatprep.subr.bf16.mxu0 0
      %1973 = vmatpush1.bf16.msra.mxu0 0
      %1974 = vmatprep.subr.bf16.mxu0 0
      %1975 = vmatpush1.bf16.msra.mxu0 0
      %1976 = vmatprep.subr.bf16.mxu0 0
      %1977 = vmatpush1.bf16.msra.mxu0 0
      %1978 = vmatprep.subr.bf16.mxu0 0
      %1979 = vmatpush1.bf16.msra.mxu0 0
      %1980 = vmatprep.mubr.bf16.mxu0 0
      %1981 = vmatmul.mubr.bf16.gmra.mrb[0].mxu0 %v1892
      %v1982 = vpop.f32.mrb[0].mxu0
      %v1983 = vadd.f32 0.0, %v1982
      %v1984 = vpop.f32.mrb[0].mxu0
      %v1985 = vpop.f32.mrb[0].mxu0
      %v1986 = vadd.f32 0.0, %v1985
      %v1987 = vpop.f32.mrb[0].mxu0
      %1988 = vmatprep.mubr.bf16.mxu0 0
      %1989 = vmatmul.mubr.bf16.gmra.mrb[0].mxu0 %v1893
      %v1990 = vpop.f32.mrb[0].mxu0
      %v1991 = vadd.f32 0.0, %v1990
      %v1992 = vpop.f32.mrb[0].mxu0
      %v1993 = vpop.f32.mrb[0].mxu0
      %v1994 = vadd.f32 0.0, %v1993
      %v1995 = vpop.f32.mrb[0].mxu0
      %1996 = vmatprep.mubr.bf16.mxu0 0
      %1997 = vmatmul.mubr.bf16.gmra.mrb[0].mxu0 %v1894
      %v1998 = vpop.f32.mrb[0].mxu0
      %v1999 = vadd.f32 0.0, %v1998
      %v2000 = vpop.f32.mrb[0].mxu0
      %v2001 = vpop.f32.mrb[0].mxu0
      %v2002 = vadd.f32 0.0, %v2001
      %v2003 = vpop.f32.mrb[0].mxu0
      %2004 = vmatprep.mubr.bf16.mxu0 0
      %2005 = vmatmul.mubr.bf16.gmra.mrb[0].mxu0 %v1895
      %v2006 = vpop.f32.mrb[0].mxu0
      %v2007 = vadd.f32 0.0, %v2006
      %v2008 = vpop.f32.mrb[0].mxu0
      %v2009 = vpop.f32.mrb[0].mxu0
      %v2010 = vadd.f32 0.0, %v2009
      %v2011 = vpop.f32.mrb[0].mxu0
      %2012 = vdwg.mxu0
      %v2013 = vadd.f32 %v1835, %v1983
      %v2014 = vadd.f32 %v1836, %v1986
      %v2015 = vadd.f32 %v1837, %v1991
      %v2016 = vadd.f32 %v1838, %v1994
      %v2017 = vadd.f32 %v1839, %v1999
      %v2018 = vadd.f32 %v1840, %v2002
      %v2019 = vadd.f32 %v1841, %v2007
      %v2020 = vadd.f32 %v1842, %v2010
      %2021 = vst [vmem:[%s350] sm:$0xff] %v2013
      %2022 = vst [vmem:[%s350 + $0x8] sm:$0xff] %v2014
      %2023 = vst [vmem:[%s350 + $0x10] sm:$0xff] %v2015
      %2024 = vst [vmem:[%s350 + $0x18] sm:$0xff] %v2016
      %2025 = vst [vmem:[%s350 + $0x20] sm:$0xff] %v2017
      %2026 = vst [vmem:[%s350 + $0x28] sm:$0xff] %v2018
      %2027 = vst [vmem:[%s350 + $0x30] sm:$0xff] %v2019
      %2028 = vst [vmem:[%s350 + $0x38] sm:$0xff] %v2020
      %v2029 = vadd.f32 %v2013, %v2014
      %v2030 = vadd.f32 %v2029, %v2015
      %v2031 = vadd.f32 %v2030, %v2016
      %v2032 = vadd.f32 %v2031, %v2017
      %v2033 = vadd.f32 %v2032, %v2018
      %v2034 = vadd.f32 %v2033, %v2019
      %v2035 = vadd.f32 %v2034, %v2020
      %v2036 = vrot.slane %v2035, 4
      %v2037 = vadd.f32 %v2035, %v2036
      %v2038 = vrot.slane %v2037, 2
      %v2039 = vadd.f32 %v2037, %v2038
      %v2040 = vrot.slane %v2039, 1
      %v2041 = vadd.f32 %v2039, %v2040
      %v2042 = vmul.f32 %v2013, %v2013
      %v2043 = vmul.f32 %v2014, %v2014
      %v2044 = vmul.f32 %v2015, %v2015
      %v2045 = vmul.f32 %v2016, %v2016
      %v2046 = vmul.f32 %v2017, %v2017
      %v2047 = vmul.f32 %v2018, %v2018
      %v2048 = vmul.f32 %v2019, %v2019
      %v2049 = vmul.f32 %v2020, %v2020
      %v2050 = vadd.f32 %v2042, %v2043
      %v2051 = vadd.f32 %v2050, %v2044
      %v2052 = vadd.f32 %v2051, %v2045
      %v2053 = vadd.f32 %v2052, %v2046
      %v2054 = vadd.f32 %v2053, %v2047
      %v2055 = vadd.f32 %v2054, %v2048
      %v2056 = vadd.f32 %v2055, %v2049
      %v2057 = vrot.slane %v2056, 4
      %v2058 = vadd.f32 %v2056, %v2057
      %v2059 = vrot.slane %v2058, 2
      %v2060 = vadd.f32 %v2058, %v2059
      %v2061 = vrot.slane %v2060, 1
      %v2062 = vadd.f32 %v2060, %v2061
      %vm2063 = vcmask 1040384
      %v2064 = vsel %vm2063, %v2041, %v2062
      %2065 = vst [vmem:[%s359] sm:$0x3] %v2064
      %s2066 = scalar_lea.vmem %s344, 216
      %v2067 = vld [vmem:[%s2066] sm:$0xf]
      %v2068 = vld [vmem:[%s2066 + $0x8] sm:$0xf]
      %v2069 = vld [vmem:[%s2066 + $0x10] sm:$0xf]
      %v2070 = vld [vmem:[%s2066 + $0x18] sm:$0xf]
      %v2071 = vld [vmem:[%s2066 + $0x20] sm:$0xf]
      %v2072 = vld [vmem:[%s2066 + $0x28] sm:$0xf]
      %v2073 = vld [vmem:[%s2066 + $0x30] sm:$0xf]
      %v2074 = vld [vmem:[%s2066 + $0x38] sm:$0xf]
      %v2075 = vld [vmem:[%s4] sm:$0xf]
      %v2076 = vld [vmem:[%s4 + $0x4] sm:$0xf]
      %v2077 = vld [vmem:[%s4 + $0x8] sm:$0xf]
      %v2078 = vld [vmem:[%s4 + $0xc] sm:$0xf]
      %v2079 = vld [vmem:[%s4 + $0x10] sm:$0xf]
      %v2080 = vld [vmem:[%s4 + $0x14] sm:$0xf]
      %v2081 = vld [vmem:[%s4 + $0x18] sm:$0xf]
      %v2082 = vld [vmem:[%s4 + $0x1c] sm:$0xf]
      %v2083 = vld [vmem:[%s4 + $0x20] sm:$0xf]
      %v2084 = vld [vmem:[%s4 + $0x24] sm:$0xf]
      %v2085 = vld [vmem:[%s4 + $0x28] sm:$0xf]
      %v2086 = vld [vmem:[%s4 + $0x2c] sm:$0xf]
      %v2087 = vld [vmem:[%s4 + $0x30] sm:$0xf]
      %v2088 = vld [vmem:[%s4 + $0x34] sm:$0xf]
      %v2089 = vld [vmem:[%s4 + $0x38] sm:$0xf]
      %v2090 = vld [vmem:[%s4 + $0x3c] sm:$0xf]
      %v2099 = vunpack.c.l.b16 %v2067
      %v2100 = vunpack.c.l.b16 %v2068
      %v2101 = vunpack.c.l.b16 %v2069
      %v2102 = vunpack.c.l.b16 %v2070
      %v2103 = vunpack.c.l.b16 %v2071
      %v2104 = vunpack.c.l.b16 %v2072
      %v2105 = vunpack.c.l.b16 %v2073
      %v2106 = vunpack.c.l.b16 %v2074
      %v2107 = vpack.c.b16 %v2100, %v2099
      %v2108 = vpack.c.b16 %v2102, %v2101
      %v2109 = vpack.c.b16 %v2104, %v2103
      %v2110 = vpack.c.b16 %v2106, %v2105
      %v2131 = vunpack.c.l.b16 %v2075
      %v2132 = vunpack.c.l.b16 %v2076
      %v2133 = vunpack.c.l.b16 %v2077
      %v2134 = vunpack.c.l.b16 %v2078
      %v2135 = vunpack.c.l.b16 %v2079
      %v2136 = vunpack.c.l.b16 %v2080
      %v2137 = vunpack.c.l.b16 %v2081
      %v2138 = vunpack.c.l.b16 %v2082
      %v2139 = vunpack.c.l.b16 %v2083
      %v2140 = vunpack.c.l.b16 %v2084
      %v2141 = vunpack.c.l.b16 %v2085
      %v2142 = vunpack.c.l.b16 %v2086
      %v2143 = vunpack.c.l.b16 %v2087
      %v2144 = vunpack.c.l.b16 %v2088
      %v2145 = vunpack.c.l.b16 %v2089
      %v2146 = vunpack.c.l.b16 %v2090
      %v2147 = vpack.c.b16 %v2132, %v2131
      %v2148 = vpack.c.b16 %v2134, %v2133
      %v2149 = vpack.c.b16 %v2136, %v2135
      %v2150 = vpack.c.b16 %v2138, %v2137
      %v2151 = vpack.c.b16 %v2140, %v2139
      %v2152 = vpack.c.b16 %v2142, %v2141
      %v2153 = vpack.c.b16 %v2144, %v2143
      %v2154 = vpack.c.b16 %v2146, %v2145
      %2163 = vmatprep.subr.bf16.mxu0 0
      %2164 = vmatpush1.bf16.msra.mxu0 %v2147
      %2165 = vmatprep.subr.bf16.mxu0 0
      %2166 = vmatpush1.bf16.msra.mxu0 %v2148
      %2167 = vmatprep.subr.bf16.mxu0 0
      %2168 = vmatpush1.bf16.msra.mxu0 %v2149
      %2169 = vmatprep.subr.bf16.mxu0 0
      %2170 = vmatpush1.bf16.msra.mxu0 %v2150
      %2171 = vmatprep.subr.bf16.mxu0 0
      %2172 = vmatpush1.bf16.msra.mxu0 %v2151
      %2173 = vmatprep.subr.bf16.mxu0 0
      %2174 = vmatpush1.bf16.msra.mxu0 %v2152
      %2175 = vmatprep.subr.bf16.mxu0 0
      %2176 = vmatpush1.bf16.msra.mxu0 %v2153
      %2177 = vmatprep.subr.bf16.mxu0 0
      %2178 = vmatpush1.bf16.msra.mxu0 %v2154
      %2179 = vmatprep.subr.bf16.mxu0 0
      %2180 = vmatpush1.bf16.msra.mxu0 0
      %2181 = vmatprep.subr.bf16.mxu0 0
      %2182 = vmatpush1.bf16.msra.mxu0 0
      %2183 = vmatprep.subr.bf16.mxu0 0
      %2184 = vmatpush1.bf16.msra.mxu0 0
      %2185 = vmatprep.subr.bf16.mxu0 0
      %2186 = vmatpush1.bf16.msra.mxu0 0
      %2187 = vmatprep.subr.bf16.mxu0 0
      %2188 = vmatpush1.bf16.msra.mxu0 0
      %2189 = vmatprep.subr.bf16.mxu0 0
      %2190 = vmatpush1.bf16.msra.mxu0 0
      %2191 = vmatprep.subr.bf16.mxu0 0
      %2192 = vmatpush1.bf16.msra.mxu0 0
      %2193 = vmatprep.subr.bf16.mxu0 0
      %2194 = vmatpush1.bf16.msra.mxu0 0
      %2195 = vmatprep.mubr.bf16.mxu0 0
      %2196 = vmatmul.mubr.bf16.gmra.mrb[0].mxu0 %v2107
      %v2197 = vpop.f32.mrb[0].mxu0
      %v2198 = vadd.f32 0.0, %v2197
      %v2199 = vpop.f32.mrb[0].mxu0
      %v2200 = vpop.f32.mrb[0].mxu0
      %v2201 = vadd.f32 0.0, %v2200
      %v2202 = vpop.f32.mrb[0].mxu0
      %2203 = vmatprep.mubr.bf16.mxu0 0
      %2204 = vmatmul.mubr.bf16.gmra.mrb[0].mxu0 %v2108
      %v2205 = vpop.f32.mrb[0].mxu0
      %v2206 = vadd.f32 0.0, %v2205
      %v2207 = vpop.f32.mrb[0].mxu0
      %v2208 = vpop.f32.mrb[0].mxu0
      %v2209 = vadd.f32 0.0, %v2208
      %v2210 = vpop.f32.mrb[0].mxu0
      %2211 = vmatprep.mubr.bf16.mxu0 0
      %2212 = vmatmul.mubr.bf16.gmra.mrb[0].mxu0 %v2109
      %v2213 = vpop.f32.mrb[0].mxu0
      %v2214 = vadd.f32 0.0, %v2213
      %v2215 = vpop.f32.mrb[0].mxu0
      %v2216 = vpop.f32.mrb[0].mxu0
      %v2217 = vadd.f32 0.0, %v2216
      %v2218 = vpop.f32.mrb[0].mxu0
      %2219 = vmatprep.mubr.bf16.mxu0 0
      %2220 = vmatmul.mubr.bf16.gmra.mrb[0].mxu0 %v2110
      %v2221 = vpop.f32.mrb[0].mxu0
      %v2222 = vadd.f32 0.0, %v2221
      %v2223 = vpop.f32.mrb[0].mxu0
      %v2224 = vpop.f32.mrb[0].mxu0
      %v2225 = vadd.f32 0.0, %v2224
      %v2226 = vpop.f32.mrb[0].mxu0
      %2227 = vdwg.mxu0
      %2228 = vst [vmem:[%s355] sm:$0xff] %v2198
      %2229 = vst [vmem:[%s355 + $0x8] sm:$0xff] %v2201
      %2230 = vst [vmem:[%s355 + $0x10] sm:$0xff] %v2206
      %2231 = vst [vmem:[%s355 + $0x18] sm:$0xff] %v2209
      %2232 = vst [vmem:[%s355 + $0x20] sm:$0xff] %v2214
      %2233 = vst [vmem:[%s355 + $0x28] sm:$0xff] %v2217
      %2234 = vst [vmem:[%s355 + $0x30] sm:$0xff] %v2222
      %2235 = vst [vmem:[%s355 + $0x38] sm:$0xff] %v2225
      %v2236 = vadd.f32 %v2198, %v2201
      %v2237 = vadd.f32 %v2236, %v2206
      %v2238 = vadd.f32 %v2237, %v2209
      %v2239 = vadd.f32 %v2238, %v2214
      %v2240 = vadd.f32 %v2239, %v2217
      %v2241 = vadd.f32 %v2240, %v2222
      %v2242 = vadd.f32 %v2241, %v2225
      %v2243 = vrot.slane %v2242, 4
      %v2244 = vadd.f32 %v2242, %v2243
      %v2245 = vrot.slane %v2244, 2
      %v2246 = vadd.f32 %v2244, %v2245
      %v2247 = vrot.slane %v2246, 1
      %v2248 = vadd.f32 %v2246, %v2247
      %v2249 = vmul.f32 %v2198, %v2198
      %v2250 = vmul.f32 %v2201, %v2201
      %v2251 = vmul.f32 %v2206, %v2206
      %v2252 = vmul.f32 %v2209, %v2209
      %v2253 = vmul.f32 %v2214, %v2214
      %v2254 = vmul.f32 %v2217, %v2217
      %v2255 = vmul.f32 %v2222, %v2222
      %v2256 = vmul.f32 %v2225, %v2225
      %v2257 = vadd.f32 %v2249, %v2250
      %v2258 = vadd.f32 %v2257, %v2251
      %v2259 = vadd.f32 %v2258, %v2252
      %v2260 = vadd.f32 %v2259, %v2253
      %v2261 = vadd.f32 %v2260, %v2254
      %v2262 = vadd.f32 %v2261, %v2255
      %v2263 = vadd.f32 %v2262, %v2256
      %v2264 = vrot.slane %v2263, 4
      %v2265 = vadd.f32 %v2263, %v2264
      %v2266 = vrot.slane %v2265, 2
      %v2267 = vadd.f32 %v2265, %v2266
      %v2268 = vrot.slane %v2267, 1
      %v2269 = vadd.f32 %v2267, %v2268
      %v2270 = vsel %vm2063, %v2248, %v2269
      %2271 = vst [vmem:[%s363] sm:$0x3] %v2270
      %p2272 = scmp.lt.s32.totalorder %s20, 1
      %s2273 = scalar_select %p2272, %s20, 1
      %s2274 = smul.addr %s2273, 8
      %s2275 = smul.addr %s2274, 8
      %s2276 = scalar_lea.vmem %s5, %s2275
      %p2277 = scmp.lt.s32.totalorder %s20, 1
      %s2278 = scalar_select %p2277, %s20, 1
      %s2279 = smul.addr %s2278, 8
      %s2280 = smul.addr %s2279, 8
      %s2281 = scalar_lea.vmem %s6, %s2280
      %p2282 = scmp.lt.s32.totalorder %s20, 1
      %s2283 = scalar_select %p2282, %s20, 1
      %s2284 = smul.addr %s2283, 2
      %s2285 = scalar_lea.vmem %s7, %s2284
      %p2286 = scmp.lt.s32.totalorder %s20, 1
      %s2287 = scalar_select %p2286, %s20, 1
      %s2288 = smul.addr %s2287, 2
      %s2289 = scalar_lea.vmem %s8, %s2288
      // Predicated region
      $region41: #{basic_block_forward.4} parent=39 // pred_check
        %p2290 = pneg %p153
      $region42: #{basic_block_forward.4} parent=39 // pred_check_branch
        %2292 = sbr.rel (%p2290) target = $region44
      $region43: #{basic_block_forward.4} parent=39 // pred_region
        _
      $region44: #{basic_block_forward.4} parent=39 // pred_fallthru
        _
      // Predicated region
      $region45: #{basic_block_forward.4} parent=39 // pred_check
        %p2293 = pneg %p179
      $region46: #{basic_block_forward.4} parent=39 // pred_check_branch
        %2295 = sbr.rel (%p2293) target = $region48
      $region47: #{basic_block_forward.4} parent=39 // pred_region
        _
      $region48: #{basic_block_forward.4} parent=39 // pred_fallthru
        _
      // Predicated region
      $region49: #{basic_block_forward.4} parent=39 // pred_check
        %p2296 = pneg %p205
      $region50: #{basic_block_forward.4} parent=39 // pred_check_branch
        %2298 = sbr.rel (%p2296) target = $region52
      $region51: #{basic_block_forward.4} parent=39 // pred_region
        _
      $region52: #{basic_block_forward.4} parent=39 // pred_fallthru
        _
      // Predicated region
      $region53: #{basic_block_forward.4} parent=39 // pred_check
        %p2299 = pneg %p231
      $region54: #{basic_block_forward.4} parent=39 // pred_check_branch
        %2301 = sbr.rel (%p2299) target = $region56
      $region55: #{basic_block_forward.4} parent=39 // pred_region
        _
      $region56: #{basic_block_forward.4} parent=39 // pred_fallthru
        _
    $region40: #{basic_block_forward.4} parent=5 // pred_fallthru
      _
    %p2302 = scmp.le.s32.totalorder 2, %s15
    // Predicated region
    $region57: #{basic_block_forward.4} parent=5 // pred_check
      %p2303 = pneg %p2302
    $region58: #{basic_block_forward.4} parent=5 // pred_check_branch
      %2305 = sbr.rel (%p2303) target = $region60
    $region59: #{basic_block_forward.4} parent=5 // pred_region
      %s2306 = ssub.s32 %s15, 2
      // Predicated region
      $region61: #{basic_block_forward.4} parent=59 // pred_check
        %p2307 = pneg %p159
      $region62: #{basic_block_forward.4} parent=59 // pred_check_branch
        %2309 = sbr.rel (%p2307) target = $region64
      $region63: #{basic_block_forward.4} parent=59 // pred_region
        %p2310 = scmp.lt.s32.totalorder %s21, 1
        %s2311 = scalar_select %p2310, %s21, 1
        %s2312 = smul.addr %s2311, 8
        %s2313 = smul.addr %s2312, 8
        %s2314 = scalar_lea.vmem %s5, %s2313
      $region64: #{basic_block_forward.4} parent=59 // pred_fallthru
        _
      // Predicated region
      $region65: #{basic_block_forward.4} parent=59 // pred_check
        %p2315 = pneg %p185
      $region66: #{basic_block_forward.4} parent=59 // pred_check_branch
        %2317 = sbr.rel (%p2315) target = $region68
      $region67: #{basic_block_forward.4} parent=59 // pred_region
        %p2318 = scmp.lt.s32.totalorder %s21, 1
        %s2319 = scalar_select %p2318, %s21, 1
        %s2320 = smul.addr %s2319, 8
        %s2321 = smul.addr %s2320, 8
        %s2322 = scalar_lea.vmem %s6, %s2321
      $region68: #{basic_block_forward.4} parent=59 // pred_fallthru
        _
      // Predicated region
      $region69: #{basic_block_forward.4} parent=59 // pred_check
        %p2323 = pneg %p211
      $region70: #{basic_block_forward.4} parent=59 // pred_check_branch
        %2325 = sbr.rel (%p2323) target = $region72
      $region71: #{basic_block_forward.4} parent=59 // pred_region
        %p2326 = scmp.lt.s32.totalorder %s21, 1
        %s2327 = scalar_select %p2326, %s21, 1
        %s2328 = smul.addr %s2327, 2
        %s2329 = scalar_lea.vmem %s7, %s2328
      $region72: #{basic_block_forward.4} parent=59 // pred_fallthru
        _
      // Predicated region
      $region73: #{basic_block_forward.4} parent=59 // pred_check
        %p2330 = pneg %p237
      $region74: #{basic_block_forward.4} parent=59 // pred_check_branch
        %2332 = sbr.rel (%p2330) target = $region76
      $region75: #{basic_block_forward.4} parent=59 // pred_region
        %p2333 = scmp.lt.s32.totalorder %s21, 1
        %s2334 = scalar_select %p2333, %s21, 1
        %s2335 = smul.addr %s2334, 2
        %s2336 = scalar_lea.vmem %s8, %s2335
      $region76: #{basic_block_forward.4} parent=59 // pred_fallthru
        _
    $region60: #{basic_block_forward.4} parent=5 // pred_fallthru
      _
  $region6: #{basic_block_forward.4} parent=0 // loop_footer
    %s19 = sadd.s32 1, %s15
  $region7: #{basic_block_forward.4} parent=0 // loop_footer_branch
    %14 = sbr.rel target = $region3
  $region8: #{basic_block_forward.4} parent=0 // loop_exit
    _

</llo_original>
